<compile_context>
chip_gen: v7x
topology: tpu7x:2x2x1
jax: 0.10.0
libtpu: 0.0.40
codegen_flags: <defaults>
</compile_context>

<pallas_src>
import functools

import jax
import jax.numpy as jnp
from jax.experimental import pallas as pl
from jax.experimental.pallas import tpu as pltpu

EPS = 1e-5


def _conv_stats_kernel(xp_ref, w_ref, y_ref, stats_ref, pk_ref, *, true_h):
    """Pass 1: transposed conv for one (image, row-tile) grid step + BN partials.

    xp_ref:    (1, Hp+2, W+2, Cin)    bf16 padded input image (revisited over t)
    w_ref:     (2, 6*Cin, 2*Cout)     bf16 packed weights (one block per row parity)
    y_ref:     (1, TH, 2, W, 2*Cout)  bf16 pre-BN conv output for this row tile
    stats_ref: (1, 1, 2, 2*Cout)      f32 per-tile [sum, sum-of-squares] (per rw block)
    pk_ref:    (TH*W, 9*Cin)          bf16 scratch: the 9 distinct shifted slices
    """
    t = pl.program_id(1)
    th = y_ref.shape[1]
    w = y_ref.shape[3]
    cin = xp_ref.shape[3]
    cout2 = y_ref.shape[4]                     # 2 * Cout
    m = th * w
    r0 = pl.multiple_of(t * th, th)            # first input row of this tile

    # ConvTranspose2d(k=4, s=2, p=1):
    #   out[2q+rh, 2p+rw] = sum_{dy in {rh,rh+1}, dx in {rw,rw+1}}
    #                       Xpad[q+dy, p+dx] @ W[3+rh-2*dy, 3+rw-2*dx]
    # Pack the 9 distinct (dy, dx) slices once (dy-major) so each row parity rh is
    # a single MXU matmul over the contiguous 6-slab K window dy in {rh, rh+1}.
    # (For production channel counts that are multiples of 128 every slab offset
    # and store below is lane-aligned; no zero-padding is added for small C.)
    for dy in range(3):
        for dx in range(3):
            g = dy * 3 + dx
            sl = xp_ref[0, pl.ds(r0 + dy, th), pl.ds(dx, w), :]
            pk_ref[:, g * cin:(g + 1) * cin] = sl.reshape(m, cin)

    # Row-validity mask: doubles as the MXU reduction vector for the BN partials
    # and masks rows past the true H on the (padded) last row tile.
    valid_rows = jnp.minimum(th, true_h - t * th)
    flat = jax.lax.broadcasted_iota(jnp.int32, (1, m), 1)
    mask = (flat < valid_rows * w).astype(jnp.float32)

    psum = jnp.zeros((1, cout2), jnp.float32)
    psq = jnp.zeros((1, cout2), jnp.float32)
    for rh in range(2):
        # K = 6*Cin, N = 2*Cout: wider than per-parity matmuls; the one zero
        # dx-slab per rw column block costs only 1.5x MACs.
        acc = jnp.dot(pk_ref[:, rh * 3 * cin:(rh + 2) * 3 * cin], w_ref[rh],
                      preferred_element_type=jnp.float32)          # (TH*W, 2*Cout)
        # Lane-dense store: full 2*Cout last-dim width, no slicing of the result.
        y_ref[0, :, rh, :, :] = acc.reshape(th, w, cout2).astype(y_ref.dtype)
        # Stat reductions on the MXU (vex slot has slack) instead of VALU/XLU.
        psum = psum + jnp.dot(mask, acc, preferred_element_type=jnp.float32)
        psq = psq + jnp.dot(mask, acc * acc, preferred_element_type=jnp.float32)
    stats_ref[0, 0, pl.ds(0, 1), :] = psum
    stats_ref[0, 0, pl.ds(1, 1), :] = psq


def _bn_relu_kernel(y_ref, scale_ref, shift_ref, out_ref):
    """Pass 2: y*scale + shift, ReLU.  (Skip concat now happens in NCHW outside.)

    y_ref:     (1, TR, 2W, Cout)  bf16 pre-BN conv output tile
    scale_ref: (1, Cout), shift_ref: (1, Cout)  f32
    out_ref:   (1, TR, 2W, Cout)  f32
    """
    cout = scale_ref.shape[1]
    scale = scale_ref[...].reshape(1, 1, cout)
    shift = shift_ref[...].reshape(1, 1, cout)
    y = y_ref[0].astype(jnp.float32)
    out_ref[0, :, :, :] = jnp.maximum(y * scale + shift, 0.0)


@functools.partial(jax.jit,
                   static_argnames=("row_tile", "compute_dtype", "vmem_limit_bytes"))
def unet_up_forward(x_nchw, skip_nchw, w_pt, gamma, beta, *,
                    row_tile=8, compute_dtype=jnp.bfloat16, vmem_limit_bytes=None):
    """UNetUp forward.

    x_nchw:    (N, Cin, H, W)
    skip_nchw: (N, Cskip, 2H, 2W)
    w_pt:      (Cin, Cout, 4, 4)   PyTorch ConvTranspose2d weight layout
    gamma/beta: (Cout,)            BatchNorm2d affine parameters
    Returns (N, Cout + Cskip, 2H, 2W) float32 (NCHW, matching the PyTorch module).

    Production note: both passes are memory-bound, so on 128 MiB VMEM parts
    (v5e/v6e) raise row_tile together with vmem_limit_bytes (each extra grid
    step costs ~0.35us); on v7x (64 MiB) re-derive the budget first.
    """
    n, cin, h, w = x_nchw.shape
    cout = w_pt.shape[1]

    th = min(row_tile, h)                       # input-row tile
    t_tiles = -(-h // th)                       # cdiv: last tile is masked/padded
    h_pad = t_tiles * th
    itemsize = jnp.dtype(compute_dtype).itemsize

    # --- layout glue: NCHW -> NHWC, pad once (halo + row padding up to h_pad) ---
    x = jnp.transpose(x_nchw, (0, 2, 3, 1))
    xp = jnp.pad(x, ((0, 0), (1, 1 + h_pad - h), (1, 1), (0, 0))).astype(compute_dtype)
    # TODO(synk): for v7x (64 MiB VMEM) at large H*W*Cin, switch this full-image
    # input block to a halo'd row-tile DMA (memory_space=pl.ANY +
    # pltpu.make_async_copy) so input VMEM scales with th instead of H.

    # Pack ConvTranspose2d weights per row parity rh: rows are the 6 (dy, dx)
    # slabs (dy in {rh, rh+1}, dx in {0,1,2}); columns are the two rw output
    # parities; the one dx slab a given rw doesn't use is zero.
    w_k = jnp.transpose(w_pt, (2, 3, 0, 1)).astype(jnp.float32)   # (4, 4, Cin, Cout)
    zero = jnp.zeros((cin, cout), jnp.float32)
    w_blocks = []
    for rh in range(2):
        rows = []
        for dy in range(rh, rh + 2):
            for dx in range(3):
                cols = []
                for rw in range(2):
                    b = dx - rw
                    if b in (0, 1):
                        a = dy - rh
                        cols.append(w_k[3 - rh - 2 * a, 3 - rw - 2 * b])
                    else:
                        cols.append(zero)
                rows.append(jnp.concatenate(cols, axis=1))        # (Cin, 2*Cout)
        w_blocks.append(jnp.concatenate(rows, axis=0))            # (6*Cin, 2*Cout)
    w_packed = jnp.stack(w_blocks, axis=0).astype(compute_dtype)  # (2, 6*Cin, 2*Cout)

    # --- pass 1: tiled conv + per-tile BN partial sums --------------------------
    m = th * w
    flops1 = n * t_tiles * (2 * (2 * m * (6 * cin) * (2 * cout))   # conv matmuls
                            + 8 * m * (2 * cout))                  # stat matmuls
    bytes1 = (n * (h_pad + 2) * (w + 2) * cin * itemsize           # xp (once/image)
              + n * t_tiles * 2 * 6 * cin * 2 * cout * itemsize    # weights
              + n * h_pad * 2 * w * 2 * cout * itemsize            # y (bf16 write)
              + n * t_tiles * 2 * 2 * cout * 4)                    # stats
    y5, stats = pl.pallas_call(
        functools.partial(_conv_stats_kernel, true_h=h),
        out_shape=(
            jax.ShapeDtypeStruct((n, h_pad, 2, w, 2 * cout), compute_dtype),
            jax.ShapeDtypeStruct((n, t_tiles, 2, 2 * cout), jnp.float32),
        ),
        grid=(n, t_tiles),
        in_specs=[
            # Full padded image per batch element; block index constant along t,
            # so the image is fetched once per image and revisited across tiles.
            pl.BlockSpec((1, h_pad + 2, w + 2, cin), lambda i, j: (i, 0, 0, 0)),
            pl.BlockSpec((2, 6 * cin, 2 * cout), lambda i, j: (0, 0, 0)),
        ],
        out_specs=(
            pl.BlockSpec((1, th, 2, w, 2 * cout), lambda i, j: (i, j, 0, 0, 0)),
            pl.BlockSpec((1, 1, 2, 2 * cout), lambda i, j: (i, j, 0, 0)),
        ),
        scratch_shapes=[pltpu.VMEM((m, 9 * cin), compute_dtype)],
        compiler_params=pltpu.CompilerParams(
            dimension_semantics=("parallel", "parallel"),
            vmem_limit_bytes=vmem_limit_bytes),
        cost_estimate=pl.CostEstimate(flops=int(flops1), transcendentals=0,
                                      bytes_accessed=int(bytes1)),
    )(xp, w_packed)

    # --- finalize BatchNorm (training-mode batch statistics, biased variance) ---
    # TODO(synk): E[x^2]-E[x]^2 in f32 can cancel if |mean| >> std; switch the
    # per-tile partials to a Welford-style (count, mean, M2) combine if that bites.
    tot = stats.sum(axis=(0, 1)).reshape(2, 2, cout).sum(axis=1)     # (2, Cout)
    count = jnp.float32(n * h * w * 4)                               # N * 2H * 2W
    mean = tot[0] / count
    var = jnp.maximum(tot[1] / count - mean * mean, 0.0)
    inv_std = jax.lax.rsqrt(var + EPS)
    scale = (gamma.astype(jnp.float32) * inv_std).reshape(1, cout)
    shift = (beta.astype(jnp.float32) - mean * scale[0]).reshape(1, cout)
    # TODO(synk): BatchNorm eval mode (running stats) and running-stat updates are
    # not implemented; this matches PyTorch training-mode forward only.

    # (N, Hp, 2, W, 2*Cout) -> (N, 2Hp, 2W, Cout) is a pure row-major reshape.
    y = y5.reshape(n, 2 * h_pad, 2 * w, cout)

    # --- pass 2: tiled scale/shift + ReLU ----------------------------------------
    tr = 2 * th
    flops2 = n * 2 * h_pad * 2 * w * cout * 3
    bytes2 = n * 2 * h_pad * 2 * w * cout * (itemsize + 4) + 2 * cout * 4
    up = pl.pallas_call(
        _bn_relu_kernel,
        out_shape=jax.ShapeDtypeStruct((n, 2 * h_pad, 2 * w, cout), jnp.float32),
        grid=(n, t_tiles),
        in_specs=[
            pl.BlockSpec((1, tr, 2 * w, cout), lambda i, j: (i, j, 0, 0)),
            pl.BlockSpec((1, cout), lambda i, j: (0, 0)),
            pl.BlockSpec((1, cout), lambda i, j: (0, 0)),
        ],
        out_specs=pl.BlockSpec((1, tr, 2 * w, cout), lambda i, j: (i, j, 0, 0)),
        compiler_params=pltpu.CompilerParams(
            dimension_semantics=("parallel", "parallel"),
            vmem_limit_bytes=vmem_limit_bytes),
        cost_estimate=pl.CostEstimate(flops=int(flops2), transcendentals=0,
                                      bytes_accessed=int(bytes2)),
    )(y, scale, shift)

    # --- assemble in NCHW: skip is a pure passthrough (no NHWC round trip) -------
    up = up[:, :2 * h]                                   # drop padded rows, if any
    up_nchw = jnp.transpose(up, (0, 3, 1, 2))
    # TODO(synk): if callers accept NHWC activations, keep the pipeline NHWC
    # end-to-end and drop this transpose (or fuse it into pass 2 by tiling its
    # out_spec over channel blocks and transposing in-kernel).
    # TODO(synk): Dropout2d path (module arg dropout > 0; default 0.0) not implemented.
    return jnp.concatenate([up_nchw, skip_nchw.astype(jnp.float32)], axis=1)


def _reference(x_nchw, skip_nchw, w_pt, gamma, beta, compute_dtype):
    """Pure-JAX reference (ConvTranspose2d == lhs-dilated conv with flipped kernel).

    Inputs/weights are rounded to the kernel's compute dtype so the comparison
    isolates the kernel math; the pre-BN intermediate stays f32 here, while the
    kernel stores it in bf16 -- the test tolerances below account for that.
    """
    x = jnp.transpose(x_nchw, (0, 2, 3, 1)).astype(compute_dtype).astype(jnp.float32)
    w_eff = w_pt.astype(compute_dtype).astype(jnp.float32)
    w_hwio = jnp.transpose(w_eff[:, :, ::-1, ::-1], (2, 3, 0, 1))
    y = jax.lax.conv_general_dilated(
        x, w_hwio, window_strides=(1, 1), padding=((2, 2), (2, 2)),
        lhs_dilation=(2, 2), rhs_dilation=(1, 1),
        dimension_numbers=("NHWC", "HWIO", "NHWC"))
    mean = y.mean(axis=(0, 1, 2), keepdims=True)
    var = y.var(axis=(0, 1, 2), keepdims=True)      # biased, like PyTorch BN fwd
    y = (y - mean) * jax.lax.rsqrt(var + EPS)
    y = y * gamma.reshape(1, 1, 1, -1) + beta.reshape(1, 1, 1, -1)
    y = jnp.maximum(y, 0.0)
    skip = jnp.transpose(skip_nchw, (0, 2, 3, 1)).astype(jnp.float32)
    y = jnp.concatenate([y, skip], axis=-1)
    return jnp.transpose(y, (0, 3, 1, 2))


def _run_case(key, *, n, cin, cout, h, w, row_tile, max_tol, mean_tol):
    k1, k2, k3, k4, k5 = jax.random.split(key, 5)
    x = jax.random.normal(k1, (n, cin, h, w), jnp.float32)
    skip = jax.random.normal(k2, (n, cout, 2 * h, 2 * w), jnp.float32)
    fan = cin * 4 * 4
    bound = (1.0 / fan) ** 0.5
    w_pt = jax.random.uniform(k3, (cin, cout, 4, 4), jnp.float32, -bound, bound)
    gamma = 1.0 + 0.1 * jax.random.normal(k4, (cout,), jnp.float32)
    beta = 0.1 * jax.random.normal(k5, (cout,), jnp.float32)

    out = jax.block_until_ready(
        unet_up_forward(x, skip, w_pt, gamma, beta, row_tile=row_tile))
    ref = jax.block_until_ready(
        _reference(x, skip, w_pt, gamma, beta, jnp.bfloat16))

    assert out.shape == (n, 2 * cout, 2 * h, 2 * w), out.shape
    err = jnp.abs(out - ref)
    max_err = float(err.max())
    mean_err = float(err.mean())
    # Max tolerance is dominated by the kernel's bf16 storage of the pre-BN
    # activations (~half a bf16 ULP at |y|_max, scaled by gamma/std after BN).
    assert max_err < max_tol, (max_err, (n, cin, cout, h, w))
    assert mean_err < mean_tol, (mean_err, (n, cin, cout, h, w))


if __name__ == "__main__":
    key = jax.random.PRNGKey(0)
    k1, k2 = jax.random.split(key)
    # Main case (small spec-sized smoke test).
    _run_case(k1, n=2, cin=4, cout=8, h=16, w=16, row_tile=8,
              max_tol=3e-2, mean_tol=3e-3)
    # Exercises the cdiv grid + masked last row tile (H % row_tile != 0) and
    # odd, non-128-aligned channel counts.
    _run_case(k2, n=1, cin=3, cout=5, h=10, w=12, row_tile=8,
              max_tol=3e-2, mean_tol=3e-3)
    print("KERNEL_OK")
</pallas_src>

<mosaic_0001>
module attributes {stable_mosaic.version = 11 : i64} {
  func.func @_conv_stats_kernel(%arg0: i32, %arg1: i32, %arg2: memref<1x18x18x4xbf16, #tpu.memory_space<vmem>>, %arg3: memref<2x24x16xbf16, #tpu.memory_space<vmem>>, %arg4: memref<1x8x2x16x16xbf16, #tpu.memory_space<vmem>>, %arg5: memref<1x1x2x16xf32, #tpu.memory_space<vmem>>, %arg6: memref<128x36xbf16, #tpu.memory_space<vmem>>) attributes {dimension_semantics = [#tpu.dimension_semantics<parallel>, #tpu.dimension_semantics<parallel>], iteration_bounds = array<i64: 2, 2>, scalar_prefetch = 0 : i64, scratch_operands = 1 : i64, tpu.core_type = #tpu.core_type<tc>, window_params = [{transform_indices = @transform_0, window_bounds = array<i64: 1, 18, 18, 4>}, {pipeline_mode = #tpu.pipeline_mode<synchronous>, transform_indices = @transform_1, window_bounds = array<i64: 2, 24, 16>}, {transform_indices = @transform_2, window_bounds = array<i64: 1, 8, 2, 16, 16>}, {transform_indices = @transform_3, window_bounds = array<i64: 1, 1, 2, 16>}]} {
    %c8_i32 = arith.constant 8 : i32
    %0 = arith.muli %arg1, %c8_i32 : i32
    %1 = tpu.assume_multiple %0, 8 : i32
    %c0_i32 = arith.constant 0 : i32
    %2 = arith.addi %1, %c0_i32 : i32
    %c0 = arith.constant 0 : index
    %3 = arith.index_cast %2 : i32 to index
    %c0_0 = arith.constant 0 : index
    %c0_1 = arith.constant 0 : index
    %4 = vector.load %arg2[%c0, %3, %c0_0, %c0_1] : memref<1x18x18x4xbf16, #tpu.memory_space<vmem>>, vector<1x8x16x4xbf16>
    %5 = vector.shape_cast %4 : vector<1x8x16x4xbf16> to vector<8x16x4xbf16>
    %6 = vector.shape_cast %5 : vector<8x16x4xbf16> to vector<128x4xbf16>
    %c0_2 = arith.constant 0 : index
    %c0_3 = arith.constant 0 : index
    %7 = vector.load %arg6[%c0_2, %c0_3] : memref<128x36xbf16, #tpu.memory_space<vmem>>, vector<128x4xbf16>
    tpu.vector_store %arg6[%c0_2, %c0_3], %6 {strides = array<i32>} : memref<128x36xbf16, #tpu.memory_space<vmem>>, vector<128x4xbf16>,
    %c0_i32_4 = arith.constant 0 : i32
    %8 = arith.addi %1, %c0_i32_4 : i32
    %c0_5 = arith.constant 0 : index
    %9 = arith.index_cast %8 : i32 to index
    %c1 = arith.constant 1 : index
    %c0_6 = arith.constant 0 : index
    %10 = vector.load %arg2[%c0_5, %9, %c1, %c0_6] : memref<1x18x18x4xbf16, #tpu.memory_space<vmem>>, vector<1x8x16x4xbf16>
    %11 = vector.shape_cast %10 : vector<1x8x16x4xbf16> to vector<8x16x4xbf16>
    %12 = vector.shape_cast %11 : vector<8x16x4xbf16> to vector<128x4xbf16>
    %c0_7 = arith.constant 0 : index
    %c4 = arith.constant 4 : index
    %13 = vector.load %arg6[%c0_7, %c4] : memref<128x36xbf16, #tpu.memory_space<vmem>>, vector<128x4xbf16>
    tpu.vector_store %arg6[%c0_7, %c4], %12 {strides = array<i32>} : memref<128x36xbf16, #tpu.memory_space<vmem>>, vector<128x4xbf16>,
    %c0_i32_8 = arith.constant 0 : i32
    %14 = arith.addi %1, %c0_i32_8 : i32
    %c0_9 = arith.constant 0 : index
    %15 = arith.index_cast %14 : i32 to index
    %c2 = arith.constant 2 : index
    %c0_10 = arith.constant 0 : index
    %16 = vector.load %arg2[%c0_9, %15, %c2, %c0_10] : memref<1x18x18x4xbf16, #tpu.memory_space<vmem>>, vector<1x8x16x4xbf16>
    %17 = vector.shape_cast %16 : vector<1x8x16x4xbf16> to vector<8x16x4xbf16>
    %18 = vector.shape_cast %17 : vector<8x16x4xbf16> to vector<128x4xbf16>
    %c0_11 = arith.constant 0 : index
    %c8 = arith.constant 8 : index
    %19 = vector.load %arg6[%c0_11, %c8] : memref<128x36xbf16, #tpu.memory_space<vmem>>, vector<128x4xbf16>
    tpu.vector_store %arg6[%c0_11, %c8], %18 {strides = array<i32>} : memref<128x36xbf16, #tpu.memory_space<vmem>>, vector<128x4xbf16>,
    %c1_i32 = arith.constant 1 : i32
    %20 = arith.addi %1, %c1_i32 : i32
    %c0_12 = arith.constant 0 : index
    %21 = arith.index_cast %20 : i32 to index
    %c0_13 = arith.constant 0 : index
    %c0_14 = arith.constant 0 : index
    %22 = vector.load %arg2[%c0_12, %21, %c0_13, %c0_14] : memref<1x18x18x4xbf16, #tpu.memory_space<vmem>>, vector<1x8x16x4xbf16>
    %23 = vector.shape_cast %22 : vector<1x8x16x4xbf16> to vector<8x16x4xbf16>
    %24 = vector.shape_cast %23 : vector<8x16x4xbf16> to vector<128x4xbf16>
    %c0_15 = arith.constant 0 : index
    %c12 = arith.constant 12 : index
    %25 = vector.load %arg6[%c0_15, %c12] : memref<128x36xbf16, #tpu.memory_space<vmem>>, vector<128x4xbf16>
    tpu.vector_store %arg6[%c0_15, %c12], %24 {strides = array<i32>} : memref<128x36xbf16, #tpu.memory_space<vmem>>, vector<128x4xbf16>,
    %c1_i32_16 = arith.constant 1 : i32
    %26 = arith.addi %1, %c1_i32_16 : i32
    %c0_17 = arith.constant 0 : index
    %27 = arith.index_cast %26 : i32 to index
    %c1_18 = arith.constant 1 : index
    %c0_19 = arith.constant 0 : index
    %28 = vector.load %arg2[%c0_17, %27, %c1_18, %c0_19] : memref<1x18x18x4xbf16, #tpu.memory_space<vmem>>, vector<1x8x16x4xbf16>
    %29 = vector.shape_cast %28 : vector<1x8x16x4xbf16> to vector<8x16x4xbf16>
    %30 = vector.shape_cast %29 : vector<8x16x4xbf16> to vector<128x4xbf16>
    %c0_20 = arith.constant 0 : index
    %c16 = arith.constant 16 : index
    %31 = vector.load %arg6[%c0_20, %c16] : memref<128x36xbf16, #tpu.memory_space<vmem>>, vector<128x4xbf16>
    tpu.vector_store %arg6[%c0_20, %c16], %30 {strides = array<i32>} : memref<128x36xbf16, #tpu.memory_space<vmem>>, vector<128x4xbf16>,
    %c1_i32_21 = arith.constant 1 : i32
    %32 = arith.addi %1, %c1_i32_21 : i32
    %c0_22 = arith.constant 0 : index
    %33 = arith.index_cast %32 : i32 to index
    %c2_23 = arith.constant 2 : index
    %c0_24 = arith.constant 0 : index
    %34 = vector.load %arg2[%c0_22, %33, %c2_23, %c0_24] : memref<1x18x18x4xbf16, #tpu.memory_space<vmem>>, vector<1x8x16x4xbf16>
    %35 = vector.shape_cast %34 : vector<1x8x16x4xbf16> to vector<8x16x4xbf16>
    %36 = vector.shape_cast %35 : vector<8x16x4xbf16> to vector<128x4xbf16>
    %c0_25 = arith.constant 0 : index
    %c20 = arith.constant 20 : index
    %37 = vector.load %arg6[%c0_25, %c20] : memref<128x36xbf16, #tpu.memory_space<vmem>>, vector<128x4xbf16>
    tpu.vector_store %arg6[%c0_25, %c20], %36 {strides = array<i32>} : memref<128x36xbf16, #tpu.memory_space<vmem>>, vector<128x4xbf16>,
    %c2_i32 = arith.constant 2 : i32
    %38 = arith.addi %1, %c2_i32 : i32
    %c0_26 = arith.constant 0 : index
    %39 = arith.index_cast %38 : i32 to index
    %c0_27 = arith.constant 0 : index
    %c0_28 = arith.constant 0 : index
    %40 = vector.load %arg2[%c0_26, %39, %c0_27, %c0_28] : memref<1x18x18x4xbf16, #tpu.memory_space<vmem>>, vector<1x8x16x4xbf16>
    %41 = vector.shape_cast %40 : vector<1x8x16x4xbf16> to vector<8x16x4xbf16>
    %42 = vector.shape_cast %41 : vector<8x16x4xbf16> to vector<128x4xbf16>
    %c0_29 = arith.constant 0 : index
    %c24 = arith.constant 24 : index
    %43 = vector.load %arg6[%c0_29, %c24] : memref<128x36xbf16, #tpu.memory_space<vmem>>, vector<128x4xbf16>
    tpu.vector_store %arg6[%c0_29, %c24], %42 {strides = array<i32>} : memref<128x36xbf16, #tpu.memory_space<vmem>>, vector<128x4xbf16>,
    %c2_i32_30 = arith.constant 2 : i32
    %44 = arith.addi %1, %c2_i32_30 : i32
    %c0_31 = arith.constant 0 : index
    %45 = arith.index_cast %44 : i32 to index
    %c1_32 = arith.constant 1 : index
    %c0_33 = arith.constant 0 : index
    %46 = vector.load %arg2[%c0_31, %45, %c1_32, %c0_33] : memref<1x18x18x4xbf16, #tpu.memory_space<vmem>>, vector<1x8x16x4xbf16>
    %47 = vector.shape_cast %46 : vector<1x8x16x4xbf16> to vector<8x16x4xbf16>
    %48 = vector.shape_cast %47 : vector<8x16x4xbf16> to vector<128x4xbf16>
    %c0_34 = arith.constant 0 : index
    %c28 = arith.constant 28 : index
    %49 = vector.load %arg6[%c0_34, %c28] : memref<128x36xbf16, #tpu.memory_space<vmem>>, vector<128x4xbf16>
    tpu.vector_store %arg6[%c0_34, %c28], %48 {strides = array<i32>} : memref<128x36xbf16, #tpu.memory_space<vmem>>, vector<128x4xbf16>,
    %c2_i32_35 = arith.constant 2 : i32
    %50 = arith.addi %1, %c2_i32_35 : i32
    %c0_36 = arith.constant 0 : index
    %51 = arith.index_cast %50 : i32 to index
    %c2_37 = arith.constant 2 : index
    %c0_38 = arith.constant 0 : index
    %52 = vector.load %arg2[%c0_36, %51, %c2_37, %c0_38] : memref<1x18x18x4xbf16, #tpu.memory_space<vmem>>, vector<1x8x16x4xbf16>
    %53 = vector.shape_cast %52 : vector<1x8x16x4xbf16> to vector<8x16x4xbf16>
    %54 = vector.shape_cast %53 : vector<8x16x4xbf16> to vector<128x4xbf16>
    %c0_39 = arith.constant 0 : index
    %c32 = arith.constant 32 : index
    %55 = vector.load %arg6[%c0_39, %c32] : memref<128x36xbf16, #tpu.memory_space<vmem>>, vector<128x4xbf16>
    tpu.vector_store %arg6[%c0_39, %c32], %54 {strides = array<i32>} : memref<128x36xbf16, #tpu.memory_space<vmem>>, vector<128x4xbf16>,
    %c8_i32_40 = arith.constant 8 : i32
    %56 = arith.muli %arg1, %c8_i32_40 : i32
    %c16_i32 = arith.constant 16 : i32
    %57 = arith.subi %c16_i32, %56 : i32
    %c8_i32_41 = arith.constant 8 : i32
    %58 = arith.minsi %c8_i32_41, %57 : i32
    %59 = tpu.iota {dimensions = array<i32: 1>} : vector<1x128xi32>
    %c16_i32_42 = arith.constant 16 : i32
    %60 = arith.muli %58, %c16_i32_42 : i32
    %61 = vector.broadcast %60 : i32 to vector<1x128xi32>
    %62 = arith.cmpi slt, %59, %61 : vector<1x128xi32>
    %63 = arith.extui %62 : vector<1x128xi1> to vector<1x128xi32>
    %64 = arith.sitofp %63 : vector<1x128xi32> to vector<1x128xf32>
    %cst = arith.constant 0.000000e+00 : f32
    %65 = vector.broadcast %cst : f32 to vector<1x16xf32>
    %cst_43 = arith.constant 0.000000e+00 : f32
    %66 = vector.broadcast %cst_43 : f32 to vector<1x16xf32>
    %c0_44 = arith.constant 0 : index
    %c0_45 = arith.constant 0 : index
    %67 = vector.load %arg6[%c0_44, %c0_45] : memref<128x36xbf16, #tpu.memory_space<vmem>>, vector<128x24xbf16>
    %c0_46 = arith.constant 0 : index
    %c0_47 = arith.constant 0 : index
    %c0_48 = arith.constant 0 : index
    %68 = vector.load %arg3[%c0_46, %c0_47, %c0_48] : memref<2x24x16xbf16, #tpu.memory_space<vmem>>, vector<1x24x16xbf16>
    %69 = vector.shape_cast %68 : vector<1x24x16xbf16> to vector<24x16xbf16>
    %cst_49 = arith.constant dense<0.000000e+00> : vector<128x16xf32>
    %70 = tpu.matmul %67, %69, %cst_49 {dimension_numbers = #tpu.dot_dimension_numbers<[1], [0], [0], [1], [0, 0, 1, 1], [], []>} : vector<128x24xbf16>, vector<24x16xbf16>, vector<128x16xf32> -> vector<128x16xf32>
    %71 = vector.shape_cast %70 : vector<128x16xf32> to vector<8x16x16xf32>
    %72 = arith.truncf %71 : vector<8x16x16xf32> to vector<8x16x16xbf16>
    %c0_50 = arith.constant 0 : index
    %c0_51 = arith.constant 0 : index
    %c0_52 = arith.constant 0 : index
    %c0_53 = arith.constant 0 : index
    %c0_54 = arith.constant 0 : index
    %73 = vector.load %arg4[%c0_50, %c0_51, %c0_52, %c0_53, %c0_54] : memref<1x8x2x16x16xbf16, #tpu.memory_space<vmem>>, vector<1x8x1x16x16xbf16>
    %74 = vector.shape_cast %73 : vector<1x8x1x16x16xbf16> to vector<8x16x16xbf16>
    %75 = vector.shape_cast %72 : vector<8x16x16xbf16> to vector<1x8x1x16x16xbf16>
    tpu.vector_store %arg4[%c0_50, %c0_51, %c0_52, %c0_53, %c0_54], %75 {strides = array<i32>} : memref<1x8x2x16x16xbf16, #tpu.memory_space<vmem>>, vector<1x8x1x16x16xbf16>,
    %cst_55 = arith.constant dense<0.000000e+00> : vector<1x16xf32>
    %76 = tpu.matmul %64, %70, %cst_55 {dimension_numbers = #tpu.dot_dimension_numbers<[1], [0], [0], [1], [0, 0, 1, 1], [], []>} : vector<1x128xf32>, vector<128x16xf32>, vector<1x16xf32> -> vector<1x16xf32>
    %77 = arith.addf %65, %76 : vector<1x16xf32>
    %78 = arith.mulf %70, %70 : vector<128x16xf32>
    %cst_56 = arith.constant dense<0.000000e+00> : vector<1x16xf32>
    %79 = tpu.matmul %64, %78, %cst_56 {dimension_numbers = #tpu.dot_dimension_numbers<[1], [0], [0], [1], [0, 0, 1, 1], [], []>} : vector<1x128xf32>, vector<128x16xf32>, vector<1x16xf32> -> vector<1x16xf32>
    %80 = arith.addf %66, %79 : vector<1x16xf32>
    %c0_57 = arith.constant 0 : index
    %c12_58 = arith.constant 12 : index
    %81 = vector.load %arg6[%c0_57, %c12_58] : memref<128x36xbf16, #tpu.memory_space<vmem>>, vector<128x24xbf16>
    %c1_59 = arith.constant 1 : index
    %c0_60 = arith.constant 0 : index
    %c0_61 = arith.constant 0 : index
    %82 = vector.load %arg3[%c1_59, %c0_60, %c0_61] : memref<2x24x16xbf16, #tpu.memory_space<vmem>>, vector<1x24x16xbf16>
    %83 = vector.shape_cast %82 : vector<1x24x16xbf16> to vector<24x16xbf16>
    %cst_62 = arith.constant dense<0.000000e+00> : vector<128x16xf32>
    %84 = tpu.matmul %81, %83, %cst_62 {dimension_numbers = #tpu.dot_dimension_numbers<[1], [0], [0], [1], [0, 0, 1, 1], [], []>} : vector<128x24xbf16>, vector<24x16xbf16>, vector<128x16xf32> -> vector<128x16xf32>
    %85 = vector.shape_cast %84 : vector<128x16xf32> to vector<8x16x16xf32>
    %86 = arith.truncf %85 : vector<8x16x16xf32> to vector<8x16x16xbf16>
    %c0_63 = arith.constant 0 : index
    %c0_64 = arith.constant 0 : index
    %c1_65 = arith.constant 1 : index
    %c0_66 = arith.constant 0 : index
    %c0_67 = arith.constant 0 : index
    %87 = vector.load %arg4[%c0_63, %c0_64, %c1_65, %c0_66, %c0_67] : memref<1x8x2x16x16xbf16, #tpu.memory_space<vmem>>, vector<1x8x1x16x16xbf16>
    %88 = vector.shape_cast %87 : vector<1x8x1x16x16xbf16> to vector<8x16x16xbf16>
    %89 = vector.shape_cast %86 : vector<8x16x16xbf16> to vector<1x8x1x16x16xbf16>
    tpu.vector_store %arg4[%c0_63, %c0_64, %c1_65, %c0_66, %c0_67], %89 {strides = array<i32>} : memref<1x8x2x16x16xbf16, #tpu.memory_space<vmem>>, vector<1x8x1x16x16xbf16>,
    %cst_68 = arith.constant dense<0.000000e+00> : vector<1x16xf32>
    %90 = tpu.matmul %64, %84, %cst_68 {dimension_numbers = #tpu.dot_dimension_numbers<[1], [0], [0], [1], [0, 0, 1, 1], [], []>} : vector<1x128xf32>, vector<128x16xf32>, vector<1x16xf32> -> vector<1x16xf32>
    %91 = arith.addf %77, %90 : vector<1x16xf32>
    %92 = arith.mulf %84, %84 : vector<128x16xf32>
    %cst_69 = arith.constant dense<0.000000e+00> : vector<1x16xf32>
    %93 = tpu.matmul %64, %92, %cst_69 {dimension_numbers = #tpu.dot_dimension_numbers<[1], [0], [0], [1], [0, 0, 1, 1], [], []>} : vector<1x128xf32>, vector<128x16xf32>, vector<1x16xf32> -> vector<1x16xf32>
    %94 = arith.addf %80, %93 : vector<1x16xf32>
    %c0_70 = arith.constant 0 : index
    %c0_71 = arith.constant 0 : index
    %c0_72 = arith.constant 0 : index
    %c0_73 = arith.constant 0 : index
    %95 = vector.load %arg5[%c0_70, %c0_71, %c0_72, %c0_73] : memref<1x1x2x16xf32, #tpu.memory_space<vmem>>, vector<1x1x1x16xf32>
    %96 = vector.shape_cast %95 : vector<1x1x1x16xf32> to vector<1x16xf32>
    %97 = vector.shape_cast %91 : vector<1x16xf32> to vector<1x1x1x16xf32>
    tpu.vector_store %arg5[%c0_70, %c0_71, %c0_72, %c0_73], %97 {strides = array<i32>} : memref<1x1x2x16xf32, #tpu.memory_space<vmem>>, vector<1x1x1x16xf32>,
    %c0_74 = arith.constant 0 : index
    %c0_75 = arith.constant 0 : index
    %c1_76 = arith.constant 1 : index
    %c0_77 = arith.constant 0 : index
    %98 = vector.load %arg5[%c0_74, %c0_75, %c1_76, %c0_77] : memref<1x1x2x16xf32, #tpu.memory_space<vmem>>, vector<1x1x1x16xf32>
    %99 = vector.shape_cast %98 : vector<1x1x1x16xf32> to vector<1x16xf32>
    %100 = vector.shape_cast %94 : vector<1x16xf32> to vector<1x1x1x16xf32>
    tpu.vector_store %arg5[%c0_74, %c0_75, %c1_76, %c0_77], %100 {strides = array<i32>} : memref<1x1x2x16xf32, #tpu.memory_space<vmem>>, vector<1x1x1x16xf32>,
    return
  }
  func.func @transform_0(%arg0: i32, %arg1: i32) -> (i32, i32, i32, i32) {
    %c0_i32 = arith.constant 0 : i32
    %c0_i32_0 = arith.constant 0 : i32
    %c0_i32_1 = arith.constant 0 : i32
    %c0_i32_2 = arith.constant 0 : i32
    return %arg0, %c0_i32, %c0_i32_0, %c0_i32_1 : i32, i32, i32, i32
  }
  func.func @transform_1(%arg0: i32, %arg1: i32) -> (i32, i32, i32) {
    %c0_i32 = arith.constant 0 : i32
    %c0_i32_0 = arith.constant 0 : i32
    %c0_i32_1 = arith.constant 0 : i32
    %c0_i32_2 = arith.constant 0 : i32
    return %c0_i32, %c0_i32_0, %c0_i32_1 : i32, i32, i32
  }
  func.func @transform_2(%arg0: i32, %arg1: i32) -> (i32, i32, i32, i32, i32) {
    %c0_i32 = arith.constant 0 : i32
    %c0_i32_0 = arith.constant 0 : i32
    %c0_i32_1 = arith.constant 0 : i32
    %c0_i32_2 = arith.constant 0 : i32
    return %arg0, %arg1, %c0_i32, %c0_i32_0, %c0_i32_1 : i32, i32, i32, i32, i32
  }
  func.func @transform_3(%arg0: i32, %arg1: i32) -> (i32, i32, i32, i32) {
    %c0_i32 = arith.constant 0 : i32
    %c0_i32_0 = arith.constant 0 : i32
    %c0_i32_1 = arith.constant 0 : i32
    return %arg0, %arg1, %c0_i32, %c0_i32_0 : i32, i32, i32, i32
  }
}

module attributes {stable_mosaic.version = 11 : i64} {
  func.func @_bn_relu_kernel(%arg0: i32, %arg1: i32, %arg2: memref<1x16x32x8xbf16, #tpu.memory_space<vmem>>, %arg3: memref<1x8xf32, #tpu.memory_space<vmem>>, %arg4: memref<1x8xf32, #tpu.memory_space<vmem>>, %arg5: memref<1x16x32x8xf32, #tpu.memory_space<vmem>>) attributes {dimension_semantics = [#tpu.dimension_semantics<parallel>, #tpu.dimension_semantics<parallel>], iteration_bounds = array<i64: 2, 2>, scalar_prefetch = 0 : i64, scratch_operands = 0 : i64, tpu.core_type = #tpu.core_type<tc>, window_params = [{transform_indices = @transform_0, window_bounds = array<i64: 1, 16, 32, 8>}, {pipeline_mode = #tpu.pipeline_mode<synchronous>, transform_indices = @transform_1, window_bounds = array<i64: 1, 8>}, {pipeline_mode = #tpu.pipeline_mode<synchronous>, transform_indices = @transform_2, window_bounds = array<i64: 1, 8>}, {transform_indices = @transform_3, window_bounds = array<i64: 1, 16, 32, 8>}]} {
    %c0 = arith.constant 0 : index
    %c0_0 = arith.constant 0 : index
    %0 = vector.load %arg3[%c0, %c0_0] : memref<1x8xf32, #tpu.memory_space<vmem>>, vector<1x8xf32>
    %1 = vector.shape_cast %0 : vector<1x8xf32> to vector<1x1x8xf32>
    %c0_1 = arith.constant 0 : index
    %c0_2 = arith.constant 0 : index
    %2 = vector.load %arg4[%c0_1, %c0_2] : memref<1x8xf32, #tpu.memory_space<vmem>>, vector<1x8xf32>
    %3 = vector.shape_cast %2 : vector<1x8xf32> to vector<1x1x8xf32>
    %c0_3 = arith.constant 0 : index
    %c0_4 = arith.constant 0 : index
    %c0_5 = arith.constant 0 : index
    %c0_6 = arith.constant 0 : index
    %4 = vector.load %arg2[%c0_3, %c0_4, %c0_5, %c0_6] : memref<1x16x32x8xbf16, #tpu.memory_space<vmem>>, vector<1x16x32x8xbf16>
    %5 = vector.shape_cast %4 : vector<1x16x32x8xbf16> to vector<16x32x8xbf16>
    %6 = arith.extf %5 : vector<16x32x8xbf16> to vector<16x32x8xf32>
    %7 = vector.broadcast %1 : vector<1x1x8xf32> to vector<16x32x8xf32>
    %8 = arith.mulf %6, %7 : vector<16x32x8xf32>
    %9 = vector.broadcast %3 : vector<1x1x8xf32> to vector<16x32x8xf32>
    %10 = arith.addf %8, %9 : vector<16x32x8xf32>
    %cst = arith.constant 0.000000e+00 : f32
    %11 = vector.broadcast %cst : f32 to vector<16x32x8xf32>
    %12 = arith.maximumf %10, %11 : vector<16x32x8xf32>
    %c0_7 = arith.constant 0 : index
    %c0_8 = arith.constant 0 : index
    %c0_9 = arith.constant 0 : index
    %c0_10 = arith.constant 0 : index
    %13 = vector.load %arg5[%c0_7, %c0_8, %c0_9, %c0_10] : memref<1x16x32x8xf32, #tpu.memory_space<vmem>>, vector<1x16x32x8xf32>
    %14 = vector.shape_cast %13 : vector<1x16x32x8xf32> to vector<16x32x8xf32>
    %15 = vector.shape_cast %12 : vector<16x32x8xf32> to vector<1x16x32x8xf32>
    tpu.vector_store %arg5[%c0_7, %c0_8, %c0_9, %c0_10], %15 {strides = array<i32>} : memref<1x16x32x8xf32, #tpu.memory_space<vmem>>, vector<1x16x32x8xf32>,
    return
  }
  func.func @transform_0(%arg0: i32, %arg1: i32) -> (i32, i32, i32, i32) {
    %c0_i32 = arith.constant 0 : i32
    %c0_i32_0 = arith.constant 0 : i32
    %c0_i32_1 = arith.constant 0 : i32
    return %arg0, %arg1, %c0_i32, %c0_i32_0 : i32, i32, i32, i32
  }
  func.func @transform_1(%arg0: i32, %arg1: i32) -> (i32, i32) {
    %c0_i32 = arith.constant 0 : i32
    %c0_i32_0 = arith.constant 0 : i32
    %c0_i32_1 = arith.constant 0 : i32
    return %c0_i32, %c0_i32_0 : i32, i32
  }
  func.func @transform_2(%arg0: i32, %arg1: i32) -> (i32, i32) {
    %c0_i32 = arith.constant 0 : i32
    %c0_i32_0 = arith.constant 0 : i32
    %c0_i32_1 = arith.constant 0 : i32
    return %c0_i32, %c0_i32_0 : i32, i32
  }
  func.func @transform_3(%arg0: i32, %arg1: i32) -> (i32, i32, i32, i32) {
    %c0_i32 = arith.constant 0 : i32
    %c0_i32_0 = arith.constant 0 : i32
    %c0_i32_1 = arith.constant 0 : i32
    return %arg0, %arg1, %c0_i32, %c0_i32_0 : i32, i32, i32, i32
  }
}

</mosaic_0001>

<llo_original>
// kernel: unet_up_forward.3
$region0: #{unet_up_forward.3}
  #allocation0 [shape = 'u32[]', space=smem, size = 0x4, offset = 0x4, fixed_abs, tag = 'smem constant byte address 0x4 - core index']
  #allocation1 [shape = 'u32[144,128]{1,0:T(1,128)}', space=vmem, size = 0x12000, scoped, tag = 'internal scratch']
  %s0 = inlined_call_operand.vmem [shape: bf16[2,32,32,8], index: 0, kind: input, shape index: {}]
  %s1 = inlined_call_operand.vmem [shape: f32[1,8], index: 1, kind: input, shape index: {}]
  %s2 = inlined_call_operand.vmem [shape: f32[1,8], index: 2, kind: input, shape index: {}]
  %s3 = inlined_call_operand.vmem [shape: f32[2,32,32,8], index: 3, kind: output, shape index: {}]
  %s4 = sld [smem:[#allocation0]]
  $region45: #{unet_up_forward.3} parent=0
    _
  %s6 = ssub.s32 1, %s4
  %s7 = scalar_select 0, %s6, %s4
  loop: start=0, step=1, limit=6
  $region2: #{unet_up_forward.3} parent=0 // loop_pre_header
    _
  $region3: #{unet_up_forward.3} parent=0 // loop_header
    %s9 = sphi 0, %s13
    %p10 = scmp.ge.s32.totalorder %s9, 6
    %s16 = sphi 0, %s28
    %s17 = sphi 0, %s24
    %s18 = sphi 0, %s16
    %s19 = sphi 0, %s17
    %s20 = sphi 0, %s18
    %s21 = sphi 0, %s19
    %s33 = sphi 0, %s35
    %s36 = sphi 0, %s33
    %s37 = sphi 0, %s36
    %s53 = sphi 0, %s37
    %s57 = sphi 0, %s57
    %s59 = sphi 0, %s57
    %s60 = sphi 0, %s59
    %s74 = sphi 0, %s60
    %s78 = sphi 0, %s78
    %s80 = sphi 0, %s78
    %s81 = sphi 0, %s80
    %s95 = sphi 0, %s81
    %s103 = sphi 0, %s105
    %s106 = sphi 0, %s103
    %s107 = sphi 0, %s106
    %s123 = sphi 0, %s107
  $region4: #{unet_up_forward.3} parent=0 // loop_header_branch
    %12 = sbr.rel (%p10) target = $region8
  $region5: #{unet_up_forward.3} parent=0 // loop_body
    %s14 = ssub.s32 %s9, 1
    %s15 = ssub.s32 %s9, 2
    %s22 = sadd.s32 1, %s17
    %p23 = scmp.ge.s32.totalorder %s22, 2
    %s24 = scalar_select %p23, 0, %s22
    %s25 = sadd.s32 1, %s16
    %s26 = scalar_select %p23, %s25, %s16
    %p27 = scmp.ge.s32.totalorder %s26, 2
    %s28 = scalar_select %p27, 0, %s26
    %s29 = ssub.s32 %s16, %s28
    %s30 = ssub.s32 %s17, %s24
    %s31 = sor.u32 %s29, %s30
    %p32 = scmp.eq.s32.totalorder %s31, 0
    %s34 = sadd.s32 %s33, 1
    %s35 = scalar_select %p32, %s33, %s34
    %p38 = pneg %p32
    %p39 = scmp.eq.s32.totalorder %s9, 3
    %p40 = por %p38, %p39
    %p41 = scmp.ne.s32.totalorder %s33, %s36
    %p42 = scmp.eq.s32.totalorder %s9, 0
    %p43 = por %p41, %p42
    %p44 = scmp.ne.s32.totalorder %s33, %s36
    %p45 = scmp.eq.s32.totalorder %s14, 3
    %p46 = por %p44, %p45
    %p47 = scmp.ne.s32.totalorder %s36, %s37
    %p48 = scmp.eq.s32.totalorder %s14, 0
    %p49 = por %p47, %p48
    %p50 = scmp.ne.s32.totalorder %s36, %s37
    %p51 = scmp.eq.s32.totalorder %s15, 3
    %p52 = por %p50, %p51
    %p54 = scmp.ne.s32.totalorder %s37, %s53
    %p55 = scmp.eq.s32.totalorder %s15, 0
    %p56 = por %p54, %p55
    %s58 = sadd.s32 %s57, 1
    %p61 = scmp.eq.s32.totalorder %s9, 3
    %p62 = scmp.ne.s32.totalorder %s57, %s59
    %p63 = scmp.eq.s32.totalorder %s9, 0
    %p64 = por %p62, %p63
    %p65 = scmp.ne.s32.totalorder %s57, %s59
    %p66 = scmp.eq.s32.totalorder %s14, 3
    %p67 = por %p65, %p66
    %p68 = scmp.ne.s32.totalorder %s59, %s60
    %p69 = scmp.eq.s32.totalorder %s14, 0
    %p70 = por %p68, %p69
    %p71 = scmp.ne.s32.totalorder %s59, %s60
    %p72 = scmp.eq.s32.totalorder %s15, 3
    %p73 = por %p71, %p72
    %p75 = scmp.ne.s32.totalorder %s60, %s74
    %p76 = scmp.eq.s32.totalorder %s15, 0
    %p77 = por %p75, %p76
    %s79 = sadd.s32 %s78, 1
    %p82 = scmp.eq.s32.totalorder %s9, 3
    %p83 = scmp.ne.s32.totalorder %s78, %s80
    %p84 = scmp.eq.s32.totalorder %s9, 0
    %p85 = por %p83, %p84
    %p86 = scmp.ne.s32.totalorder %s78, %s80
    %p87 = scmp.eq.s32.totalorder %s14, 3
    %p88 = por %p86, %p87
    %p89 = scmp.ne.s32.totalorder %s80, %s81
    %p90 = scmp.eq.s32.totalorder %s14, 0
    %p91 = por %p89, %p90
    %p92 = scmp.ne.s32.totalorder %s80, %s81
    %p93 = scmp.eq.s32.totalorder %s15, 3
    %p94 = por %p92, %p93
    %p96 = scmp.ne.s32.totalorder %s81, %s95
    %p97 = scmp.eq.s32.totalorder %s15, 0
    %p98 = por %p96, %p97
    %s99 = ssub.s32 %s16, %s28
    %s100 = ssub.s32 %s17, %s24
    %s101 = sor.u32 %s99, %s100
    %p102 = scmp.eq.s32.totalorder %s101, 0
    %s104 = sadd.s32 %s103, 1
    %s105 = scalar_select %p102, %s103, %s104
    %p108 = pneg %p102
    %p109 = scmp.eq.s32.totalorder %s9, 3
    %p110 = por %p108, %p109
    %p111 = scmp.ne.s32.totalorder %s103, %s106
    %p112 = scmp.eq.s32.totalorder %s9, 0
    %p113 = por %p111, %p112
    %p114 = scmp.ne.s32.totalorder %s103, %s106
    %p115 = scmp.eq.s32.totalorder %s14, 3
    %p116 = por %p114, %p115
    %p117 = scmp.ne.s32.totalorder %s106, %s107
    %p118 = scmp.eq.s32.totalorder %s14, 0
    %p119 = por %p117, %p118
    %p120 = scmp.ne.s32.totalorder %s106, %s107
    %p121 = scmp.eq.s32.totalorder %s15, 3
    %p122 = por %p120, %p121
    %p124 = scmp.ne.s32.totalorder %s107, %s123
    %p125 = scmp.eq.s32.totalorder %s15, 0
    %p126 = por %p124, %p125
    %p127 = scmp.le.s32.totalorder 1, %s9
    %p128 = scmp.lt.s32.totalorder %s9, 5
    %p129 = pnand %p127, %p128
    %p130 = pneg %p129
    // Predicated region
    $region9: #{unet_up_forward.3} parent=5 // pred_check
      _
    $region10: #{unet_up_forward.3} parent=5 // pred_check_branch
      %132 = sbr.rel (%p129) target = $region12
    $region11: #{unet_up_forward.3} parent=5 // pred_region
      %s133 = ssub.s32 %s9, 1
      // Predicated region
      $region13: #{unet_up_forward.3} parent=11 // pred_check
        %p134 = pneg %p70
      $region14: #{unet_up_forward.3} parent=11 // pred_check_branch
        %136 = sbr.rel (%p134) target = $region16
      $region15: #{unet_up_forward.3} parent=11 // pred_region
        _
      $region16: #{unet_up_forward.3} parent=11 // pred_fallthru
        _
      // Predicated region
      $region17: #{unet_up_forward.3} parent=11 // pred_check
        %p137 = pneg %p91
      $region18: #{unet_up_forward.3} parent=11 // pred_check_branch
        %139 = sbr.rel (%p137) target = $region20
      $region19: #{unet_up_forward.3} parent=11 // pred_region
        _
      $region20: #{unet_up_forward.3} parent=11 // pred_fallthru
        _
    $region12: #{unet_up_forward.3} parent=5 // pred_fallthru
      _
    %p140 = scmp.lt.s32.totalorder %s9, 4
    // Predicated region
    $region21: #{unet_up_forward.3} parent=5 // pred_check
      %p141 = pneg %p140
    $region22: #{unet_up_forward.3} parent=5 // pred_check_branch
      %143 = sbr.rel (%p141) target = $region24
    $region23: #{unet_up_forward.3} parent=5 // pred_region
      // Predicated region
      $region25: #{unet_up_forward.3} parent=23 // pred_check
        %p144 = pneg %p43
      $region26: #{unet_up_forward.3} parent=23 // pred_check_branch
        %146 = sbr.rel (%p144) target = $region28
      $region27: #{unet_up_forward.3} parent=23 // pred_region
        %s147 = smul.u32 16, %s17
        %p148 = scmp.lt.s32.totalorder %s16, 1
        %s149 = scalar_select %p148, %s16, 1
        %p150 = scmp.lt.s32.totalorder %s147, 31
        %s151 = scalar_select %p150, %s147, 31
        %s152 = smul.addr %s151, 4
        %s153 = smul.addr %s149, 128
        %s154 = sadd.s32 %s152, %s153
        %s155 = smul.addr %s154, 4
        %s156 = scalar_lea.vmem %s0, %s155
        %s157 = smul.u32 16, %s17
      $region28: #{unet_up_forward.3} parent=23 // pred_fallthru
        _
    $region24: #{unet_up_forward.3} parent=5 // pred_fallthru
      _
    %p158 = scmp.le.s32.totalorder 1, %s9
    %p159 = scmp.lt.s32.totalorder %s9, 5
    %p160 = pnand %p158, %p159
    %p161 = pneg %p160
    // Predicated region
    $region29: #{unet_up_forward.3} parent=5 // pred_check
      _
    $region30: #{unet_up_forward.3} parent=5 // pred_check_branch
      %163 = sbr.rel (%p160) target = $region32
    $region31: #{unet_up_forward.3} parent=5 // pred_region
      %s164 = ssub.s32 %s9, 1
      %s165 = smul.u32 16, %s19
      %p166 = scmp.lt.s32.totalorder %s18, 1
      %s167 = scalar_select %p166, %s18, 1
      %p168 = scmp.lt.s32.totalorder %s165, 31
      %s169 = scalar_select %p168, %s165, 31
      %s170 = smul.addr %s169, 4
      %s171 = smul.addr %s167, 128
      %s172 = sadd.s32 %s170, %s171
      %s173 = smul.addr %s172, 4
      %s174 = scalar_lea.vmem %s0, %s173
      %p175 = pneg %p49
      %p176 = pneg %p46
      %p177 = pneg %p70
      %p178 = pneg %p67
      %p179 = pneg %p91
      %p180 = pneg %p88
      %p181 = pneg %p119
      %p182 = pneg %p116
      %s183 = smul.u32 16, %s19
      %p184 = scmp.lt.s32.totalorder %s18, 1
      %s185 = scalar_select %p184, %s18, 1
      %p186 = scmp.lt.s32.totalorder %s183, 31
      %s187 = scalar_select %p186, %s183, 31
      %s188 = smul.addr %s187, 4
      %s189 = smul.addr %s185, 128
      %s190 = sadd.s32 %s188, %s189
      %s191 = smul.addr %s190, 8
      %s192 = scalar_lea.vmem %s3, %s191
      %s193 = smul.u32 16, %s19
      %p194 = scmp.lt.s32.totalorder %s18, 1
      %s195 = scalar_select %p194, %s18, 1
      %p196 = scmp.lt.s32.totalorder %s193, 31
      %s197 = scalar_select %p196, %s193, 31
      %s198 = smul.addr %s197, 4
      %s199 = smul.addr %s195, 128
      %s200 = sadd.s32 %s198, %s199
      %s201 = smul.addr %s200, 4
      %s202 = scalar_lea.vmem %s0, %s201
      %s203 = smul.u32 16, %s19
      %s204 = smul.u32 16, %s19
      %p205 = scmp.lt.s32.totalorder %s18, 1
      %s206 = scalar_select %p205, %s18, 1
      %p207 = scmp.lt.s32.totalorder %s204, 31
      %s208 = scalar_select %p207, %s204, 31
      %s209 = smul.addr %s208, 4
      %s210 = smul.addr %s206, 128
      %s211 = sadd.s32 %s209, %s210
      %s212 = smul.addr %s211, 8
      %s213 = scalar_lea.vmem %s3, %s212
      %s214 = smul.u32 16, %s19
      %v215 = vld [vmem:[%s1] sm:$0x1]
      %v216 = vld [vmem:[%s2] sm:$0x1]
      %v217 = vld [vmem:[%s202] sm:$0xf]
      %v218 = vld [vmem:[%s202 + $0x4] sm:$0xf]
      %v219 = vld [vmem:[%s202 + $0x8] sm:$0xf]
      %v220 = vld [vmem:[%s202 + $0xc] sm:$0xf]
      %v221 = vld [vmem:[%s202 + $0x10] sm:$0xf]
      %v222 = vld [vmem:[%s202 + $0x14] sm:$0xf]
      %v223 = vld [vmem:[%s202 + $0x18] sm:$0xf]
      %v224 = vld [vmem:[%s202 + $0x1c] sm:$0xf]
      %v225 = vld [vmem:[%s202 + $0x20] sm:$0xf]
      %v226 = vld [vmem:[%s202 + $0x24] sm:$0xf]
      %v227 = vld [vmem:[%s202 + $0x28] sm:$0xf]
      %v228 = vld [vmem:[%s202 + $0x2c] sm:$0xf]
      %v229 = vld [vmem:[%s202 + $0x30] sm:$0xf]
      %v230 = vld [vmem:[%s202 + $0x34] sm:$0xf]
      %v231 = vld [vmem:[%s202 + $0x38] sm:$0xf]
      %v232 = vld [vmem:[%s202 + $0x3c] sm:$0xf]
      %v233 = vld [vmem:[%s202 + $0x40] sm:$0xf]
      %v234 = vld [vmem:[%s202 + $0x44] sm:$0xf]
      %v235 = vld [vmem:[%s202 + $0x48] sm:$0xf]
      %v236 = vld [vmem:[%s202 + $0x4c] sm:$0xf]
      %v237 = vld [vmem:[%s202 + $0x50] sm:$0xf]
      %v238 = vld [vmem:[%s202 + $0x54] sm:$0xf]
      %v239 = vld [vmem:[%s202 + $0x58] sm:$0xf]
      %v240 = vld [vmem:[%s202 + $0x5c] sm:$0xf]
      %v241 = vld [vmem:[%s202 + $0x60] sm:$0xf]
      %v242 = vld [vmem:[%s202 + $0x64] sm:$0xf]
      %v243 = vld [vmem:[%s202 + $0x68] sm:$0xf]
      %v244 = vld [vmem:[%s202 + $0x6c] sm:$0xf]
      %v245 = vld [vmem:[%s202 + $0x70] sm:$0xf]
      %v246 = vld [vmem:[%s202 + $0x74] sm:$0xf]
      %v247 = vld [vmem:[%s202 + $0x78] sm:$0xf]
      %v248 = vld [vmem:[%s202 + $0x7c] sm:$0xf]
      %v249 = vld [vmem:[%s202 + $0x80] sm:$0xf]
      %v250 = vld [vmem:[%s202 + $0x84] sm:$0xf]
      %v251 = vld [vmem:[%s202 + $0x88] sm:$0xf]
      %v252 = vld [vmem:[%s202 + $0x8c] sm:$0xf]
      %v253 = vld [vmem:[%s202 + $0x90] sm:$0xf]
      %v254 = vld [vmem:[%s202 + $0x94] sm:$0xf]
      %v255 = vld [vmem:[%s202 + $0x98] sm:$0xf]
      %v256 = vld [vmem:[%s202 + $0x9c] sm:$0xf]
      %v257 = vld [vmem:[%s202 + $0xa0] sm:$0xf]
      %v258 = vld [vmem:[%s202 + $0xa4] sm:$0xf]
      %v259 = vld [vmem:[%s202 + $0xa8] sm:$0xf]
      %v260 = vld [vmem:[%s202 + $0xac] sm:$0xf]
      %v261 = vld [vmem:[%s202 + $0xb0] sm:$0xf]
      %v262 = vld [vmem:[%s202 + $0xb4] sm:$0xf]
      %v263 = vld [vmem:[%s202 + $0xb8] sm:$0xf]
      %v264 = vld [vmem:[%s202 + $0xbc] sm:$0xf]
      %v265 = vld [vmem:[%s202 + $0xc0] sm:$0xf]
      %v266 = vld [vmem:[%s202 + $0xc4] sm:$0xf]
      %v267 = vld [vmem:[%s202 + $0xc8] sm:$0xf]
      %v268 = vld [vmem:[%s202 + $0xcc] sm:$0xf]
      %v269 = vld [vmem:[%s202 + $0xd0] sm:$0xf]
      %v270 = vld [vmem:[%s202 + $0xd4] sm:$0xf]
      %v271 = vld [vmem:[%s202 + $0xd8] sm:$0xf]
      %v272 = vld [vmem:[%s202 + $0xdc] sm:$0xf]
      %v273 = vld [vmem:[%s202 + $0xe0] sm:$0xf]
      %v274 = vld [vmem:[%s202 + $0xe4] sm:$0xf]
      %v275 = vld [vmem:[%s202 + $0xe8] sm:$0xf]
      %v276 = vld [vmem:[%s202 + $0xec] sm:$0xf]
      %v277 = vld [vmem:[%s202 + $0xf0] sm:$0xf]
      %v278 = vld [vmem:[%s202 + $0xf4] sm:$0xf]
      %v279 = vld [vmem:[%s202 + $0xf8] sm:$0xf]
      %v280 = vld [vmem:[%s202 + $0xfc] sm:$0xf]
      %v281 = vunpack.c.l.bf16 %v217
      %v282 = vunpack.c.l.bf16 %v218
      %v283 = vunpack.c.l.bf16 %v219
      %v284 = vunpack.c.l.bf16 %v220
      %v285 = vunpack.c.l.bf16 %v221
      %v286 = vunpack.c.l.bf16 %v222
      %v287 = vunpack.c.l.bf16 %v223
      %v288 = vunpack.c.l.bf16 %v224
      %v289 = vunpack.c.l.bf16 %v225
      %v290 = vunpack.c.l.bf16 %v226
      %v291 = vunpack.c.l.bf16 %v227
      %v292 = vunpack.c.l.bf16 %v228
      %v293 = vunpack.c.l.bf16 %v229
      %v294 = vunpack.c.l.bf16 %v230
      %v295 = vunpack.c.l.bf16 %v231
      %v296 = vunpack.c.l.bf16 %v232
      %v297 = vunpack.c.l.bf16 %v233
      %v298 = vunpack.c.l.bf16 %v234
      %v299 = vunpack.c.l.bf16 %v235
      %v300 = vunpack.c.l.bf16 %v236
      %v301 = vunpack.c.l.bf16 %v237
      %v302 = vunpack.c.l.bf16 %v238
      %v303 = vunpack.c.l.bf16 %v239
      %v304 = vunpack.c.l.bf16 %v240
      %v305 = vunpack.c.l.bf16 %v241
      %v306 = vunpack.c.l.bf16 %v242
      %v307 = vunpack.c.l.bf16 %v243
      %v308 = vunpack.c.l.bf16 %v244
      %v309 = vunpack.c.l.bf16 %v245
      %v310 = vunpack.c.l.bf16 %v246
      %v311 = vunpack.c.l.bf16 %v247
      %v312 = vunpack.c.l.bf16 %v248
      %v313 = vunpack.c.l.bf16 %v249
      %v314 = vunpack.c.l.bf16 %v250
      %v315 = vunpack.c.l.bf16 %v251
      %v316 = vunpack.c.l.bf16 %v252
      %v317 = vunpack.c.l.bf16 %v253
      %v318 = vunpack.c.l.bf16 %v254
      %v319 = vunpack.c.l.bf16 %v255
      %v320 = vunpack.c.l.bf16 %v256
      %v321 = vunpack.c.l.bf16 %v257
      %v322 = vunpack.c.l.bf16 %v258
      %v323 = vunpack.c.l.bf16 %v259
      %v324 = vunpack.c.l.bf16 %v260
      %v325 = vunpack.c.l.bf16 %v261
      %v326 = vunpack.c.l.bf16 %v262
      %v327 = vunpack.c.l.bf16 %v263
      %v328 = vunpack.c.l.bf16 %v264
      %v329 = vunpack.c.l.bf16 %v265
      %v330 = vunpack.c.l.bf16 %v266
      %v331 = vunpack.c.l.bf16 %v267
      %v332 = vunpack.c.l.bf16 %v268
      %v333 = vunpack.c.l.bf16 %v269
      %v334 = vunpack.c.l.bf16 %v270
      %v335 = vunpack.c.l.bf16 %v271
      %v336 = vunpack.c.l.bf16 %v272
      %v337 = vunpack.c.l.bf16 %v273
      %v338 = vunpack.c.l.bf16 %v274
      %v339 = vunpack.c.l.bf16 %v275
      %v340 = vunpack.c.l.bf16 %v276
      %v341 = vunpack.c.l.bf16 %v277
      %v342 = vunpack.c.l.bf16 %v278
      %v343 = vunpack.c.l.bf16 %v279
      %v344 = vunpack.c.l.bf16 %v280
      %v346 = vlaneseq
      %v347 = vshrl.u32 %v346, 7
      %v348 = vsub.s32 0, %v347
      %v349 = vrot.slane %v215, %v348
      %v351 = vmul.f32 %v281, %v349
      %v352 = vmul.f32 %v282, %v349
      %v353 = vmul.f32 %v283, %v349
      %v354 = vmul.f32 %v284, %v349
      %v355 = vmul.f32 %v285, %v349
      %v356 = vmul.f32 %v286, %v349
      %v357 = vmul.f32 %v287, %v349
      %v358 = vmul.f32 %v288, %v349
      %v359 = vmul.f32 %v289, %v349
      %v360 = vmul.f32 %v290, %v349
      %v361 = vmul.f32 %v291, %v349
      %v362 = vmul.f32 %v292, %v349
      %v363 = vmul.f32 %v293, %v349
      %v364 = vmul.f32 %v294, %v349
      %v365 = vmul.f32 %v295, %v349
      %v366 = vmul.f32 %v296, %v349
      %v367 = vmul.f32 %v297, %v349
      %v368 = vmul.f32 %v298, %v349
      %v369 = vmul.f32 %v299, %v349
      %v370 = vmul.f32 %v300, %v349
      %v371 = vmul.f32 %v301, %v349
      %v372 = vmul.f32 %v302, %v349
      %v373 = vmul.f32 %v303, %v349
      %v374 = vmul.f32 %v304, %v349
      %v375 = vmul.f32 %v305, %v349
      %v376 = vmul.f32 %v306, %v349
      %v377 = vmul.f32 %v307, %v349
      %v378 = vmul.f32 %v308, %v349
      %v379 = vmul.f32 %v309, %v349
      %v380 = vmul.f32 %v310, %v349
      %v381 = vmul.f32 %v311, %v349
      %v382 = vmul.f32 %v312, %v349
      %v383 = vmul.f32 %v313, %v349
      %v384 = vmul.f32 %v314, %v349
      %v385 = vmul.f32 %v315, %v349
      %v386 = vmul.f32 %v316, %v349
      %v387 = vmul.f32 %v317, %v349
      %v388 = vmul.f32 %v318, %v349
      %v389 = vmul.f32 %v319, %v349
      %v390 = vmul.f32 %v320, %v349
      %v391 = vmul.f32 %v321, %v349
      %v392 = vmul.f32 %v322, %v349
      %v393 = vmul.f32 %v323, %v349
      %v394 = vmul.f32 %v324, %v349
      %v395 = vmul.f32 %v325, %v349
      %v396 = vmul.f32 %v326, %v349
      %v397 = vmul.f32 %v327, %v349
      %v398 = vmul.f32 %v328, %v349
      %v399 = vmul.f32 %v329, %v349
      %v400 = vmul.f32 %v330, %v349
      %v401 = vmul.f32 %v331, %v349
      %v402 = vmul.f32 %v332, %v349
      %v403 = vmul.f32 %v333, %v349
      %v404 = vmul.f32 %v334, %v349
      %v405 = vmul.f32 %v335, %v349
      %v406 = vmul.f32 %v336, %v349
      %v407 = vmul.f32 %v337, %v349
      %v408 = vmul.f32 %v338, %v349
      %v409 = vmul.f32 %v339, %v349
      %v410 = vmul.f32 %v340, %v349
      %v411 = vmul.f32 %v341, %v349
      %v412 = vmul.f32 %v342, %v349
      %v413 = vmul.f32 %v343, %v349
      %v414 = vmul.f32 %v344, %v349
      %v416 = vlaneseq
      %v417 = vshrl.u32 %v416, 7
      %v418 = vsub.s32 0, %v417
      %v419 = vrot.slane %v216, %v418
      %v421 = vadd.f32 %v351, %v419
      %v422 = vadd.f32 %v352, %v419
      %v423 = vadd.f32 %v353, %v419
      %v424 = vadd.f32 %v354, %v419
      %v425 = vadd.f32 %v355, %v419
      %v426 = vadd.f32 %v356, %v419
      %v427 = vadd.f32 %v357, %v419
      %v428 = vadd.f32 %v358, %v419
      %v429 = vadd.f32 %v359, %v419
      %v430 = vadd.f32 %v360, %v419
      %v431 = vadd.f32 %v361, %v419
      %v432 = vadd.f32 %v362, %v419
      %v433 = vadd.f32 %v363, %v419
      %v434 = vadd.f32 %v364, %v419
      %v435 = vadd.f32 %v365, %v419
      %v436 = vadd.f32 %v366, %v419
      %v437 = vadd.f32 %v367, %v419
      %v438 = vadd.f32 %v368, %v419
      %v439 = vadd.f32 %v369, %v419
      %v440 = vadd.f32 %v370, %v419
      %v441 = vadd.f32 %v371, %v419
      %v442 = vadd.f32 %v372, %v419
      %v443 = vadd.f32 %v373, %v419
      %v444 = vadd.f32 %v374, %v419
      %v445 = vadd.f32 %v375, %v419
      %v446 = vadd.f32 %v376, %v419
      %v447 = vadd.f32 %v377, %v419
      %v448 = vadd.f32 %v378, %v419
      %v449 = vadd.f32 %v379, %v419
      %v450 = vadd.f32 %v380, %v419
      %v451 = vadd.f32 %v381, %v419
      %v452 = vadd.f32 %v382, %v419
      %v453 = vadd.f32 %v383, %v419
      %v454 = vadd.f32 %v384, %v419
      %v455 = vadd.f32 %v385, %v419
      %v456 = vadd.f32 %v386, %v419
      %v457 = vadd.f32 %v387, %v419
      %v458 = vadd.f32 %v388, %v419
      %v459 = vadd.f32 %v389, %v419
      %v460 = vadd.f32 %v390, %v419
      %v461 = vadd.f32 %v391, %v419
      %v462 = vadd.f32 %v392, %v419
      %v463 = vadd.f32 %v393, %v419
      %v464 = vadd.f32 %v394, %v419
      %v465 = vadd.f32 %v395, %v419
      %v466 = vadd.f32 %v396, %v419
      %v467 = vadd.f32 %v397, %v419
      %v468 = vadd.f32 %v398, %v419
      %v469 = vadd.f32 %v399, %v419
      %v470 = vadd.f32 %v400, %v419
      %v471 = vadd.f32 %v401, %v419
      %v472 = vadd.f32 %v402, %v419
      %v473 = vadd.f32 %v403, %v419
      %v474 = vadd.f32 %v404, %v419
      %v475 = vadd.f32 %v405, %v419
      %v476 = vadd.f32 %v406, %v419
      %v477 = vadd.f32 %v407, %v419
      %v478 = vadd.f32 %v408, %v419
      %v479 = vadd.f32 %v409, %v419
      %v480 = vadd.f32 %v410, %v419
      %v481 = vadd.f32 %v411, %v419
      %v482 = vadd.f32 %v412, %v419
      %v483 = vadd.f32 %v413, %v419
      %v484 = vadd.f32 %v414, %v419
      %v485 = vmax.f32 %v421, 0.0
      %v486 = vmax.f32 %v422, 0.0
      %v487 = vmax.f32 %v423, 0.0
      %v488 = vmax.f32 %v424, 0.0
      %v489 = vmax.f32 %v425, 0.0
      %v490 = vmax.f32 %v426, 0.0
      %v491 = vmax.f32 %v427, 0.0
      %v492 = vmax.f32 %v428, 0.0
      %v493 = vmax.f32 %v429, 0.0
      %v494 = vmax.f32 %v430, 0.0
      %v495 = vmax.f32 %v431, 0.0
      %v496 = vmax.f32 %v432, 0.0
      %v497 = vmax.f32 %v433, 0.0
      %v498 = vmax.f32 %v434, 0.0
      %v499 = vmax.f32 %v435, 0.0
      %v500 = vmax.f32 %v436, 0.0
      %v501 = vmax.f32 %v437, 0.0
      %v502 = vmax.f32 %v438, 0.0
      %v503 = vmax.f32 %v439, 0.0
      %v504 = vmax.f32 %v440, 0.0
      %v505 = vmax.f32 %v441, 0.0
      %v506 = vmax.f32 %v442, 0.0
      %v507 = vmax.f32 %v443, 0.0
      %v508 = vmax.f32 %v444, 0.0
      %v509 = vmax.f32 %v445, 0.0
      %v510 = vmax.f32 %v446, 0.0
      %v511 = vmax.f32 %v447, 0.0
      %v512 = vmax.f32 %v448, 0.0
      %v513 = vmax.f32 %v449, 0.0
      %v514 = vmax.f32 %v450, 0.0
      %v515 = vmax.f32 %v451, 0.0
      %v516 = vmax.f32 %v452, 0.0
      %v517 = vmax.f32 %v453, 0.0
      %v518 = vmax.f32 %v454, 0.0
      %v519 = vmax.f32 %v455, 0.0
      %v520 = vmax.f32 %v456, 0.0
      %v521 = vmax.f32 %v457, 0.0
      %v522 = vmax.f32 %v458, 0.0
      %v523 = vmax.f32 %v459, 0.0
      %v524 = vmax.f32 %v460, 0.0
      %v525 = vmax.f32 %v461, 0.0
      %v526 = vmax.f32 %v462, 0.0
      %v527 = vmax.f32 %v463, 0.0
      %v528 = vmax.f32 %v464, 0.0
      %v529 = vmax.f32 %v465, 0.0
      %v530 = vmax.f32 %v466, 0.0
      %v531 = vmax.f32 %v467, 0.0
      %v532 = vmax.f32 %v468, 0.0
      %v533 = vmax.f32 %v469, 0.0
      %v534 = vmax.f32 %v470, 0.0
      %v535 = vmax.f32 %v471, 0.0
      %v536 = vmax.f32 %v472, 0.0
      %v537 = vmax.f32 %v473, 0.0
      %v538 = vmax.f32 %v474, 0.0
      %v539 = vmax.f32 %v475, 0.0
      %v540 = vmax.f32 %v476, 0.0
      %v541 = vmax.f32 %v477, 0.0
      %v542 = vmax.f32 %v478, 0.0
      %v543 = vmax.f32 %v479, 0.0
      %v544 = vmax.f32 %v480, 0.0
      %v545 = vmax.f32 %v481, 0.0
      %v546 = vmax.f32 %v482, 0.0
      %v547 = vmax.f32 %v483, 0.0
      %v548 = vmax.f32 %v484, 0.0
      %vm549 = vcmask 64512
      %550 = vst.msk [vmem:[%s213] sm:$0xff] %vm549, %v485
      %551 = vst.msk [vmem:[%s213 + $0x8] sm:$0xff] %vm549, %v486
      %552 = vst.msk [vmem:[%s213 + $0x10] sm:$0xff] %vm549, %v487
      %553 = vst.msk [vmem:[%s213 + $0x18] sm:$0xff] %vm549, %v488
      %554 = vst.msk [vmem:[%s213 + $0x20] sm:$0xff] %vm549, %v489
      %555 = vst.msk [vmem:[%s213 + $0x28] sm:$0xff] %vm549, %v490
      %556 = vst.msk [vmem:[%s213 + $0x30] sm:$0xff] %vm549, %v491
      %557 = vst.msk [vmem:[%s213 + $0x38] sm:$0xff] %vm549, %v492
      %558 = vst.msk [vmem:[%s213 + $0x40] sm:$0xff] %vm549, %v493
      %559 = vst.msk [vmem:[%s213 + $0x48] sm:$0xff] %vm549, %v494
      %560 = vst.msk [vmem:[%s213 + $0x50] sm:$0xff] %vm549, %v495
      %561 = vst.msk [vmem:[%s213 + $0x58] sm:$0xff] %vm549, %v496
      %562 = vst.msk [vmem:[%s213 + $0x60] sm:$0xff] %vm549, %v497
      %563 = vst.msk [vmem:[%s213 + $0x68] sm:$0xff] %vm549, %v498
      %564 = vst.msk [vmem:[%s213 + $0x70] sm:$0xff] %vm549, %v499
      %565 = vst.msk [vmem:[%s213 + $0x78] sm:$0xff] %vm549, %v500
      %566 = vst.msk [vmem:[%s213 + $0x80] sm:$0xff] %vm549, %v501
      %567 = vst.msk [vmem:[%s213 + $0x88] sm:$0xff] %vm549, %v502
      %568 = vst.msk [vmem:[%s213 + $0x90] sm:$0xff] %vm549, %v503
      %569 = vst.msk [vmem:[%s213 + $0x98] sm:$0xff] %vm549, %v504
      %570 = vst.msk [vmem:[%s213 + $0xa0] sm:$0xff] %vm549, %v505
      %571 = vst.msk [vmem:[%s213 + $0xa8] sm:$0xff] %vm549, %v506
      %572 = vst.msk [vmem:[%s213 + $0xb0] sm:$0xff] %vm549, %v507
      %573 = vst.msk [vmem:[%s213 + $0xb8] sm:$0xff] %vm549, %v508
      %574 = vst.msk [vmem:[%s213 + $0xc0] sm:$0xff] %vm549, %v509
      %575 = vst.msk [vmem:[%s213 + $0xc8] sm:$0xff] %vm549, %v510
      %576 = vst.msk [vmem:[%s213 + $0xd0] sm:$0xff] %vm549, %v511
      %577 = vst.msk [vmem:[%s213 + $0xd8] sm:$0xff] %vm549, %v512
      %578 = vst.msk [vmem:[%s213 + $0xe0] sm:$0xff] %vm549, %v513
      %579 = vst.msk [vmem:[%s213 + $0xe8] sm:$0xff] %vm549, %v514
      %580 = vst.msk [vmem:[%s213 + $0xf0] sm:$0xff] %vm549, %v515
      %581 = vst.msk [vmem:[%s213 + $0xf8] sm:$0xff] %vm549, %v516
      %582 = vst.msk [vmem:[%s213 + $0x100] sm:$0xff] %vm549, %v517
      %583 = vst.msk [vmem:[%s213 + $0x108] sm:$0xff] %vm549, %v518
      %584 = vst.msk [vmem:[%s213 + $0x110] sm:$0xff] %vm549, %v519
      %585 = vst.msk [vmem:[%s213 + $0x118] sm:$0xff] %vm549, %v520
      %586 = vst.msk [vmem:[%s213 + $0x120] sm:$0xff] %vm549, %v521
      %587 = vst.msk [vmem:[%s213 + $0x128] sm:$0xff] %vm549, %v522
      %588 = vst.msk [vmem:[%s213 + $0x130] sm:$0xff] %vm549, %v523
      %589 = vst.msk [vmem:[%s213 + $0x138] sm:$0xff] %vm549, %v524
      %590 = vst.msk [vmem:[%s213 + $0x140] sm:$0xff] %vm549, %v525
      %591 = vst.msk [vmem:[%s213 + $0x148] sm:$0xff] %vm549, %v526
      %592 = vst.msk [vmem:[%s213 + $0x150] sm:$0xff] %vm549, %v527
      %593 = vst.msk [vmem:[%s213 + $0x158] sm:$0xff] %vm549, %v528
      %594 = vst.msk [vmem:[%s213 + $0x160] sm:$0xff] %vm549, %v529
      %595 = vst.msk [vmem:[%s213 + $0x168] sm:$0xff] %vm549, %v530
      %596 = vst.msk [vmem:[%s213 + $0x170] sm:$0xff] %vm549, %v531
      %597 = vst.msk [vmem:[%s213 + $0x178] sm:$0xff] %vm549, %v532
      %598 = vst.msk [vmem:[%s213 + $0x180] sm:$0xff] %vm549, %v533
      %599 = vst.msk [vmem:[%s213 + $0x188] sm:$0xff] %vm549, %v534
      %600 = vst.msk [vmem:[%s213 + $0x190] sm:$0xff] %vm549, %v535
      %601 = vst.msk [vmem:[%s213 + $0x198] sm:$0xff] %vm549, %v536
      %602 = vst.msk [vmem:[%s213 + $0x1a0] sm:$0xff] %vm549, %v537
      %603 = vst.msk [vmem:[%s213 + $0x1a8] sm:$0xff] %vm549, %v538
      %604 = vst.msk [vmem:[%s213 + $0x1b0] sm:$0xff] %vm549, %v539
      %605 = vst.msk [vmem:[%s213 + $0x1b8] sm:$0xff] %vm549, %v540
      %606 = vst.msk [vmem:[%s213 + $0x1c0] sm:$0xff] %vm549, %v541
      %607 = vst.msk [vmem:[%s213 + $0x1c8] sm:$0xff] %vm549, %v542
      %608 = vst.msk [vmem:[%s213 + $0x1d0] sm:$0xff] %vm549, %v543
      %609 = vst.msk [vmem:[%s213 + $0x1d8] sm:$0xff] %vm549, %v544
      %610 = vst.msk [vmem:[%s213 + $0x1e0] sm:$0xff] %vm549, %v545
      %611 = vst.msk [vmem:[%s213 + $0x1e8] sm:$0xff] %vm549, %v546
      %612 = vst.msk [vmem:[%s213 + $0x1f0] sm:$0xff] %vm549, %v547
      %613 = vst.msk [vmem:[%s213 + $0x1f8] sm:$0xff] %vm549, %v548
      %s614 = smul.u32 16, %s19
      %p615 = scmp.lt.s32.totalorder %s18, 1
      %s616 = scalar_select %p615, %s18, 1
      %p617 = scmp.lt.s32.totalorder %s614, 31
      %s618 = scalar_select %p617, %s614, 31
      %s619 = smul.addr %s618, 4
      %s620 = smul.addr %s616, 128
      %s621 = sadd.s32 %s619, %s620
      %s622 = smul.addr %s621, 8
      %s623 = scalar_lea.vmem %s3, %s622
      // Predicated region
      $region33: #{unet_up_forward.3} parent=31 // pred_check
        %p624 = pneg %p116
      $region34: #{unet_up_forward.3} parent=31 // pred_check_branch
        %626 = sbr.rel (%p624) target = $region36
      $region35: #{unet_up_forward.3} parent=31 // pred_region
        %s627 = smul.u32 16, %s19
      $region36: #{unet_up_forward.3} parent=31 // pred_fallthru
        _
    $region32: #{unet_up_forward.3} parent=5 // pred_fallthru
      _
    %p628 = scmp.le.s32.totalorder 2, %s9
    // Predicated region
    $region37: #{unet_up_forward.3} parent=5 // pred_check
      %p629 = pneg %p628
    $region38: #{unet_up_forward.3} parent=5 // pred_check_branch
      %631 = sbr.rel (%p629) target = $region40
    $region39: #{unet_up_forward.3} parent=5 // pred_region
      %s632 = ssub.s32 %s9, 2
      // Predicated region
      $region41: #{unet_up_forward.3} parent=39 // pred_check
        %p633 = pneg %p122
      $region42: #{unet_up_forward.3} parent=39 // pred_check_branch
        %635 = sbr.rel (%p633) target = $region44
      $region43: #{unet_up_forward.3} parent=39 // pred_region
        %s636 = smul.u32 16, %s21
        %p637 = scmp.lt.s32.totalorder %s20, 1
        %s638 = scalar_select %p637, %s20, 1
        %p639 = scmp.lt.s32.totalorder %s636, 31
        %s640 = scalar_select %p639, %s636, 31
        %s641 = smul.addr %s640, 4
        %s642 = smul.addr %s638, 128
        %s643 = sadd.s32 %s641, %s642
        %s644 = smul.addr %s643, 8
        %s645 = scalar_lea.vmem %s3, %s644
      $region44: #{unet_up_forward.3} parent=39 // pred_fallthru
        _
    $region40: #{unet_up_forward.3} parent=5 // pred_fallthru
      _
  $region6: #{unet_up_forward.3} parent=0 // loop_footer
    %s13 = sadd.s32 1, %s9
  $region7: #{unet_up_forward.3} parent=0 // loop_footer_branch
    %8 = sbr.rel target = $region3
  $region8: #{unet_up_forward.3} parent=0 // loop_exit
    _

// kernel: unet_up_forward.2
$region0: #{unet_up_forward.2}
  #allocation0 [shape = 'u32[]', space=smem, size = 0x4, offset = 0x4, fixed_abs, tag = 'smem constant byte address 0x4 - core index']
  #allocation1 [shape = 'u32[144,128]{1,0:T(1,128)}', space=vmem, size = 0x12000, scoped, tag = 'internal scratch']
  #allocation2 [shape = 'bf16[128,36]{1,0:T(16,128)(2,1)}', space=vmem, size = 0x8000, scoped, tag = 'scratch operand']
  %s0 = inlined_call_operand.vmem [shape: bf16[2,18,18,4], index: 0, kind: input, shape index: {}]
  %s1 = inlined_call_operand.vmem [shape: bf16[2,24,16], index: 1, kind: input, shape index: {}]
  %s2 = inlined_call_operand.vmem [shape: bf16[2,16,2,16,16], index: 2, kind: output, shape index: {0}]
  %s3 = inlined_call_operand.vmem [shape: f32[2,2,2,16], index: 3, kind: output, shape index: {1}]
  %4 = xla_tuple %s2, %s3
  %s5 = sld [smem:[#allocation0]]
  $region49: #{unet_up_forward.2} parent=0
    _
  %s7 = ssub.s32 1, %s5
  %s8 = scalar_select 0, %s7, %s5
  loop: start=0, step=1, limit=6
  $region2: #{unet_up_forward.2} parent=0 // loop_pre_header
    _
  $region3: #{unet_up_forward.2} parent=0 // loop_header
    %s10 = sphi 0, %s14
    %p11 = scmp.ge.s32.totalorder %s10, 6
    %s17 = sphi 0, %s29
    %s18 = sphi 0, %s25
    %s19 = sphi 0, %s17
    %s20 = sphi 0, %s18
    %s21 = sphi 0, %s19
    %s22 = sphi 0, %s20
    %s32 = sphi 0, %s34
    %s35 = sphi 0, %s32
    %s36 = sphi 0, %s35
    %s52 = sphi 0, %s36
    %s56 = sphi 0, %s56
    %s58 = sphi 0, %s56
    %s59 = sphi 0, %s58
    %s73 = sphi 0, %s59
    %s81 = sphi 0, %s83
    %s84 = sphi 0, %s81
    %s85 = sphi 0, %s84
    %s101 = sphi 0, %s85
    %s109 = sphi 0, %s111
    %s112 = sphi 0, %s109
    %s113 = sphi 0, %s112
    %s129 = sphi 0, %s113
  $region4: #{unet_up_forward.2} parent=0 // loop_header_branch
    %13 = sbr.rel (%p11) target = $region8
  $region5: #{unet_up_forward.2} parent=0 // loop_body
    %s15 = ssub.s32 %s10, 1
    %s16 = ssub.s32 %s10, 2
    %s23 = sadd.s32 1, %s18
    %p24 = scmp.ge.s32.totalorder %s23, 2
    %s25 = scalar_select %p24, 0, %s23
    %s26 = sadd.s32 1, %s17
    %s27 = scalar_select %p24, %s26, %s17
    %p28 = scmp.ge.s32.totalorder %s27, 2
    %s29 = scalar_select %p28, 0, %s27
    %s30 = ssub.s32 %s17, %s29
    %p31 = scmp.eq.s32.totalorder %s30, 0
    %s33 = sadd.s32 %s32, 1
    %s34 = scalar_select %p31, %s32, %s33
    %p37 = pneg %p31
    %p38 = scmp.eq.s32.totalorder %s10, 3
    %p39 = por %p37, %p38
    %p40 = scmp.ne.s32.totalorder %s32, %s35
    %p41 = scmp.eq.s32.totalorder %s10, 0
    %p42 = por %p40, %p41
    %p43 = scmp.ne.s32.totalorder %s32, %s35
    %p44 = scmp.eq.s32.totalorder %s15, 3
    %p45 = por %p43, %p44
    %p46 = scmp.ne.s32.totalorder %s35, %s36
    %p47 = scmp.eq.s32.totalorder %s15, 0
    %p48 = por %p46, %p47
    %p49 = scmp.ne.s32.totalorder %s35, %s36
    %p50 = scmp.eq.s32.totalorder %s16, 3
    %p51 = por %p49, %p50
    %p53 = scmp.ne.s32.totalorder %s36, %s52
    %p54 = scmp.eq.s32.totalorder %s16, 0
    %p55 = por %p53, %p54
    %s57 = sadd.s32 %s56, 1
    %p60 = scmp.eq.s32.totalorder %s10, 3
    %p61 = scmp.ne.s32.totalorder %s56, %s58
    %p62 = scmp.eq.s32.totalorder %s10, 0
    %p63 = por %p61, %p62
    %p64 = scmp.ne.s32.totalorder %s56, %s58
    %p65 = scmp.eq.s32.totalorder %s15, 3
    %p66 = por %p64, %p65
    %p67 = scmp.ne.s32.totalorder %s58, %s59
    %p68 = scmp.eq.s32.totalorder %s15, 0
    %p69 = por %p67, %p68
    %p70 = scmp.ne.s32.totalorder %s58, %s59
    %p71 = scmp.eq.s32.totalorder %s16, 3
    %p72 = por %p70, %p71
    %p74 = scmp.ne.s32.totalorder %s59, %s73
    %p75 = scmp.eq.s32.totalorder %s16, 0
    %p76 = por %p74, %p75
    %s77 = ssub.s32 %s17, %s29
    %s78 = ssub.s32 %s18, %s25
    %s79 = sor.u32 %s77, %s78
    %p80 = scmp.eq.s32.totalorder %s79, 0
    %s82 = sadd.s32 %s81, 1
    %s83 = scalar_select %p80, %s81, %s82
    %p86 = pneg %p80
    %p87 = scmp.eq.s32.totalorder %s10, 3
    %p88 = por %p86, %p87
    %p89 = scmp.ne.s32.totalorder %s81, %s84
    %p90 = scmp.eq.s32.totalorder %s10, 0
    %p91 = por %p89, %p90
    %p92 = scmp.ne.s32.totalorder %s81, %s84
    %p93 = scmp.eq.s32.totalorder %s15, 3
    %p94 = por %p92, %p93
    %p95 = scmp.ne.s32.totalorder %s84, %s85
    %p96 = scmp.eq.s32.totalorder %s15, 0
    %p97 = por %p95, %p96
    %p98 = scmp.ne.s32.totalorder %s84, %s85
    %p99 = scmp.eq.s32.totalorder %s16, 3
    %p100 = por %p98, %p99
    %p102 = scmp.ne.s32.totalorder %s85, %s101
    %p103 = scmp.eq.s32.totalorder %s16, 0
    %p104 = por %p102, %p103
    %s105 = ssub.s32 %s17, %s29
    %s106 = ssub.s32 %s18, %s25
    %s107 = sor.u32 %s105, %s106
    %p108 = scmp.eq.s32.totalorder %s107, 0
    %s110 = sadd.s32 %s109, 1
    %s111 = scalar_select %p108, %s109, %s110
    %p114 = pneg %p108
    %p115 = scmp.eq.s32.totalorder %s10, 3
    %p116 = por %p114, %p115
    %p117 = scmp.ne.s32.totalorder %s109, %s112
    %p118 = scmp.eq.s32.totalorder %s10, 0
    %p119 = por %p117, %p118
    %p120 = scmp.ne.s32.totalorder %s109, %s112
    %p121 = scmp.eq.s32.totalorder %s15, 3
    %p122 = por %p120, %p121
    %p123 = scmp.ne.s32.totalorder %s112, %s113
    %p124 = scmp.eq.s32.totalorder %s15, 0
    %p125 = por %p123, %p124
    %p126 = scmp.ne.s32.totalorder %s112, %s113
    %p127 = scmp.eq.s32.totalorder %s16, 3
    %p128 = por %p126, %p127
    %p130 = scmp.ne.s32.totalorder %s113, %s129
    %p131 = scmp.eq.s32.totalorder %s16, 0
    %p132 = por %p130, %p131
    %p133 = scmp.le.s32.totalorder 1, %s10
    %p134 = scmp.lt.s32.totalorder %s10, 5
    %p135 = pnand %p133, %p134
    %p136 = pneg %p135
    // Predicated region
    $region9: #{unet_up_forward.2} parent=5 // pred_check
      _
    $region10: #{unet_up_forward.2} parent=5 // pred_check_branch
      %138 = sbr.rel (%p135) target = $region12
    $region11: #{unet_up_forward.2} parent=5 // pred_region
      %s139 = ssub.s32 %s10, 1
      // Predicated region
      $region13: #{unet_up_forward.2} parent=11 // pred_check
        %p140 = pneg %p69
      $region14: #{unet_up_forward.2} parent=11 // pred_check_branch
        %142 = sbr.rel (%p140) target = $region16
      $region15: #{unet_up_forward.2} parent=11 // pred_region
        _
      $region16: #{unet_up_forward.2} parent=11 // pred_fallthru
        _
    $region12: #{unet_up_forward.2} parent=5 // pred_fallthru
      _
    %p143 = scmp.lt.s32.totalorder %s10, 4
    // Predicated region
    $region17: #{unet_up_forward.2} parent=5 // pred_check
      %p144 = pneg %p143
    $region18: #{unet_up_forward.2} parent=5 // pred_check_branch
      %146 = sbr.rel (%p144) target = $region20
    $region19: #{unet_up_forward.2} parent=5 // pred_region
      // Predicated region
      $region21: #{unet_up_forward.2} parent=19 // pred_check
        %p147 = pneg %p42
      $region22: #{unet_up_forward.2} parent=19 // pred_check_branch
        %149 = sbr.rel (%p147) target = $region24
      $region23: #{unet_up_forward.2} parent=19 // pred_region
        %p150 = scmp.lt.s32.totalorder %s17, 1
        %s151 = scalar_select %p150, %s17, 1
        %s152 = smul.addr %s151, 54
        %s153 = smul.addr %s152, 4
        %s154 = scalar_lea.vmem %s0, %s153
      $region24: #{unet_up_forward.2} parent=19 // pred_fallthru
        _
    $region20: #{unet_up_forward.2} parent=5 // pred_fallthru
      _
    %p155 = scmp.le.s32.totalorder 1, %s10
    %p156 = scmp.lt.s32.totalorder %s10, 5
    %p157 = pnand %p155, %p156
    %p158 = pneg %p157
    // Predicated region
    $region25: #{unet_up_forward.2} parent=5 // pred_check
      _
    $region26: #{unet_up_forward.2} parent=5 // pred_check_branch
      %160 = sbr.rel (%p157) target = $region28
    $region27: #{unet_up_forward.2} parent=5 // pred_region
      %s161 = ssub.s32 %s10, 1
      %p162 = scmp.lt.s32.totalorder %s19, 1
      %s163 = scalar_select %p162, %s19, 1
      %s164 = smul.addr %s163, 54
      %s165 = smul.addr %s164, 4
      %s166 = scalar_lea.vmem %s0, %s165
      %p167 = pneg %p48
      %p168 = pneg %p45
      %p169 = pneg %p69
      %p170 = pneg %p66
      %p171 = pneg %p97
      %p172 = pneg %p94
      %s173 = smul.u32 8, %s20
      %p174 = scmp.lt.s32.totalorder %s19, 1
      %s175 = scalar_select %p174, %s19, 1
      %p176 = scmp.lt.s32.totalorder %s173, 15
      %s177 = scalar_select %p176, %s173, 15
      %s178 = smul.addr %s177, 4
      %s179 = smul.addr %s175, 64
      %s180 = sadd.s32 %s178, %s179
      %s181 = smul.addr %s180, 4
      %s182 = scalar_lea.vmem %s2, %s181
      %p183 = pneg %p125
      %p184 = pneg %p122
      %p185 = scmp.lt.s32.totalorder %s19, 1
      %s186 = scalar_select %p185, %s19, 1
      %p187 = scmp.lt.s32.totalorder %s20, 1
      %s188 = scalar_select %p187, %s20, 1
      %s189 = smul.addr %s186, 2
      %s190 = sadd.s32 %s188, %s189
      %s191 = smul.addr %s190, 2
      %s192 = scalar_lea.vmem %s3, %s191
      %p193 = scmp.lt.s32.totalorder %s19, 1
      %s194 = scalar_select %p193, %s19, 1
      %s195 = smul.addr %s194, 54
      %s196 = smul.addr %s195, 4
      %s197 = scalar_lea.vmem %s0, %s196
      %s198 = smul.u32 8, %s20
      %p199 = scmp.lt.s32.totalorder %s19, 1
      %s200 = scalar_select %p199, %s19, 1
      %p201 = scmp.lt.s32.totalorder %s198, 15
      %s202 = scalar_select %p201, %s198, 15
      %s203 = smul.addr %s202, 4
      %s204 = smul.addr %s200, 64
      %s205 = sadd.s32 %s203, %s204
      %s206 = smul.addr %s205, 4
      %s207 = scalar_lea.vmem %s2, %s206
      %s208 = smul.u32 8, %s20
      %p209 = scmp.lt.s32.totalorder %s19, 1
      %s210 = scalar_select %p209, %s19, 1
      %p211 = scmp.lt.s32.totalorder %s20, 1
      %s212 = scalar_select %p211, %s20, 1
      %s213 = smul.addr %s210, 2
      %s214 = sadd.s32 %s212, %s213
      %s215 = smul.addr %s214, 2
      %s216 = scalar_lea.vmem %s3, %s215
      %s218 = smul.u32 %s20, 8
      %s219 = smul.u32 %s218, 3
      %s220 = smul.addr %s219, 4
      %s221 = scalar_lea.vmem %s197, %s220
      %v222 = vld [vmem:[%s221] sm:$0xf]
      %v223 = vld [vmem:[%s221 + $0x4] sm:$0xf]
      %v224 = vld [vmem:[%s221 + $0xc] sm:$0xf]
      %v225 = vld [vmem:[%s221 + $0x10] sm:$0xf]
      %v226 = vld [vmem:[%s221 + $0x18] sm:$0xf]
      %v227 = vld [vmem:[%s221 + $0x1c] sm:$0xf]
      %v228 = vld [vmem:[%s221 + $0x24] sm:$0xf]
      %v229 = vld [vmem:[%s221 + $0x28] sm:$0xf]
      %v230 = vld [vmem:[%s221 + $0x30] sm:$0xf]
      %v231 = vld [vmem:[%s221 + $0x34] sm:$0xf]
      %v232 = vld [vmem:[%s221 + $0x3c] sm:$0xf]
      %v233 = vld [vmem:[%s221 + $0x40] sm:$0xf]
      %v234 = vld [vmem:[%s221 + $0x48] sm:$0xf]
      %v235 = vld [vmem:[%s221 + $0x4c] sm:$0xf]
      %v236 = vld [vmem:[%s221 + $0x54] sm:$0xf]
      %v237 = vld [vmem:[%s221 + $0x58] sm:$0xf]
      %v254 = vunpack.c.l.b16 %v222
      %v255 = vunpack.c.l.b16 %v223
      %v256 = vunpack.c.l.b16 %v224
      %v257 = vunpack.c.l.b16 %v225
      %v258 = vunpack.c.l.b16 %v226
      %v259 = vunpack.c.l.b16 %v227
      %v260 = vunpack.c.l.b16 %v228
      %v261 = vunpack.c.l.b16 %v229
      %v262 = vunpack.c.l.b16 %v230
      %v263 = vunpack.c.l.b16 %v231
      %v264 = vunpack.c.l.b16 %v232
      %v265 = vunpack.c.l.b16 %v233
      %v266 = vunpack.c.l.b16 %v234
      %v267 = vunpack.c.l.b16 %v235
      %v268 = vunpack.c.l.b16 %v236
      %v269 = vunpack.c.l.b16 %v237
      %v270 = vpack.c.b16 %v255, %v254
      %v271 = vpack.c.b16 %v257, %v256
      %v272 = vpack.c.b16 %v259, %v258
      %v273 = vpack.c.b16 %v261, %v260
      %v274 = vpack.c.b16 %v263, %v262
      %v275 = vpack.c.b16 %v265, %v264
      %v276 = vpack.c.b16 %v267, %v266
      %v277 = vpack.c.b16 %v269, %v268
      %vm286 = vcmask 31744
      %287 = vst.msk [vmem:[#allocation2] sm:$0xff] %vm286, %v270
      %288 = vst.msk [vmem:[#allocation2 + $0x8] sm:$0xff] %vm286, %v271
      %289 = vst.msk [vmem:[#allocation2 + $0x10] sm:$0xff] %vm286, %v272
      %290 = vst.msk [vmem:[#allocation2 + $0x18] sm:$0xff] %vm286, %v273
      %291 = vst.msk [vmem:[#allocation2 + $0x20] sm:$0xff] %vm286, %v274
      %292 = vst.msk [vmem:[#allocation2 + $0x28] sm:$0xff] %vm286, %v275
      %293 = vst.msk [vmem:[#allocation2 + $0x30] sm:$0xff] %vm286, %v276
      %294 = vst.msk [vmem:[#allocation2 + $0x38] sm:$0xff] %vm286, %v277
      %v295 = vld [vmem:[%s221] sm:$0xf]
      %v296 = vld [vmem:[%s221 + $0x4] sm:$0xf]
      %v297 = vld [vmem:[%s221 + $0x8] sm:$0x1]
      %v298 = vld [vmem:[%s221 + $0xc] sm:$0xf]
      %v299 = vld [vmem:[%s221 + $0x10] sm:$0xf]
      %v300 = vld [vmem:[%s221 + $0x14] sm:$0x1]
      %v301 = vld [vmem:[%s221 + $0x18] sm:$0xf]
      %v302 = vld [vmem:[%s221 + $0x1c] sm:$0xf]
      %v303 = vld [vmem:[%s221 + $0x20] sm:$0x1]
      %v304 = vld [vmem:[%s221 + $0x24] sm:$0xf]
      %v305 = vld [vmem:[%s221 + $0x28] sm:$0xf]
      %v306 = vld [vmem:[%s221 + $0x2c] sm:$0x1]
      %v307 = vld [vmem:[%s221 + $0x30] sm:$0xf]
      %v308 = vld [vmem:[%s221 + $0x34] sm:$0xf]
      %v309 = vld [vmem:[%s221 + $0x38] sm:$0x1]
      %v310 = vld [vmem:[%s221 + $0x3c] sm:$0xf]
      %v311 = vld [vmem:[%s221 + $0x40] sm:$0xf]
      %v312 = vld [vmem:[%s221 + $0x44] sm:$0x1]
      %v313 = vld [vmem:[%s221 + $0x48] sm:$0xf]
      %v314 = vld [vmem:[%s221 + $0x4c] sm:$0xf]
      %v315 = vld [vmem:[%s221 + $0x50] sm:$0x1]
      %v316 = vld [vmem:[%s221 + $0x54] sm:$0xf]
      %v317 = vld [vmem:[%s221 + $0x58] sm:$0xf]
      %v318 = vld [vmem:[%s221 + $0x5c] sm:$0x1]
      %vm319 = vsmask.f32 3328
      %vm320 = vsmask.f32 7440
      %vm321 = vmor %vm319, %vm320
      %v323 = vshrl.u32 %v295, 16
      %v325 = vrot.slane %v323, 4
      %v326 = vshll.u32 %v295, 16
      %v328 = vrot.slane %v326, 5
      %v329 = vor.u32 %v325, %v328
      %v330 = vrot.slane %v329, 4
      %v332 = vshll.u32 %v296, 16
      %v334 = vrot.slane %v332, 5
      %v335 = vsel %vm321, %v330, %v334
      %v336 = vshrl.u32 %v296, 16
      %v338 = vrot.slane %v336, 4
      %v339 = vor.u32 %v338, %v334
      %v340 = vrot.slane %v339, 4
      %v342 = vshll.u32 %v297, 16
      %v344 = vrot.slane %v342, 5
      %v345 = vsel %vm321, %v340, %v344
      %v347 = vshrl.u32 %v298, 16
      %v349 = vrot.slane %v347, 4
      %v350 = vshll.u32 %v298, 16
      %v352 = vrot.slane %v350, 5
      %v353 = vor.u32 %v349, %v352
      %v354 = vrot.slane %v353, 4
      %v356 = vshll.u32 %v299, 16
      %v358 = vrot.slane %v356, 5
      %v359 = vsel %vm321, %v354, %v358
      %v360 = vshrl.u32 %v299, 16
      %v362 = vrot.slane %v360, 4
      %v363 = vor.u32 %v362, %v358
      %v364 = vrot.slane %v363, 4
      %v366 = vshll.u32 %v300, 16
      %v368 = vrot.slane %v366, 5
      %v369 = vsel %vm321, %v364, %v368
      %v371 = vshrl.u32 %v301, 16
      %v373 = vrot.slane %v371, 4
      %v374 = vshll.u32 %v301, 16
      %v376 = vrot.slane %v374, 5
      %v377 = vor.u32 %v373, %v376
      %v378 = vrot.slane %v377, 4
      %v380 = vshll.u32 %v302, 16
      %v382 = vrot.slane %v380, 5
      %v383 = vsel %vm321, %v378, %v382
      %v384 = vshrl.u32 %v302, 16
      %v386 = vrot.slane %v384, 4
      %v387 = vor.u32 %v386, %v382
      %v388 = vrot.slane %v387, 4
      %v390 = vshll.u32 %v303, 16
      %v392 = vrot.slane %v390, 5
      %v393 = vsel %vm321, %v388, %v392
      %v395 = vshrl.u32 %v304, 16
      %v397 = vrot.slane %v395, 4
      %v398 = vshll.u32 %v304, 16
      %v400 = vrot.slane %v398, 5
      %v401 = vor.u32 %v397, %v400
      %v402 = vrot.slane %v401, 4
      %v404 = vshll.u32 %v305, 16
      %v406 = vrot.slane %v404, 5
      %v407 = vsel %vm321, %v402, %v406
      %v408 = vshrl.u32 %v305, 16
      %v410 = vrot.slane %v408, 4
      %v411 = vor.u32 %v410, %v406
      %v412 = vrot.slane %v411, 4
      %v414 = vshll.u32 %v306, 16
      %v416 = vrot.slane %v414, 5
      %v417 = vsel %vm321, %v412, %v416
      %v419 = vshrl.u32 %v307, 16
      %v421 = vrot.slane %v419, 4
      %v422 = vshll.u32 %v307, 16
      %v424 = vrot.slane %v422, 5
      %v425 = vor.u32 %v421, %v424
      %v426 = vrot.slane %v425, 4
      %v428 = vshll.u32 %v308, 16
      %v430 = vrot.slane %v428, 5
      %v431 = vsel %vm321, %v426, %v430
      %v432 = vshrl.u32 %v308, 16
      %v434 = vrot.slane %v432, 4
      %v435 = vor.u32 %v434, %v430
      %v436 = vrot.slane %v435, 4
      %v438 = vshll.u32 %v309, 16
      %v440 = vrot.slane %v438, 5
      %v441 = vsel %vm321, %v436, %v440
      %v443 = vshrl.u32 %v310, 16
      %v445 = vrot.slane %v443, 4
      %v446 = vshll.u32 %v310, 16
      %v448 = vrot.slane %v446, 5
      %v449 = vor.u32 %v445, %v448
      %v450 = vrot.slane %v449, 4
      %v452 = vshll.u32 %v311, 16
      %v454 = vrot.slane %v452, 5
      %v455 = vsel %vm321, %v450, %v454
      %v456 = vshrl.u32 %v311, 16
      %v458 = vrot.slane %v456, 4
      %v459 = vor.u32 %v458, %v454
      %v460 = vrot.slane %v459, 4
      %v462 = vshll.u32 %v312, 16
      %v464 = vrot.slane %v462, 5
      %v465 = vsel %vm321, %v460, %v464
      %v467 = vshrl.u32 %v313, 16
      %v469 = vrot.slane %v467, 4
      %v470 = vshll.u32 %v313, 16
      %v472 = vrot.slane %v470, 5
      %v473 = vor.u32 %v469, %v472
      %v474 = vrot.slane %v473, 4
      %v476 = vshll.u32 %v314, 16
      %v478 = vrot.slane %v476, 5
      %v479 = vsel %vm321, %v474, %v478
      %v480 = vshrl.u32 %v314, 16
      %v482 = vrot.slane %v480, 4
      %v483 = vor.u32 %v482, %v478
      %v484 = vrot.slane %v483, 4
      %v486 = vshll.u32 %v315, 16
      %v488 = vrot.slane %v486, 5
      %v489 = vsel %vm321, %v484, %v488
      %v491 = vshrl.u32 %v316, 16
      %v493 = vrot.slane %v491, 4
      %v494 = vshll.u32 %v316, 16
      %v496 = vrot.slane %v494, 5
      %v497 = vor.u32 %v493, %v496
      %v498 = vrot.slane %v497, 4
      %v500 = vshll.u32 %v317, 16
      %v502 = vrot.slane %v500, 5
      %v503 = vsel %vm321, %v498, %v502
      %v504 = vshrl.u32 %v317, 16
      %v506 = vrot.slane %v504, 4
      %v507 = vor.u32 %v506, %v502
      %v508 = vrot.slane %v507, 4
      %v510 = vshll.u32 %v318, 16
      %v512 = vrot.slane %v510, 5
      %v513 = vsel %vm321, %v508, %v512
      %v514 = vunpack.c.l.b16 %v335
      %v515 = vunpack.c.l.b16 %v345
      %v516 = vunpack.c.l.b16 %v359
      %v517 = vunpack.c.l.b16 %v369
      %v518 = vunpack.c.l.b16 %v383
      %v519 = vunpack.c.l.b16 %v393
      %v520 = vunpack.c.l.b16 %v407
      %v521 = vunpack.c.l.b16 %v417
      %v522 = vunpack.c.l.b16 %v431
      %v523 = vunpack.c.l.b16 %v441
      %v524 = vunpack.c.l.b16 %v455
      %v525 = vunpack.c.l.b16 %v465
      %v526 = vunpack.c.l.b16 %v479
      %v527 = vunpack.c.l.b16 %v489
      %v528 = vunpack.c.l.b16 %v503
      %v529 = vunpack.c.l.b16 %v513
      %v530 = vpack.c.b16 %v515, %v514
      %v531 = vpack.c.b16 %v517, %v516
      %v532 = vpack.c.b16 %v519, %v518
      %v533 = vpack.c.b16 %v521, %v520
      %v534 = vpack.c.b16 %v523, %v522
      %v535 = vpack.c.b16 %v525, %v524
      %v536 = vpack.c.b16 %v527, %v526
      %v537 = vpack.c.b16 %v529, %v528
      %538 = vrot.lane.b32.xlu0 %v530, 4
      %v539 = vpop.permute.xlu0 %538
      %540 = vrot.lane.b32.xlu0 %v531, 4
      %v541 = vpop.permute.xlu0 %540
      %542 = vrot.lane.b32.xlu0 %v532, 4
      %v543 = vpop.permute.xlu0 %542
      %544 = vrot.lane.b32.xlu0 %v533, 4
      %v545 = vpop.permute.xlu0 %544
      %546 = vrot.lane.b32.xlu0 %v534, 4
      %v547 = vpop.permute.xlu0 %546
      %548 = vrot.lane.b32.xlu0 %v535, 4
      %v549 = vpop.permute.xlu0 %548
      %550 = vrot.lane.b32.xlu0 %v536, 4
      %v551 = vpop.permute.xlu0 %550
      %552 = vrot.lane.b32.xlu0 %v537, 4
      %v553 = vpop.permute.xlu0 %552
      %vm562 = vcmask 64544
      %563 = vst.msk [vmem:[#allocation2] sm:$0xff] %vm562, %v539
      %564 = vst.msk [vmem:[#allocation2 + $0x8] sm:$0xff] %vm562, %v541
      %565 = vst.msk [vmem:[#allocation2 + $0x10] sm:$0xff] %vm562, %v543
      %566 = vst.msk [vmem:[#allocation2 + $0x18] sm:$0xff] %vm562, %v545
      %567 = vst.msk [vmem:[#allocation2 + $0x20] sm:$0xff] %vm562, %v547
      %568 = vst.msk [vmem:[#allocation2 + $0x28] sm:$0xff] %vm562, %v549
      %569 = vst.msk [vmem:[#allocation2 + $0x30] sm:$0xff] %vm562, %v551
      %570 = vst.msk [vmem:[#allocation2 + $0x38] sm:$0xff] %vm562, %v553
      %v571 = vld [vmem:[%s221] sm:$0xe]
      %v572 = vld [vmem:[%s221 + $0x4] sm:$0xf]
      %v573 = vld [vmem:[%s221 + $0x8] sm:$0x1]
      %v574 = vld [vmem:[%s221 + $0xc] sm:$0xe]
      %v575 = vld [vmem:[%s221 + $0x10] sm:$0xf]
      %v576 = vld [vmem:[%s221 + $0x14] sm:$0x1]
      %v577 = vld [vmem:[%s221 + $0x18] sm:$0xe]
      %v578 = vld [vmem:[%s221 + $0x1c] sm:$0xf]
      %v579 = vld [vmem:[%s221 + $0x20] sm:$0x1]
      %v580 = vld [vmem:[%s221 + $0x24] sm:$0xe]
      %v581 = vld [vmem:[%s221 + $0x28] sm:$0xf]
      %v582 = vld [vmem:[%s221 + $0x2c] sm:$0x1]
      %v583 = vld [vmem:[%s221 + $0x30] sm:$0xe]
      %v584 = vld [vmem:[%s221 + $0x34] sm:$0xf]
      %v585 = vld [vmem:[%s221 + $0x38] sm:$0x1]
      %v586 = vld [vmem:[%s221 + $0x3c] sm:$0xe]
      %v587 = vld [vmem:[%s221 + $0x40] sm:$0xf]
      %v588 = vld [vmem:[%s221 + $0x44] sm:$0x1]
      %v589 = vld [vmem:[%s221 + $0x48] sm:$0xe]
      %v590 = vld [vmem:[%s221 + $0x4c] sm:$0xf]
      %v591 = vld [vmem:[%s221 + $0x50] sm:$0x1]
      %v592 = vld [vmem:[%s221 + $0x54] sm:$0xe]
      %v593 = vld [vmem:[%s221 + $0x58] sm:$0xf]
      %v594 = vld [vmem:[%s221 + $0x5c] sm:$0x1]
      %vm619 = vcmask 1042432
      %vm620 = vcmask 1046532
      %vm621 = vmor %vm619, %vm620
      %v622 = vrot.slane %v571, 5
      %v623 = vrot.slane %v622, 4
      %v624 = vrot.slane %v572, 5
      %v625 = vsel %vm621, %v623, %v624
      %v626 = vrot.slane %v624, 4
      %v627 = vrot.slane %v573, 5
      %v628 = vsel %vm621, %v626, %v627
      %v629 = vrot.slane %v574, 5
      %v630 = vrot.slane %v629, 4
      %v631 = vrot.slane %v575, 5
      %v632 = vsel %vm621, %v630, %v631
      %v633 = vrot.slane %v631, 4
      %v634 = vrot.slane %v576, 5
      %v635 = vsel %vm621, %v633, %v634
      %v636 = vrot.slane %v577, 5
      %v637 = vrot.slane %v636, 4
      %v638 = vrot.slane %v578, 5
      %v639 = vsel %vm621, %v637, %v638
      %v640 = vrot.slane %v638, 4
      %v641 = vrot.slane %v579, 5
      %v642 = vsel %vm621, %v640, %v641
      %v643 = vrot.slane %v580, 5
      %v644 = vrot.slane %v643, 4
      %v645 = vrot.slane %v581, 5
      %v646 = vsel %vm621, %v644, %v645
      %v647 = vrot.slane %v645, 4
      %v648 = vrot.slane %v582, 5
      %v649 = vsel %vm621, %v647, %v648
      %v650 = vrot.slane %v583, 5
      %v651 = vrot.slane %v650, 4
      %v652 = vrot.slane %v584, 5
      %v653 = vsel %vm621, %v651, %v652
      %v654 = vrot.slane %v652, 4
      %v655 = vrot.slane %v585, 5
      %v656 = vsel %vm621, %v654, %v655
      %v657 = vrot.slane %v586, 5
      %v658 = vrot.slane %v657, 4
      %v659 = vrot.slane %v587, 5
      %v660 = vsel %vm621, %v658, %v659
      %v661 = vrot.slane %v659, 4
      %v662 = vrot.slane %v588, 5
      %v663 = vsel %vm621, %v661, %v662
      %v664 = vrot.slane %v589, 5
      %v665 = vrot.slane %v664, 4
      %v666 = vrot.slane %v590, 5
      %v667 = vsel %vm621, %v665, %v666
      %v668 = vrot.slane %v666, 4
      %v669 = vrot.slane %v591, 5
      %v670 = vsel %vm621, %v668, %v669
      %v671 = vrot.slane %v592, 5
      %v672 = vrot.slane %v671, 4
      %v673 = vrot.slane %v593, 5
      %v674 = vsel %vm621, %v672, %v673
      %v675 = vrot.slane %v673, 4
      %v676 = vrot.slane %v594, 5
      %v677 = vsel %vm621, %v675, %v676
      %v678 = vunpack.c.l.b16 %v625
      %v679 = vunpack.c.l.b16 %v628
      %v680 = vunpack.c.l.b16 %v632
      %v681 = vunpack.c.l.b16 %v635
      %v682 = vunpack.c.l.b16 %v639
      %v683 = vunpack.c.l.b16 %v642
      %v684 = vunpack.c.l.b16 %v646
      %v685 = vunpack.c.l.b16 %v649
      %v686 = vunpack.c.l.b16 %v653
      %v687 = vunpack.c.l.b16 %v656
      %v688 = vunpack.c.l.b16 %v660
      %v689 = vunpack.c.l.b16 %v663
      %v690 = vunpack.c.l.b16 %v667
      %v691 = vunpack.c.l.b16 %v670
      %v692 = vunpack.c.l.b16 %v674
      %v693 = vunpack.c.l.b16 %v677
      %v694 = vpack.c.b16 %v679, %v678
      %v695 = vpack.c.b16 %v681, %v680
      %v696 = vpack.c.b16 %v683, %v682
      %v697 = vpack.c.b16 %v685, %v684
      %v698 = vpack.c.b16 %v687, %v686
      %v699 = vpack.c.b16 %v689, %v688
      %v700 = vpack.c.b16 %v691, %v690
      %v701 = vpack.c.b16 %v693, %v692
      %702 = vrot.lane.b32.xlu0 %v694, 8
      %v703 = vpop.permute.xlu0 %702
      %704 = vrot.lane.b32.xlu0 %v695, 8
      %v705 = vpop.permute.xlu0 %704
      %706 = vrot.lane.b32.xlu0 %v696, 8
      %v707 = vpop.permute.xlu0 %706
      %708 = vrot.lane.b32.xlu0 %v697, 8
      %v709 = vpop.permute.xlu0 %708
      %710 = vrot.lane.b32.xlu0 %v698, 8
      %v711 = vpop.permute.xlu0 %710
      %712 = vrot.lane.b32.xlu0 %v699, 8
      %v713 = vpop.permute.xlu0 %712
      %714 = vrot.lane.b32.xlu0 %v700, 8
      %v715 = vpop.permute.xlu0 %714
      %716 = vrot.lane.b32.xlu0 %v701, 8
      %v717 = vpop.permute.xlu0 %716
      %vm726 = vcmask 97344
      %727 = vst.msk [vmem:[#allocation2] sm:$0xff] %vm726, %v703
      %728 = vst.msk [vmem:[#allocation2 + $0x8] sm:$0xff] %vm726, %v705
      %729 = vst.msk [vmem:[#allocation2 + $0x10] sm:$0xff] %vm726, %v707
      %730 = vst.msk [vmem:[#allocation2 + $0x18] sm:$0xff] %vm726, %v709
      %731 = vst.msk [vmem:[#allocation2 + $0x20] sm:$0xff] %vm726, %v711
      %732 = vst.msk [vmem:[#allocation2 + $0x28] sm:$0xff] %vm726, %v713
      %733 = vst.msk [vmem:[#allocation2 + $0x30] sm:$0xff] %vm726, %v715
      %734 = vst.msk [vmem:[#allocation2 + $0x38] sm:$0xff] %vm726, %v717
      %s735 = sadd.s32 %s218, 1
      %s736 = smul.u32 %s735, 3
      %s737 = smul.addr %s736, 4
      %s738 = scalar_lea.vmem %s197, %s737
      %v739 = vld [vmem:[%s738] sm:$0xf]
      %v740 = vld [vmem:[%s738 + $0x4] sm:$0xf]
      %v741 = vld [vmem:[%s738 + $0xc] sm:$0xf]
      %v742 = vld [vmem:[%s738 + $0x10] sm:$0xf]
      %v743 = vld [vmem:[%s738 + $0x18] sm:$0xf]
      %v744 = vld [vmem:[%s738 + $0x1c] sm:$0xf]
      %v745 = vld [vmem:[%s738 + $0x24] sm:$0xf]
      %v746 = vld [vmem:[%s738 + $0x28] sm:$0xf]
      %v747 = vld [vmem:[%s738 + $0x30] sm:$0xf]
      %v748 = vld [vmem:[%s738 + $0x34] sm:$0xf]
      %v749 = vld [vmem:[%s738 + $0x3c] sm:$0xf]
      %v750 = vld [vmem:[%s738 + $0x40] sm:$0xf]
      %v751 = vld [vmem:[%s738 + $0x48] sm:$0xf]
      %v752 = vld [vmem:[%s738 + $0x4c] sm:$0xf]
      %v753 = vld [vmem:[%s738 + $0x54] sm:$0xf]
      %v754 = vld [vmem:[%s738 + $0x58] sm:$0xf]
      %v771 = vunpack.c.l.b16 %v739
      %v772 = vunpack.c.l.b16 %v740
      %v773 = vunpack.c.l.b16 %v741
      %v774 = vunpack.c.l.b16 %v742
      %v775 = vunpack.c.l.b16 %v743
      %v776 = vunpack.c.l.b16 %v744
      %v777 = vunpack.c.l.b16 %v745
      %v778 = vunpack.c.l.b16 %v746
      %v779 = vunpack.c.l.b16 %v747
      %v780 = vunpack.c.l.b16 %v748
      %v781 = vunpack.c.l.b16 %v749
      %v782 = vunpack.c.l.b16 %v750
      %v783 = vunpack.c.l.b16 %v751
      %v784 = vunpack.c.l.b16 %v752
      %v785 = vunpack.c.l.b16 %v753
      %v786 = vunpack.c.l.b16 %v754
      %v787 = vpack.c.b16 %v772, %v771
      %v788 = vpack.c.b16 %v774, %v773
      %v789 = vpack.c.b16 %v776, %v775
      %v790 = vpack.c.b16 %v778, %v777
      %v791 = vpack.c.b16 %v780, %v779
      %v792 = vpack.c.b16 %v782, %v781
      %v793 = vpack.c.b16 %v784, %v783
      %v794 = vpack.c.b16 %v786, %v785
      %795 = vrot.lane.b32.xlu0 %v787, 12
      %v796 = vpop.permute.xlu0 %795
      %797 = vrot.lane.b32.xlu0 %v788, 12
      %v798 = vpop.permute.xlu0 %797
      %799 = vrot.lane.b32.xlu0 %v789, 12
      %v800 = vpop.permute.xlu0 %799
      %801 = vrot.lane.b32.xlu0 %v790, 12
      %v802 = vpop.permute.xlu0 %801
      %803 = vrot.lane.b32.xlu0 %v791, 12
      %v804 = vpop.permute.xlu0 %803
      %805 = vrot.lane.b32.xlu0 %v792, 12
      %v806 = vpop.permute.xlu0 %805
      %807 = vrot.lane.b32.xlu0 %v793, 12
      %v808 = vpop.permute.xlu0 %807
      %809 = vrot.lane.b32.xlu0 %v794, 12
      %v810 = vpop.permute.xlu0 %809
      %vm819 = vcmask 130144
      %820 = vst.msk [vmem:[#allocation2] sm:$0xff] %vm819, %v796
      %821 = vst.msk [vmem:[#allocation2 + $0x8] sm:$0xff] %vm819, %v798
      %822 = vst.msk [vmem:[#allocation2 + $0x10] sm:$0xff] %vm819, %v800
      %823 = vst.msk [vmem:[#allocation2 + $0x18] sm:$0xff] %vm819, %v802
      %824 = vst.msk [vmem:[#allocation2 + $0x20] sm:$0xff] %vm819, %v804
      %825 = vst.msk [vmem:[#allocation2 + $0x28] sm:$0xff] %vm819, %v806
      %826 = vst.msk [vmem:[#allocation2 + $0x30] sm:$0xff] %vm819, %v808
      %827 = vst.msk [vmem:[#allocation2 + $0x38] sm:$0xff] %vm819, %v810
      %v828 = vld [vmem:[%s738] sm:$0xf]
      %v829 = vld [vmem:[%s738 + $0x4] sm:$0xf]
      %v830 = vld [vmem:[%s738 + $0x8] sm:$0x1]
      %v831 = vld [vmem:[%s738 + $0xc] sm:$0xf]
      %v832 = vld [vmem:[%s738 + $0x10] sm:$0xf]
      %v833 = vld [vmem:[%s738 + $0x14] sm:$0x1]
      %v834 = vld [vmem:[%s738 + $0x18] sm:$0xf]
      %v835 = vld [vmem:[%s738 + $0x1c] sm:$0xf]
      %v836 = vld [vmem:[%s738 + $0x20] sm:$0x1]
      %v837 = vld [vmem:[%s738 + $0x24] sm:$0xf]
      %v838 = vld [vmem:[%s738 + $0x28] sm:$0xf]
      %v839 = vld [vmem:[%s738 + $0x2c] sm:$0x1]
      %v840 = vld [vmem:[%s738 + $0x30] sm:$0xf]
      %v841 = vld [vmem:[%s738 + $0x34] sm:$0xf]
      %v842 = vld [vmem:[%s738 + $0x38] sm:$0x1]
      %v843 = vld [vmem:[%s738 + $0x3c] sm:$0xf]
      %v844 = vld [vmem:[%s738 + $0x40] sm:$0xf]
      %v845 = vld [vmem:[%s738 + $0x44] sm:$0x1]
      %v846 = vld [vmem:[%s738 + $0x48] sm:$0xf]
      %v847 = vld [vmem:[%s738 + $0x4c] sm:$0xf]
      %v848 = vld [vmem:[%s738 + $0x50] sm:$0x1]
      %v849 = vld [vmem:[%s738 + $0x54] sm:$0xf]
      %v850 = vld [vmem:[%s738 + $0x58] sm:$0xf]
      %v851 = vld [vmem:[%s738 + $0x5c] sm:$0x1]
      %v853 = vshrl.u32 %v828, 16
      %v855 = vrot.slane %v853, 4
      %v856 = vshll.u32 %v828, 16
      %v858 = vrot.slane %v856, 5
      %v859 = vor.u32 %v855, %v858
      %v860 = vrot.slane %v859, 4
      %v862 = vshll.u32 %v829, 16
      %v864 = vrot.slane %v862, 5
      %v865 = vsel %vm321, %v860, %v864
      %v866 = vshrl.u32 %v829, 16
      %v868 = vrot.slane %v866, 4
      %v869 = vor.u32 %v868, %v864
      %v870 = vrot.slane %v869, 4
      %v872 = vshll.u32 %v830, 16
      %v874 = vrot.slane %v872, 5
      %v875 = vsel %vm321, %v870, %v874
      %v877 = vshrl.u32 %v831, 16
      %v879 = vrot.slane %v877, 4
      %v880 = vshll.u32 %v831, 16
      %v882 = vrot.slane %v880, 5
      %v883 = vor.u32 %v879, %v882
      %v884 = vrot.slane %v883, 4
      %v886 = vshll.u32 %v832, 16
      %v888 = vrot.slane %v886, 5
      %v889 = vsel %vm321, %v884, %v888
      %v890 = vshrl.u32 %v832, 16
      %v892 = vrot.slane %v890, 4
      %v893 = vor.u32 %v892, %v888
      %v894 = vrot.slane %v893, 4
      %v896 = vshll.u32 %v833, 16
      %v898 = vrot.slane %v896, 5
      %v899 = vsel %vm321, %v894, %v898
      %v901 = vshrl.u32 %v834, 16
      %v903 = vrot.slane %v901, 4
      %v904 = vshll.u32 %v834, 16
      %v906 = vrot.slane %v904, 5
      %v907 = vor.u32 %v903, %v906
      %v908 = vrot.slane %v907, 4
      %v910 = vshll.u32 %v835, 16
      %v912 = vrot.slane %v910, 5
      %v913 = vsel %vm321, %v908, %v912
      %v914 = vshrl.u32 %v835, 16
      %v916 = vrot.slane %v914, 4
      %v917 = vor.u32 %v916, %v912
      %v918 = vrot.slane %v917, 4
      %v920 = vshll.u32 %v836, 16
      %v922 = vrot.slane %v920, 5
      %v923 = vsel %vm321, %v918, %v922
      %v925 = vshrl.u32 %v837, 16
      %v927 = vrot.slane %v925, 4
      %v928 = vshll.u32 %v837, 16
      %v930 = vrot.slane %v928, 5
      %v931 = vor.u32 %v927, %v930
      %v932 = vrot.slane %v931, 4
      %v934 = vshll.u32 %v838, 16
      %v936 = vrot.slane %v934, 5
      %v937 = vsel %vm321, %v932, %v936
      %v938 = vshrl.u32 %v838, 16
      %v940 = vrot.slane %v938, 4
      %v941 = vor.u32 %v940, %v936
      %v942 = vrot.slane %v941, 4
      %v944 = vshll.u32 %v839, 16
      %v946 = vrot.slane %v944, 5
      %v947 = vsel %vm321, %v942, %v946
      %v949 = vshrl.u32 %v840, 16
      %v951 = vrot.slane %v949, 4
      %v952 = vshll.u32 %v840, 16
      %v954 = vrot.slane %v952, 5
      %v955 = vor.u32 %v951, %v954
      %v956 = vrot.slane %v955, 4
      %v958 = vshll.u32 %v841, 16
      %v960 = vrot.slane %v958, 5
      %v961 = vsel %vm321, %v956, %v960
      %v962 = vshrl.u32 %v841, 16
      %v964 = vrot.slane %v962, 4
      %v965 = vor.u32 %v964, %v960
      %v966 = vrot.slane %v965, 4
      %v968 = vshll.u32 %v842, 16
      %v970 = vrot.slane %v968, 5
      %v971 = vsel %vm321, %v966, %v970
      %v973 = vshrl.u32 %v843, 16
      %v975 = vrot.slane %v973, 4
      %v976 = vshll.u32 %v843, 16
      %v978 = vrot.slane %v976, 5
      %v979 = vor.u32 %v975, %v978
      %v980 = vrot.slane %v979, 4
      %v982 = vshll.u32 %v844, 16
      %v984 = vrot.slane %v982, 5
      %v985 = vsel %vm321, %v980, %v984
      %v986 = vshrl.u32 %v844, 16
      %v988 = vrot.slane %v986, 4
      %v989 = vor.u32 %v988, %v984
      %v990 = vrot.slane %v989, 4
      %v992 = vshll.u32 %v845, 16
      %v994 = vrot.slane %v992, 5
      %v995 = vsel %vm321, %v990, %v994
      %v997 = vshrl.u32 %v846, 16
      %v999 = vrot.slane %v997, 4
      %v1000 = vshll.u32 %v846, 16
      %v1002 = vrot.slane %v1000, 5
      %v1003 = vor.u32 %v999, %v1002
      %v1004 = vrot.slane %v1003, 4
      %v1006 = vshll.u32 %v847, 16
      %v1008 = vrot.slane %v1006, 5
      %v1009 = vsel %vm321, %v1004, %v1008
      %v1010 = vshrl.u32 %v847, 16
      %v1012 = vrot.slane %v1010, 4
      %v1013 = vor.u32 %v1012, %v1008
      %v1014 = vrot.slane %v1013, 4
      %v1016 = vshll.u32 %v848, 16
      %v1018 = vrot.slane %v1016, 5
      %v1019 = vsel %vm321, %v1014, %v1018
      %v1021 = vshrl.u32 %v849, 16
      %v1023 = vrot.slane %v1021, 4
      %v1024 = vshll.u32 %v849, 16
      %v1026 = vrot.slane %v1024, 5
      %v1027 = vor.u32 %v1023, %v1026
      %v1028 = vrot.slane %v1027, 4
      %v1030 = vshll.u32 %v850, 16
      %v1032 = vrot.slane %v1030, 5
      %v1033 = vsel %vm321, %v1028, %v1032
      %v1034 = vshrl.u32 %v850, 16
      %v1036 = vrot.slane %v1034, 4
      %v1037 = vor.u32 %v1036, %v1032
      %v1038 = vrot.slane %v1037, 4
      %v1040 = vshll.u32 %v851, 16
      %v1042 = vrot.slane %v1040, 5
      %v1043 = vsel %vm321, %v1038, %v1042
      %v1044 = vunpack.c.l.b16 %v865
      %v1045 = vunpack.c.l.b16 %v875
      %v1046 = vunpack.c.l.b16 %v889
      %v1047 = vunpack.c.l.b16 %v899
      %v1048 = vunpack.c.l.b16 %v913
      %v1049 = vunpack.c.l.b16 %v923
      %v1050 = vunpack.c.l.b16 %v937
      %v1051 = vunpack.c.l.b16 %v947
      %v1052 = vunpack.c.l.b16 %v961
      %v1053 = vunpack.c.l.b16 %v971
      %v1054 = vunpack.c.l.b16 %v985
      %v1055 = vunpack.c.l.b16 %v995
      %v1056 = vunpack.c.l.b16 %v1009
      %v1057 = vunpack.c.l.b16 %v1019
      %v1058 = vunpack.c.l.b16 %v1033
      %v1059 = vunpack.c.l.b16 %v1043
      %v1060 = vpack.c.b16 %v1045, %v1044
      %v1061 = vpack.c.b16 %v1047, %v1046
      %v1062 = vpack.c.b16 %v1049, %v1048
      %v1063 = vpack.c.b16 %v1051, %v1050
      %v1064 = vpack.c.b16 %v1053, %v1052
      %v1065 = vpack.c.b16 %v1055, %v1054
      %v1066 = vpack.c.b16 %v1057, %v1056
      %v1067 = vpack.c.b16 %v1059, %v1058
      %1068 = vrot.lane.b32.xlu0 %v1060, 16
      %v1069 = vpop.permute.xlu0 %1068
      %1070 = vrot.lane.b32.xlu0 %v1061, 16
      %v1071 = vpop.permute.xlu0 %1070
      %1072 = vrot.lane.b32.xlu0 %v1062, 16
      %v1073 = vpop.permute.xlu0 %1072
      %1074 = vrot.lane.b32.xlu0 %v1063, 16
      %v1075 = vpop.permute.xlu0 %1074
      %1076 = vrot.lane.b32.xlu0 %v1064, 16
      %v1077 = vpop.permute.xlu0 %1076
      %1078 = vrot.lane.b32.xlu0 %v1065, 16
      %v1079 = vpop.permute.xlu0 %1078
      %1080 = vrot.lane.b32.xlu0 %v1066, 16
      %v1081 = vpop.permute.xlu0 %1080
      %1082 = vrot.lane.b32.xlu0 %v1067, 16
      %v1083 = vpop.permute.xlu0 %1082
      %vm1092 = vcmask 162944
      %1093 = vst.msk [vmem:[#allocation2] sm:$0xff] %vm1092, %v1069
      %1094 = vst.msk [vmem:[#allocation2 + $0x8] sm:$0xff] %vm1092, %v1071
      %1095 = vst.msk [vmem:[#allocation2 + $0x10] sm:$0xff] %vm1092, %v1073
      %1096 = vst.msk [vmem:[#allocation2 + $0x18] sm:$0xff] %vm1092, %v1075
      %1097 = vst.msk [vmem:[#allocation2 + $0x20] sm:$0xff] %vm1092, %v1077
      %1098 = vst.msk [vmem:[#allocation2 + $0x28] sm:$0xff] %vm1092, %v1079
      %1099 = vst.msk [vmem:[#allocation2 + $0x30] sm:$0xff] %vm1092, %v1081
      %1100 = vst.msk [vmem:[#allocation2 + $0x38] sm:$0xff] %vm1092, %v1083
      %v1101 = vld [vmem:[%s738] sm:$0xe]
      %v1102 = vld [vmem:[%s738 + $0x4] sm:$0xf]
      %v1103 = vld [vmem:[%s738 + $0x8] sm:$0x1]
      %v1104 = vld [vmem:[%s738 + $0xc] sm:$0xe]
      %v1105 = vld [vmem:[%s738 + $0x10] sm:$0xf]
      %v1106 = vld [vmem:[%s738 + $0x14] sm:$0x1]
      %v1107 = vld [vmem:[%s738 + $0x18] sm:$0xe]
      %v1108 = vld [vmem:[%s738 + $0x1c] sm:$0xf]
      %v1109 = vld [vmem:[%s738 + $0x20] sm:$0x1]
      %v1110 = vld [vmem:[%s738 + $0x24] sm:$0xe]
      %v1111 = vld [vmem:[%s738 + $0x28] sm:$0xf]
      %v1112 = vld [vmem:[%s738 + $0x2c] sm:$0x1]
      %v1113 = vld [vmem:[%s738 + $0x30] sm:$0xe]
      %v1114 = vld [vmem:[%s738 + $0x34] sm:$0xf]
      %v1115 = vld [vmem:[%s738 + $0x38] sm:$0x1]
      %v1116 = vld [vmem:[%s738 + $0x3c] sm:$0xe]
      %v1117 = vld [vmem:[%s738 + $0x40] sm:$0xf]
      %v1118 = vld [vmem:[%s738 + $0x44] sm:$0x1]
      %v1119 = vld [vmem:[%s738 + $0x48] sm:$0xe]
      %v1120 = vld [vmem:[%s738 + $0x4c] sm:$0xf]
      %v1121 = vld [vmem:[%s738 + $0x50] sm:$0x1]
      %v1122 = vld [vmem:[%s738 + $0x54] sm:$0xe]
      %v1123 = vld [vmem:[%s738 + $0x58] sm:$0xf]
      %v1124 = vld [vmem:[%s738 + $0x5c] sm:$0x1]
      %v1149 = vrot.slane %v1101, 5
      %v1150 = vrot.slane %v1149, 4
      %v1151 = vrot.slane %v1102, 5
      %v1152 = vsel %vm621, %v1150, %v1151
      %v1153 = vrot.slane %v1151, 4
      %v1154 = vrot.slane %v1103, 5
      %v1155 = vsel %vm621, %v1153, %v1154
      %v1156 = vrot.slane %v1104, 5
      %v1157 = vrot.slane %v1156, 4
      %v1158 = vrot.slane %v1105, 5
      %v1159 = vsel %vm621, %v1157, %v1158
      %v1160 = vrot.slane %v1158, 4
      %v1161 = vrot.slane %v1106, 5
      %v1162 = vsel %vm621, %v1160, %v1161
      %v1163 = vrot.slane %v1107, 5
      %v1164 = vrot.slane %v1163, 4
      %v1165 = vrot.slane %v1108, 5
      %v1166 = vsel %vm621, %v1164, %v1165
      %v1167 = vrot.slane %v1165, 4
      %v1168 = vrot.slane %v1109, 5
      %v1169 = vsel %vm621, %v1167, %v1168
      %v1170 = vrot.slane %v1110, 5
      %v1171 = vrot.slane %v1170, 4
      %v1172 = vrot.slane %v1111, 5
      %v1173 = vsel %vm621, %v1171, %v1172
      %v1174 = vrot.slane %v1172, 4
      %v1175 = vrot.slane %v1112, 5
      %v1176 = vsel %vm621, %v1174, %v1175
      %v1177 = vrot.slane %v1113, 5
      %v1178 = vrot.slane %v1177, 4
      %v1179 = vrot.slane %v1114, 5
      %v1180 = vsel %vm621, %v1178, %v1179
      %v1181 = vrot.slane %v1179, 4
      %v1182 = vrot.slane %v1115, 5
      %v1183 = vsel %vm621, %v1181, %v1182
      %v1184 = vrot.slane %v1116, 5
      %v1185 = vrot.slane %v1184, 4
      %v1186 = vrot.slane %v1117, 5
      %v1187 = vsel %vm621, %v1185, %v1186
      %v1188 = vrot.slane %v1186, 4
      %v1189 = vrot.slane %v1118, 5
      %v1190 = vsel %vm621, %v1188, %v1189
      %v1191 = vrot.slane %v1119, 5
      %v1192 = vrot.slane %v1191, 4
      %v1193 = vrot.slane %v1120, 5
      %v1194 = vsel %vm621, %v1192, %v1193
      %v1195 = vrot.slane %v1193, 4
      %v1196 = vrot.slane %v1121, 5
      %v1197 = vsel %vm621, %v1195, %v1196
      %v1198 = vrot.slane %v1122, 5
      %v1199 = vrot.slane %v1198, 4
      %v1200 = vrot.slane %v1123, 5
      %v1201 = vsel %vm621, %v1199, %v1200
      %v1202 = vrot.slane %v1200, 4
      %v1203 = vrot.slane %v1124, 5
      %v1204 = vsel %vm621, %v1202, %v1203
      %v1205 = vunpack.c.l.b16 %v1152
      %v1206 = vunpack.c.l.b16 %v1155
      %v1207 = vunpack.c.l.b16 %v1159
      %v1208 = vunpack.c.l.b16 %v1162
      %v1209 = vunpack.c.l.b16 %v1166
      %v1210 = vunpack.c.l.b16 %v1169
      %v1211 = vunpack.c.l.b16 %v1173
      %v1212 = vunpack.c.l.b16 %v1176
      %v1213 = vunpack.c.l.b16 %v1180
      %v1214 = vunpack.c.l.b16 %v1183
      %v1215 = vunpack.c.l.b16 %v1187
      %v1216 = vunpack.c.l.b16 %v1190
      %v1217 = vunpack.c.l.b16 %v1194
      %v1218 = vunpack.c.l.b16 %v1197
      %v1219 = vunpack.c.l.b16 %v1201
      %v1220 = vunpack.c.l.b16 %v1204
      %v1221 = vpack.c.b16 %v1206, %v1205
      %v1222 = vpack.c.b16 %v1208, %v1207
      %v1223 = vpack.c.b16 %v1210, %v1209
      %v1224 = vpack.c.b16 %v1212, %v1211
      %v1225 = vpack.c.b16 %v1214, %v1213
      %v1226 = vpack.c.b16 %v1216, %v1215
      %v1227 = vpack.c.b16 %v1218, %v1217
      %v1228 = vpack.c.b16 %v1220, %v1219
      %1229 = vrot.lane.b32.xlu0 %v1221, 20
      %v1230 = vpop.permute.xlu0 %1229
      %1231 = vrot.lane.b32.xlu0 %v1222, 20
      %v1232 = vpop.permute.xlu0 %1231
      %1233 = vrot.lane.b32.xlu0 %v1223, 20
      %v1234 = vpop.permute.xlu0 %1233
      %1235 = vrot.lane.b32.xlu0 %v1224, 20
      %v1236 = vpop.permute.xlu0 %1235
      %1237 = vrot.lane.b32.xlu0 %v1225, 20
      %v1238 = vpop.permute.xlu0 %1237
      %1239 = vrot.lane.b32.xlu0 %v1226, 20
      %v1240 = vpop.permute.xlu0 %1239
      %1241 = vrot.lane.b32.xlu0 %v1227, 20
      %v1242 = vpop.permute.xlu0 %1241
      %1243 = vrot.lane.b32.xlu0 %v1228, 20
      %v1244 = vpop.permute.xlu0 %1243
      %vm1253 = vcmask 195744
      %1254 = vst.msk [vmem:[#allocation2] sm:$0xff] %vm1253, %v1230
      %1255 = vst.msk [vmem:[#allocation2 + $0x8] sm:$0xff] %vm1253, %v1232
      %1256 = vst.msk [vmem:[#allocation2 + $0x10] sm:$0xff] %vm1253, %v1234
      %1257 = vst.msk [vmem:[#allocation2 + $0x18] sm:$0xff] %vm1253, %v1236
      %1258 = vst.msk [vmem:[#allocation2 + $0x20] sm:$0xff] %vm1253, %v1238
      %1259 = vst.msk [vmem:[#allocation2 + $0x28] sm:$0xff] %vm1253, %v1240
      %1260 = vst.msk [vmem:[#allocation2 + $0x30] sm:$0xff] %vm1253, %v1242
      %1261 = vst.msk [vmem:[#allocation2 + $0x38] sm:$0xff] %vm1253, %v1244
      %s1262 = sadd.s32 %s218, 2
      %s1263 = smul.u32 %s1262, 3
      %s1264 = smul.addr %s1263, 4
      %s1265 = scalar_lea.vmem %s197, %s1264
      %v1266 = vld [vmem:[%s1265] sm:$0xf]
      %v1267 = vld [vmem:[%s1265 + $0x4] sm:$0xf]
      %v1268 = vld [vmem:[%s1265 + $0xc] sm:$0xf]
      %v1269 = vld [vmem:[%s1265 + $0x10] sm:$0xf]
      %v1270 = vld [vmem:[%s1265 + $0x18] sm:$0xf]
      %v1271 = vld [vmem:[%s1265 + $0x1c] sm:$0xf]
      %v1272 = vld [vmem:[%s1265 + $0x24] sm:$0xf]
      %v1273 = vld [vmem:[%s1265 + $0x28] sm:$0xf]
      %v1274 = vld [vmem:[%s1265 + $0x30] sm:$0xf]
      %v1275 = vld [vmem:[%s1265 + $0x34] sm:$0xf]
      %v1276 = vld [vmem:[%s1265 + $0x3c] sm:$0xf]
      %v1277 = vld [vmem:[%s1265 + $0x40] sm:$0xf]
      %v1278 = vld [vmem:[%s1265 + $0x48] sm:$0xf]
      %v1279 = vld [vmem:[%s1265 + $0x4c] sm:$0xf]
      %v1280 = vld [vmem:[%s1265 + $0x54] sm:$0xf]
      %v1281 = vld [vmem:[%s1265 + $0x58] sm:$0xf]
      %v1298 = vunpack.c.l.b16 %v1266
      %v1299 = vunpack.c.l.b16 %v1267
      %v1300 = vunpack.c.l.b16 %v1268
      %v1301 = vunpack.c.l.b16 %v1269
      %v1302 = vunpack.c.l.b16 %v1270
      %v1303 = vunpack.c.l.b16 %v1271
      %v1304 = vunpack.c.l.b16 %v1272
      %v1305 = vunpack.c.l.b16 %v1273
      %v1306 = vunpack.c.l.b16 %v1274
      %v1307 = vunpack.c.l.b16 %v1275
      %v1308 = vunpack.c.l.b16 %v1276
      %v1309 = vunpack.c.l.b16 %v1277
      %v1310 = vunpack.c.l.b16 %v1278
      %v1311 = vunpack.c.l.b16 %v1279
      %v1312 = vunpack.c.l.b16 %v1280
      %v1313 = vunpack.c.l.b16 %v1281
      %v1314 = vpack.c.b16 %v1299, %v1298
      %v1315 = vpack.c.b16 %v1301, %v1300
      %v1316 = vpack.c.b16 %v1303, %v1302
      %v1317 = vpack.c.b16 %v1305, %v1304
      %v1318 = vpack.c.b16 %v1307, %v1306
      %v1319 = vpack.c.b16 %v1309, %v1308
      %v1320 = vpack.c.b16 %v1311, %v1310
      %v1321 = vpack.c.b16 %v1313, %v1312
      %1322 = vrot.lane.b32.xlu0 %v1314, 24
      %v1323 = vpop.permute.xlu0 %1322
      %1324 = vrot.lane.b32.xlu0 %v1315, 24
      %v1325 = vpop.permute.xlu0 %1324
      %1326 = vrot.lane.b32.xlu0 %v1316, 24
      %v1327 = vpop.permute.xlu0 %1326
      %1328 = vrot.lane.b32.xlu0 %v1317, 24
      %v1329 = vpop.permute.xlu0 %1328
      %1330 = vrot.lane.b32.xlu0 %v1318, 24
      %v1331 = vpop.permute.xlu0 %1330
      %1332 = vrot.lane.b32.xlu0 %v1319, 24
      %v1333 = vpop.permute.xlu0 %1332
      %1334 = vrot.lane.b32.xlu0 %v1320, 24
      %v1335 = vpop.permute.xlu0 %1334
      %1336 = vrot.lane.b32.xlu0 %v1321, 24
      %v1337 = vpop.permute.xlu0 %1336
      %vm1346 = vcmask 228544
      %1347 = vst.msk [vmem:[#allocation2] sm:$0xff] %vm1346, %v1323
      %1348 = vst.msk [vmem:[#allocation2 + $0x8] sm:$0xff] %vm1346, %v1325
      %1349 = vst.msk [vmem:[#allocation2 + $0x10] sm:$0xff] %vm1346, %v1327
      %1350 = vst.msk [vmem:[#allocation2 + $0x18] sm:$0xff] %vm1346, %v1329
      %1351 = vst.msk [vmem:[#allocation2 + $0x20] sm:$0xff] %vm1346, %v1331
      %1352 = vst.msk [vmem:[#allocation2 + $0x28] sm:$0xff] %vm1346, %v1333
      %1353 = vst.msk [vmem:[#allocation2 + $0x30] sm:$0xff] %vm1346, %v1335
      %1354 = vst.msk [vmem:[#allocation2 + $0x38] sm:$0xff] %vm1346, %v1337
      %v1355 = vld [vmem:[%s1265] sm:$0xf]
      %v1356 = vld [vmem:[%s1265 + $0x4] sm:$0xf]
      %v1357 = vld [vmem:[%s1265 + $0x8] sm:$0x1]
      %v1358 = vld [vmem:[%s1265 + $0xc] sm:$0xf]
      %v1359 = vld [vmem:[%s1265 + $0x10] sm:$0xf]
      %v1360 = vld [vmem:[%s1265 + $0x14] sm:$0x1]
      %v1361 = vld [vmem:[%s1265 + $0x18] sm:$0xf]
      %v1362 = vld [vmem:[%s1265 + $0x1c] sm:$0xf]
      %v1363 = vld [vmem:[%s1265 + $0x20] sm:$0x1]
      %v1364 = vld [vmem:[%s1265 + $0x24] sm:$0xf]
      %v1365 = vld [vmem:[%s1265 + $0x28] sm:$0xf]
      %v1366 = vld [vmem:[%s1265 + $0x2c] sm:$0x1]
      %v1367 = vld [vmem:[%s1265 + $0x30] sm:$0xf]
      %v1368 = vld [vmem:[%s1265 + $0x34] sm:$0xf]
      %v1369 = vld [vmem:[%s1265 + $0x38] sm:$0x1]
      %v1370 = vld [vmem:[%s1265 + $0x3c] sm:$0xf]
      %v1371 = vld [vmem:[%s1265 + $0x40] sm:$0xf]
      %v1372 = vld [vmem:[%s1265 + $0x44] sm:$0x1]
      %v1373 = vld [vmem:[%s1265 + $0x48] sm:$0xf]
      %v1374 = vld [vmem:[%s1265 + $0x4c] sm:$0xf]
      %v1375 = vld [vmem:[%s1265 + $0x50] sm:$0x1]
      %v1376 = vld [vmem:[%s1265 + $0x54] sm:$0xf]
      %v1377 = vld [vmem:[%s1265 + $0x58] sm:$0xf]
      %v1378 = vld [vmem:[%s1265 + $0x5c] sm:$0x1]
      %v1380 = vshrl.u32 %v1355, 16
      %v1382 = vrot.slane %v1380, 4
      %v1383 = vshll.u32 %v1355, 16
      %v1385 = vrot.slane %v1383, 5
      %v1386 = vor.u32 %v1382, %v1385
      %v1387 = vrot.slane %v1386, 4
      %v1389 = vshll.u32 %v1356, 16
      %v1391 = vrot.slane %v1389, 5
      %v1392 = vsel %vm321, %v1387, %v1391
      %v1393 = vshrl.u32 %v1356, 16
      %v1395 = vrot.slane %v1393, 4
      %v1396 = vor.u32 %v1395, %v1391
      %v1397 = vrot.slane %v1396, 4
      %v1399 = vshll.u32 %v1357, 16
      %v1401 = vrot.slane %v1399, 5
      %v1402 = vsel %vm321, %v1397, %v1401
      %v1404 = vshrl.u32 %v1358, 16
      %v1406 = vrot.slane %v1404, 4
      %v1407 = vshll.u32 %v1358, 16
      %v1409 = vrot.slane %v1407, 5
      %v1410 = vor.u32 %v1406, %v1409
      %v1411 = vrot.slane %v1410, 4
      %v1413 = vshll.u32 %v1359, 16
      %v1415 = vrot.slane %v1413, 5
      %v1416 = vsel %vm321, %v1411, %v1415
      %v1417 = vshrl.u32 %v1359, 16
      %v1419 = vrot.slane %v1417, 4
      %v1420 = vor.u32 %v1419, %v1415
      %v1421 = vrot.slane %v1420, 4
      %v1423 = vshll.u32 %v1360, 16
      %v1425 = vrot.slane %v1423, 5
      %v1426 = vsel %vm321, %v1421, %v1425
      %v1428 = vshrl.u32 %v1361, 16
      %v1430 = vrot.slane %v1428, 4
      %v1431 = vshll.u32 %v1361, 16
      %v1433 = vrot.slane %v1431, 5
      %v1434 = vor.u32 %v1430, %v1433
      %v1435 = vrot.slane %v1434, 4
      %v1437 = vshll.u32 %v1362, 16
      %v1439 = vrot.slane %v1437, 5
      %v1440 = vsel %vm321, %v1435, %v1439
      %v1441 = vshrl.u32 %v1362, 16
      %v1443 = vrot.slane %v1441, 4
      %v1444 = vor.u32 %v1443, %v1439
      %v1445 = vrot.slane %v1444, 4
      %v1447 = vshll.u32 %v1363, 16
      %v1449 = vrot.slane %v1447, 5
      %v1450 = vsel %vm321, %v1445, %v1449
      %v1452 = vshrl.u32 %v1364, 16
      %v1454 = vrot.slane %v1452, 4
      %v1455 = vshll.u32 %v1364, 16
      %v1457 = vrot.slane %v1455, 5
      %v1458 = vor.u32 %v1454, %v1457
      %v1459 = vrot.slane %v1458, 4
      %v1461 = vshll.u32 %v1365, 16
      %v1463 = vrot.slane %v1461, 5
      %v1464 = vsel %vm321, %v1459, %v1463
      %v1465 = vshrl.u32 %v1365, 16
      %v1467 = vrot.slane %v1465, 4
      %v1468 = vor.u32 %v1467, %v1463
      %v1469 = vrot.slane %v1468, 4
      %v1471 = vshll.u32 %v1366, 16
      %v1473 = vrot.slane %v1471, 5
      %v1474 = vsel %vm321, %v1469, %v1473
      %v1476 = vshrl.u32 %v1367, 16
      %v1478 = vrot.slane %v1476, 4
      %v1479 = vshll.u32 %v1367, 16
      %v1481 = vrot.slane %v1479, 5
      %v1482 = vor.u32 %v1478, %v1481
      %v1483 = vrot.slane %v1482, 4
      %v1485 = vshll.u32 %v1368, 16
      %v1487 = vrot.slane %v1485, 5
      %v1488 = vsel %vm321, %v1483, %v1487
      %v1489 = vshrl.u32 %v1368, 16
      %v1491 = vrot.slane %v1489, 4
      %v1492 = vor.u32 %v1491, %v1487
      %v1493 = vrot.slane %v1492, 4
      %v1495 = vshll.u32 %v1369, 16
      %v1497 = vrot.slane %v1495, 5
      %v1498 = vsel %vm321, %v1493, %v1497
      %v1500 = vshrl.u32 %v1370, 16
      %v1502 = vrot.slane %v1500, 4
      %v1503 = vshll.u32 %v1370, 16
      %v1505 = vrot.slane %v1503, 5
      %v1506 = vor.u32 %v1502, %v1505
      %v1507 = vrot.slane %v1506, 4
      %v1509 = vshll.u32 %v1371, 16
      %v1511 = vrot.slane %v1509, 5
      %v1512 = vsel %vm321, %v1507, %v1511
      %v1513 = vshrl.u32 %v1371, 16
      %v1515 = vrot.slane %v1513, 4
      %v1516 = vor.u32 %v1515, %v1511
      %v1517 = vrot.slane %v1516, 4
      %v1519 = vshll.u32 %v1372, 16
      %v1521 = vrot.slane %v1519, 5
      %v1522 = vsel %vm321, %v1517, %v1521
      %v1524 = vshrl.u32 %v1373, 16
      %v1526 = vrot.slane %v1524, 4
      %v1527 = vshll.u32 %v1373, 16
      %v1529 = vrot.slane %v1527, 5
      %v1530 = vor.u32 %v1526, %v1529
      %v1531 = vrot.slane %v1530, 4
      %v1533 = vshll.u32 %v1374, 16
      %v1535 = vrot.slane %v1533, 5
      %v1536 = vsel %vm321, %v1531, %v1535
      %v1537 = vshrl.u32 %v1374, 16
      %v1539 = vrot.slane %v1537, 4
      %v1540 = vor.u32 %v1539, %v1535
      %v1541 = vrot.slane %v1540, 4
      %v1543 = vshll.u32 %v1375, 16
      %v1545 = vrot.slane %v1543, 5
      %v1546 = vsel %vm321, %v1541, %v1545
      %v1548 = vshrl.u32 %v1376, 16
      %v1550 = vrot.slane %v1548, 4
      %v1551 = vshll.u32 %v1376, 16
      %v1553 = vrot.slane %v1551, 5
      %v1554 = vor.u32 %v1550, %v1553
      %v1555 = vrot.slane %v1554, 4
      %v1557 = vshll.u32 %v1377, 16
      %v1559 = vrot.slane %v1557, 5
      %v1560 = vsel %vm321, %v1555, %v1559
      %v1561 = vshrl.u32 %v1377, 16
      %v1563 = vrot.slane %v1561, 4
      %v1564 = vor.u32 %v1563, %v1559
      %v1565 = vrot.slane %v1564, 4
      %v1567 = vshll.u32 %v1378, 16
      %v1569 = vrot.slane %v1567, 5
      %v1570 = vsel %vm321, %v1565, %v1569
      %v1571 = vunpack.c.l.b16 %v1392
      %v1572 = vunpack.c.l.b16 %v1402
      %v1573 = vunpack.c.l.b16 %v1416
      %v1574 = vunpack.c.l.b16 %v1426
      %v1575 = vunpack.c.l.b16 %v1440
      %v1576 = vunpack.c.l.b16 %v1450
      %v1577 = vunpack.c.l.b16 %v1464
      %v1578 = vunpack.c.l.b16 %v1474
      %v1579 = vunpack.c.l.b16 %v1488
      %v1580 = vunpack.c.l.b16 %v1498
      %v1581 = vunpack.c.l.b16 %v1512
      %v1582 = vunpack.c.l.b16 %v1522
      %v1583 = vunpack.c.l.b16 %v1536
      %v1584 = vunpack.c.l.b16 %v1546
      %v1585 = vunpack.c.l.b16 %v1560
      %v1586 = vunpack.c.l.b16 %v1570
      %v1587 = vpack.c.b16 %v1572, %v1571
      %v1588 = vpack.c.b16 %v1574, %v1573
      %v1589 = vpack.c.b16 %v1576, %v1575
      %v1590 = vpack.c.b16 %v1578, %v1577
      %v1591 = vpack.c.b16 %v1580, %v1579
      %v1592 = vpack.c.b16 %v1582, %v1581
      %v1593 = vpack.c.b16 %v1584, %v1583
      %v1594 = vpack.c.b16 %v1586, %v1585
      %1595 = vrot.lane.b32.xlu0 %v1587, 28
      %v1596 = vpop.permute.xlu0 %1595
      %1597 = vrot.lane.b32.xlu0 %v1588, 28
      %v1598 = vpop.permute.xlu0 %1597
      %1599 = vrot.lane.b32.xlu0 %v1589, 28
      %v1600 = vpop.permute.xlu0 %1599
      %1601 = vrot.lane.b32.xlu0 %v1590, 28
      %v1602 = vpop.permute.xlu0 %1601
      %1603 = vrot.lane.b32.xlu0 %v1591, 28
      %v1604 = vpop.permute.xlu0 %1603
      %1605 = vrot.lane.b32.xlu0 %v1592, 28
      %v1606 = vpop.permute.xlu0 %1605
      %1607 = vrot.lane.b32.xlu0 %v1593, 28
      %v1608 = vpop.permute.xlu0 %1607
      %1609 = vrot.lane.b32.xlu0 %v1594, 28
      %v1610 = vpop.permute.xlu0 %1609
      %vm1619 = vcmask 261344
      %1620 = vst.msk [vmem:[#allocation2] sm:$0xff] %vm1619, %v1596
      %1621 = vst.msk [vmem:[#allocation2 + $0x8] sm:$0xff] %vm1619, %v1598
      %1622 = vst.msk [vmem:[#allocation2 + $0x10] sm:$0xff] %vm1619, %v1600
      %1623 = vst.msk [vmem:[#allocation2 + $0x18] sm:$0xff] %vm1619, %v1602
      %1624 = vst.msk [vmem:[#allocation2 + $0x20] sm:$0xff] %vm1619, %v1604
      %1625 = vst.msk [vmem:[#allocation2 + $0x28] sm:$0xff] %vm1619, %v1606
      %1626 = vst.msk [vmem:[#allocation2 + $0x30] sm:$0xff] %vm1619, %v1608
      %1627 = vst.msk [vmem:[#allocation2 + $0x38] sm:$0xff] %vm1619, %v1610
      %v1628 = vld [vmem:[%s1265] sm:$0xe]
      %v1629 = vld [vmem:[%s1265 + $0x4] sm:$0xf]
      %v1630 = vld [vmem:[%s1265 + $0x8] sm:$0x1]
      %v1631 = vld [vmem:[%s1265 + $0xc] sm:$0xe]
      %v1632 = vld [vmem:[%s1265 + $0x10] sm:$0xf]
      %v1633 = vld [vmem:[%s1265 + $0x14] sm:$0x1]
      %v1634 = vld [vmem:[%s1265 + $0x18] sm:$0xe]
      %v1635 = vld [vmem:[%s1265 + $0x1c] sm:$0xf]
      %v1636 = vld [vmem:[%s1265 + $0x20] sm:$0x1]
      %v1637 = vld [vmem:[%s1265 + $0x24] sm:$0xe]
      %v1638 = vld [vmem:[%s1265 + $0x28] sm:$0xf]
      %v1639 = vld [vmem:[%s1265 + $0x2c] sm:$0x1]
      %v1640 = vld [vmem:[%s1265 + $0x30] sm:$0xe]
      %v1641 = vld [vmem:[%s1265 + $0x34] sm:$0xf]
      %v1642 = vld [vmem:[%s1265 + $0x38] sm:$0x1]
      %v1643 = vld [vmem:[%s1265 + $0x3c] sm:$0xe]
      %v1644 = vld [vmem:[%s1265 + $0x40] sm:$0xf]
      %v1645 = vld [vmem:[%s1265 + $0x44] sm:$0x1]
      %v1646 = vld [vmem:[%s1265 + $0x48] sm:$0xe]
      %v1647 = vld [vmem:[%s1265 + $0x4c] sm:$0xf]
      %v1648 = vld [vmem:[%s1265 + $0x50] sm:$0x1]
      %v1649 = vld [vmem:[%s1265 + $0x54] sm:$0xe]
      %v1650 = vld [vmem:[%s1265 + $0x58] sm:$0xf]
      %v1651 = vld [vmem:[%s1265 + $0x5c] sm:$0x1]
      %v1676 = vrot.slane %v1628, 5
      %v1677 = vrot.slane %v1676, 4
      %v1678 = vrot.slane %v1629, 5
      %v1679 = vsel %vm621, %v1677, %v1678
      %v1680 = vrot.slane %v1678, 4
      %v1681 = vrot.slane %v1630, 5
      %v1682 = vsel %vm621, %v1680, %v1681
      %v1683 = vrot.slane %v1631, 5
      %v1684 = vrot.slane %v1683, 4
      %v1685 = vrot.slane %v1632, 5
      %v1686 = vsel %vm621, %v1684, %v1685
      %v1687 = vrot.slane %v1685, 4
      %v1688 = vrot.slane %v1633, 5
      %v1689 = vsel %vm621, %v1687, %v1688
      %v1690 = vrot.slane %v1634, 5
      %v1691 = vrot.slane %v1690, 4
      %v1692 = vrot.slane %v1635, 5
      %v1693 = vsel %vm621, %v1691, %v1692
      %v1694 = vrot.slane %v1692, 4
      %v1695 = vrot.slane %v1636, 5
      %v1696 = vsel %vm621, %v1694, %v1695
      %v1697 = vrot.slane %v1637, 5
      %v1698 = vrot.slane %v1697, 4
      %v1699 = vrot.slane %v1638, 5
      %v1700 = vsel %vm621, %v1698, %v1699
      %v1701 = vrot.slane %v1699, 4
      %v1702 = vrot.slane %v1639, 5
      %v1703 = vsel %vm621, %v1701, %v1702
      %v1704 = vrot.slane %v1640, 5
      %v1705 = vrot.slane %v1704, 4
      %v1706 = vrot.slane %v1641, 5
      %v1707 = vsel %vm621, %v1705, %v1706
      %v1708 = vrot.slane %v1706, 4
      %v1709 = vrot.slane %v1642, 5
      %v1710 = vsel %vm621, %v1708, %v1709
      %v1711 = vrot.slane %v1643, 5
      %v1712 = vrot.slane %v1711, 4
      %v1713 = vrot.slane %v1644, 5
      %v1714 = vsel %vm621, %v1712, %v1713
      %v1715 = vrot.slane %v1713, 4
      %v1716 = vrot.slane %v1645, 5
      %v1717 = vsel %vm621, %v1715, %v1716
      %v1718 = vrot.slane %v1646, 5
      %v1719 = vrot.slane %v1718, 4
      %v1720 = vrot.slane %v1647, 5
      %v1721 = vsel %vm621, %v1719, %v1720
      %v1722 = vrot.slane %v1720, 4
      %v1723 = vrot.slane %v1648, 5
      %v1724 = vsel %vm621, %v1722, %v1723
      %v1725 = vrot.slane %v1649, 5
      %v1726 = vrot.slane %v1725, 4
      %v1727 = vrot.slane %v1650, 5
      %v1728 = vsel %vm621, %v1726, %v1727
      %v1729 = vrot.slane %v1727, 4
      %v1730 = vrot.slane %v1651, 5
      %v1731 = vsel %vm621, %v1729, %v1730
      %v1732 = vunpack.c.l.b16 %v1679
      %v1733 = vunpack.c.l.b16 %v1682
      %v1734 = vunpack.c.l.b16 %v1686
      %v1735 = vunpack.c.l.b16 %v1689
      %v1736 = vunpack.c.l.b16 %v1693
      %v1737 = vunpack.c.l.b16 %v1696
      %v1738 = vunpack.c.l.b16 %v1700
      %v1739 = vunpack.c.l.b16 %v1703
      %v1740 = vunpack.c.l.b16 %v1707
      %v1741 = vunpack.c.l.b16 %v1710
      %v1742 = vunpack.c.l.b16 %v1714
      %v1743 = vunpack.c.l.b16 %v1717
      %v1744 = vunpack.c.l.b16 %v1721
      %v1745 = vunpack.c.l.b16 %v1724
      %v1746 = vunpack.c.l.b16 %v1728
      %v1747 = vunpack.c.l.b16 %v1731
      %v1748 = vpack.c.b16 %v1733, %v1732
      %v1749 = vpack.c.b16 %v1735, %v1734
      %v1750 = vpack.c.b16 %v1737, %v1736
      %v1751 = vpack.c.b16 %v1739, %v1738
      %v1752 = vpack.c.b16 %v1741, %v1740
      %v1753 = vpack.c.b16 %v1743, %v1742
      %v1754 = vpack.c.b16 %v1745, %v1744
      %v1755 = vpack.c.b16 %v1747, %v1746
      %1756 = vrot.lane.b32.xlu0 %v1748, 32
      %v1757 = vpop.permute.xlu0 %1756
      %1758 = vrot.lane.b32.xlu0 %v1749, 32
      %v1759 = vpop.permute.xlu0 %1758
      %1760 = vrot.lane.b32.xlu0 %v1750, 32
      %v1761 = vpop.permute.xlu0 %1760
      %1762 = vrot.lane.b32.xlu0 %v1751, 32
      %v1763 = vpop.permute.xlu0 %1762
      %1764 = vrot.lane.b32.xlu0 %v1752, 32
      %v1765 = vpop.permute.xlu0 %1764
      %1766 = vrot.lane.b32.xlu0 %v1753, 32
      %v1767 = vpop.permute.xlu0 %1766
      %1768 = vrot.lane.b32.xlu0 %v1754, 32
      %v1769 = vpop.permute.xlu0 %1768
      %1770 = vrot.lane.b32.xlu0 %v1755, 32
      %v1771 = vpop.permute.xlu0 %1770
      %vm1780 = vcmask 294144
      %1781 = vst.msk [vmem:[#allocation2] sm:$0xff] %vm1780, %v1757
      %1782 = vst.msk [vmem:[#allocation2 + $0x8] sm:$0xff] %vm1780, %v1759
      %1783 = vst.msk [vmem:[#allocation2 + $0x10] sm:$0xff] %vm1780, %v1761
      %1784 = vst.msk [vmem:[#allocation2 + $0x18] sm:$0xff] %vm1780, %v1763
      %1785 = vst.msk [vmem:[#allocation2 + $0x20] sm:$0xff] %vm1780, %v1765
      %1786 = vst.msk [vmem:[#allocation2 + $0x28] sm:$0xff] %vm1780, %v1767
      %1787 = vst.msk [vmem:[#allocation2 + $0x30] sm:$0xff] %vm1780, %v1769
      %1788 = vst.msk [vmem:[#allocation2 + $0x38] sm:$0xff] %vm1780, %v1771
      %s1789 = ssub.s32 16, %s218
      %p1790 = scmp.lt.s32.totalorder %s1789, 8
      %s1791 = scalar_select %p1790, %s1789, 8
      %v1792 = vlaneseq
      %v1793 = vand.u32 %v1792, 127
      %s1794 = smul.u32 %s1791, 16
      %v1795 = vstv %s1794
      %vm1796 = vcmp.lt.s32.totalorder %v1793, %v1795
      %v1797 = vsel %vm1796, 1, 0
      %v1798 = vcvt.s32.f32 %v1797
      %v1799 = vld [vmem:[#allocation2] sm:$0xff]
      %v1800 = vld [vmem:[#allocation2 + $0x8] sm:$0xff]
      %v1801 = vld [vmem:[#allocation2 + $0x10] sm:$0xff]
      %v1802 = vld [vmem:[#allocation2 + $0x18] sm:$0xff]
      %v1803 = vld [vmem:[#allocation2 + $0x20] sm:$0xff]
      %v1804 = vld [vmem:[#allocation2 + $0x28] sm:$0xff]
      %v1805 = vld [vmem:[#allocation2 + $0x30] sm:$0xff]
      %v1806 = vld [vmem:[#allocation2 + $0x38] sm:$0xff]
      %v1807 = vld [vmem:[%s1] sm:$0xf]
      %v1808 = vld [vmem:[%s1 + $0x4] sm:$0xf]
      %v1809 = vld [vmem:[%s1 + $0x8] sm:$0xf]
      %v1813 = vunpack.c.l.b16 %v1807
      %v1814 = vunpack.c.l.b16 %v1808
      %v1815 = vunpack.c.l.b16 %v1809
      %v1816 = vpack.c.b16 %v1814, %v1813
      %v1817 = vpack.c.b16 %v1815, %v1815
      %vm1819 = vcmask 195584
      %v1821 = vsel %vm1819, %v1799, 0
      %v1824 = vsel %vm1819, %v1800, 0
      %v1827 = vsel %vm1819, %v1801, 0
      %v1830 = vsel %vm1819, %v1802, 0
      %v1833 = vsel %vm1819, %v1803, 0
      %v1836 = vsel %vm1819, %v1804, 0
      %v1839 = vsel %vm1819, %v1805, 0
      %v1842 = vsel %vm1819, %v1806, 0
      %vm1844 = vcmask 1043456
      %v1846 = vsel %vm1844, %v1817, 0
      %1848 = vmatprep.subr.bf16.mxu0 0
      %1849 = vmatpush1.bf16.msra.mxu0 %v1816
      %1850 = vmatprep.subr.bf16.mxu0 0
      %1851 = vmatpush1.bf16.msra.mxu0 %v1846
      %1852 = vmatprep.subr.bf16.mxu0 0
      %1853 = vmatpush1.bf16.msra.mxu0 0
      %1854 = vmatprep.subr.bf16.mxu0 0
      %1855 = vmatpush1.bf16.msra.mxu0 0
      %1856 = vmatprep.subr.bf16.mxu0 0
      %1857 = vmatpush1.bf16.msra.mxu0 0
      %1858 = vmatprep.subr.bf16.mxu0 0
      %1859 = vmatpush1.bf16.msra.mxu0 0
      %1860 = vmatprep.subr.bf16.mxu0 0
      %1861 = vmatpush1.bf16.msra.mxu0 0
      %1862 = vmatprep.subr.bf16.mxu0 0
      %1863 = vmatpush1.bf16.msra.mxu0 0
      %1864 = vmatprep.subr.bf16.mxu0 0
      %1865 = vmatpush1.bf16.msra.mxu0 0
      %1866 = vmatprep.subr.bf16.mxu0 0
      %1867 = vmatpush1.bf16.msra.mxu0 0
      %1868 = vmatprep.subr.bf16.mxu0 0
      %1869 = vmatpush1.bf16.msra.mxu0 0
      %1870 = vmatprep.subr.bf16.mxu0 0
      %1871 = vmatpush1.bf16.msra.mxu0 0
      %1872 = vmatprep.subr.bf16.mxu0 0
      %1873 = vmatpush1.bf16.msra.mxu0 0
      %1874 = vmatprep.subr.bf16.mxu0 0
      %1875 = vmatpush1.bf16.msra.mxu0 0
      %1876 = vmatprep.subr.bf16.mxu0 0
      %1877 = vmatpush1.bf16.msra.mxu0 0
      %1878 = vmatprep.subr.bf16.mxu0 0
      %1879 = vmatpush1.bf16.msra.mxu0 0
      %1880 = vmatprep.mubr.bf16.mxu0 0
      %1881 = vmatmul.mubr.bf16.gmra.mrb[0].mxu0 %v1821
      %v1882 = vpop.f32.mrb[0].mxu0
      %v1883 = vadd.f32 0.0, %v1882
      %v1884 = vpop.f32.mrb[0].mxu0
      %v1885 = vpop.f32.mrb[0].mxu0
      %v1886 = vadd.f32 0.0, %v1885
      %v1887 = vpop.f32.mrb[0].mxu0
      %1888 = vmatprep.mubr.bf16.mxu0 0
      %1889 = vmatmul.mubr.bf16.gmra.mrb[0].mxu0 %v1824
      %v1890 = vpop.f32.mrb[0].mxu0
      %v1891 = vadd.f32 0.0, %v1890
      %v1892 = vpop.f32.mrb[0].mxu0
      %v1893 = vpop.f32.mrb[0].mxu0
      %v1894 = vadd.f32 0.0, %v1893
      %v1895 = vpop.f32.mrb[0].mxu0
      %1896 = vmatprep.mubr.bf16.mxu0 0
      %1897 = vmatmul.mubr.bf16.gmra.mrb[0].mxu0 %v1827
      %v1898 = vpop.f32.mrb[0].mxu0
      %v1899 = vadd.f32 0.0, %v1898
      %v1900 = vpop.f32.mrb[0].mxu0
      %v1901 = vpop.f32.mrb[0].mxu0
      %v1902 = vadd.f32 0.0, %v1901
      %v1903 = vpop.f32.mrb[0].mxu0
      %1904 = vmatprep.mubr.bf16.mxu0 0
      %1905 = vmatmul.mubr.bf16.gmra.mrb[0].mxu0 %v1830
      %v1906 = vpop.f32.mrb[0].mxu0
      %v1907 = vadd.f32 0.0, %v1906
      %v1908 = vpop.f32.mrb[0].mxu0
      %v1909 = vpop.f32.mrb[0].mxu0
      %v1910 = vadd.f32 0.0, %v1909
      %v1911 = vpop.f32.mrb[0].mxu0
      %1912 = vmatprep.mubr.bf16.mxu0 0
      %1913 = vmatmul.mubr.bf16.gmra.mrb[0].mxu0 %v1833
      %v1914 = vpop.f32.mrb[0].mxu0
      %v1915 = vadd.f32 0.0, %v1914
      %v1916 = vpop.f32.mrb[0].mxu0
      %v1917 = vpop.f32.mrb[0].mxu0
      %v1918 = vadd.f32 0.0, %v1917
      %v1919 = vpop.f32.mrb[0].mxu0
      %1920 = vmatprep.mubr.bf16.mxu0 0
      %1921 = vmatmul.mubr.bf16.gmra.mrb[0].mxu0 %v1836
      %v1922 = vpop.f32.mrb[0].mxu0
      %v1923 = vadd.f32 0.0, %v1922
      %v1924 = vpop.f32.mrb[0].mxu0
      %v1925 = vpop.f32.mrb[0].mxu0
      %v1926 = vadd.f32 0.0, %v1925
      %v1927 = vpop.f32.mrb[0].mxu0
      %1928 = vmatprep.mubr.bf16.mxu0 0
      %1929 = vmatmul.mubr.bf16.gmra.mrb[0].mxu0 %v1839
      %v1930 = vpop.f32.mrb[0].mxu0
      %v1931 = vadd.f32 0.0, %v1930
      %v1932 = vpop.f32.mrb[0].mxu0
      %v1933 = vpop.f32.mrb[0].mxu0
      %v1934 = vadd.f32 0.0, %v1933
      %v1935 = vpop.f32.mrb[0].mxu0
      %1936 = vmatprep.mubr.bf16.mxu0 0
      %1937 = vmatmul.mubr.bf16.gmra.mrb[0].mxu0 %v1842
      %v1938 = vpop.f32.mrb[0].mxu0
      %v1939 = vadd.f32 0.0, %v1938
      %v1940 = vpop.f32.mrb[0].mxu0
      %v1941 = vpop.f32.mrb[0].mxu0
      %v1942 = vadd.f32 0.0, %v1941
      %v1943 = vpop.f32.mrb[0].mxu0
      %1944 = vdwg.mxu0
      %v1945 = vpack.c.bf16 %v1886, %v1883
      %v1946 = vpack.c.bf16 %v1894, %v1891
      %v1947 = vpack.c.bf16 %v1902, %v1899
      %v1948 = vpack.c.bf16 %v1910, %v1907
      %v1949 = vpack.c.bf16 %v1918, %v1915
      %v1950 = vpack.c.bf16 %v1926, %v1923
      %v1951 = vpack.c.bf16 %v1934, %v1931
      %v1952 = vpack.c.bf16 %v1942, %v1939
      %v1961 = vunpack.c.l.b16 %v1945
      %v1962 = vunpack.c.h.b16 %v1945
      %v1963 = vunpack.c.l.b16 %v1946
      %v1964 = vunpack.c.h.b16 %v1946
      %v1965 = vunpack.c.l.b16 %v1947
      %v1966 = vunpack.c.h.b16 %v1947
      %v1967 = vunpack.c.l.b16 %v1948
      %v1968 = vunpack.c.h.b16 %v1948
      %v1969 = vunpack.c.l.b16 %v1949
      %v1970 = vunpack.c.h.b16 %v1949
      %v1971 = vunpack.c.l.b16 %v1950
      %v1972 = vunpack.c.h.b16 %v1950
      %v1973 = vunpack.c.l.b16 %v1951
      %v1974 = vunpack.c.h.b16 %v1951
      %v1975 = vunpack.c.l.b16 %v1952
      %v1976 = vunpack.c.h.b16 %v1952
      %v1977 = vpack.c.b16 %v1961, %v1961
      %v1978 = vpack.c.b16 %v1962, %v1962
      %v1979 = vpack.c.b16 %v1963, %v1963
      %v1980 = vpack.c.b16 %v1964, %v1964
      %v1981 = vpack.c.b16 %v1965, %v1965
      %v1982 = vpack.c.b16 %v1966, %v1966
      %v1983 = vpack.c.b16 %v1967, %v1967
      %v1984 = vpack.c.b16 %v1968, %v1968
      %v1985 = vpack.c.b16 %v1969, %v1969
      %v1986 = vpack.c.b16 %v1970, %v1970
      %v1987 = vpack.c.b16 %v1971, %v1971
      %v1988 = vpack.c.b16 %v1972, %v1972
      %v1989 = vpack.c.b16 %v1973, %v1973
      %v1990 = vpack.c.b16 %v1974, %v1974
      %v1991 = vpack.c.b16 %v1975, %v1975
      %v1992 = vpack.c.b16 %v1976, %v1976
      %vm2009 = vcmask 125952
      %2010 = vst.msk [vmem:[%s207] sm:$0xf] %vm2009, %v1977
      %2011 = vst.msk [vmem:[%s207 + $0x4] sm:$0xf] %vm2009, %v1978
      %2012 = vst.msk [vmem:[%s207 + $0x10] sm:$0xf] %vm2009, %v1979
      %2013 = vst.msk [vmem:[%s207 + $0x14] sm:$0xf] %vm2009, %v1980
      %2014 = vst.msk [vmem:[%s207 + $0x20] sm:$0xf] %vm2009, %v1981
      %2015 = vst.msk [vmem:[%s207 + $0x24] sm:$0xf] %vm2009, %v1982
      %2016 = vst.msk [vmem:[%s207 + $0x30] sm:$0xf] %vm2009, %v1983
      %2017 = vst.msk [vmem:[%s207 + $0x34] sm:$0xf] %vm2009, %v1984
      %2018 = vst.msk [vmem:[%s207 + $0x40] sm:$0xf] %vm2009, %v1985
      %2019 = vst.msk [vmem:[%s207 + $0x44] sm:$0xf] %vm2009, %v1986
      %2020 = vst.msk [vmem:[%s207 + $0x50] sm:$0xf] %vm2009, %v1987
      %2021 = vst.msk [vmem:[%s207 + $0x54] sm:$0xf] %vm2009, %v1988
      %2022 = vst.msk [vmem:[%s207 + $0x60] sm:$0xf] %vm2009, %v1989
      %2023 = vst.msk [vmem:[%s207 + $0x64] sm:$0xf] %vm2009, %v1990
      %2024 = vst.msk [vmem:[%s207 + $0x70] sm:$0xf] %vm2009, %v1991
      %2025 = vst.msk [vmem:[%s207 + $0x74] sm:$0xf] %vm2009, %v1992
      %v2026 = vmul.f32 %v1883, %v1883
      %v2027 = vmul.f32 %v1886, %v1886
      %v2028 = vmul.f32 %v1891, %v1891
      %v2029 = vmul.f32 %v1894, %v1894
      %v2030 = vmul.f32 %v1899, %v1899
      %v2031 = vmul.f32 %v1902, %v1902
      %v2032 = vmul.f32 %v1907, %v1907
      %v2033 = vmul.f32 %v1910, %v1910
      %v2034 = vmul.f32 %v1915, %v1915
      %v2035 = vmul.f32 %v1918, %v1918
      %v2036 = vmul.f32 %v1923, %v1923
      %v2037 = vmul.f32 %v1926, %v1926
      %v2038 = vmul.f32 %v1931, %v1931
      %v2039 = vmul.f32 %v1934, %v1934
      %v2040 = vmul.f32 %v1939, %v1939
      %v2041 = vmul.f32 %v1942, %v1942
      %v2042 = vld [vmem:[#allocation2] sm:$0xff]
      %v2043 = vld [vmem:[#allocation2 + $0x8] sm:$0xff]
      %v2044 = vld [vmem:[#allocation2 + $0x10] sm:$0xff]
      %v2045 = vld [vmem:[#allocation2 + $0x18] sm:$0xff]
      %v2046 = vld [vmem:[#allocation2 + $0x20] sm:$0xff]
      %v2047 = vld [vmem:[#allocation2 + $0x28] sm:$0xff]
      %v2048 = vld [vmem:[#allocation2 + $0x30] sm:$0xff]
      %v2049 = vld [vmem:[#allocation2 + $0x38] sm:$0xff]
      %s2050 = scalar_lea.vmem %s1, 12
      %v2051 = vld [vmem:[%s2050] sm:$0xf]
      %v2052 = vld [vmem:[%s2050 + $0x4] sm:$0xf]
      %v2053 = vld [vmem:[%s2050 + $0x8] sm:$0xf]
      %2062 = vrot.lane.b32.xlu0 %v2042, 116
      %v2063 = vpop.permute.xlu0 %2062
      %2064 = vrot.lane.b32.xlu0 %v2043, 116
      %v2065 = vpop.permute.xlu0 %2064
      %2066 = vrot.lane.b32.xlu0 %v2044, 116
      %v2067 = vpop.permute.xlu0 %2066
      %2068 = vrot.lane.b32.xlu0 %v2045, 116
      %v2069 = vpop.permute.xlu0 %2068
      %2070 = vrot.lane.b32.xlu0 %v2046, 116
      %v2071 = vpop.permute.xlu0 %2070
      %2072 = vrot.lane.b32.xlu0 %v2047, 116
      %v2073 = vpop.permute.xlu0 %2072
      %2074 = vrot.lane.b32.xlu0 %v2048, 116
      %v2075 = vpop.permute.xlu0 %2074
      %2076 = vrot.lane.b32.xlu0 %v2049, 116
      %v2077 = vpop.permute.xlu0 %2076
      %v2081 = vunpack.c.l.b16 %v2051
      %v2082 = vunpack.c.l.b16 %v2052
      %v2083 = vunpack.c.l.b16 %v2053
      %v2084 = vpack.c.b16 %v2082, %v2081
      %v2085 = vpack.c.b16 %v2083, %v2083
      %v2088 = vsel %vm1819, %v2063, 0
      %v2091 = vsel %vm1819, %v2065, 0
      %v2094 = vsel %vm1819, %v2067, 0
      %v2097 = vsel %vm1819, %v2069, 0
      %v2100 = vsel %vm1819, %v2071, 0
      %v2103 = vsel %vm1819, %v2073, 0
      %v2106 = vsel %vm1819, %v2075, 0
      %v2109 = vsel %vm1819, %v2077, 0
      %v2112 = vsel %vm1844, %v2085, 0
      %2114 = vmatprep.subr.bf16.mxu0 0
      %2115 = vmatpush1.bf16.msra.mxu0 %v2084
      %2116 = vmatprep.subr.bf16.mxu0 0
      %2117 = vmatpush1.bf16.msra.mxu0 %v2112
      %2118 = vmatprep.subr.bf16.mxu0 0
      %2119 = vmatpush1.bf16.msra.mxu0 0
      %2120 = vmatprep.subr.bf16.mxu0 0
      %2121 = vmatpush1.bf16.msra.mxu0 0
      %2122 = vmatprep.subr.bf16.mxu0 0
      %2123 = vmatpush1.bf16.msra.mxu0 0
      %2124 = vmatprep.subr.bf16.mxu0 0
      %2125 = vmatpush1.bf16.msra.mxu0 0
      %2126 = vmatprep.subr.bf16.mxu0 0
      %2127 = vmatpush1.bf16.msra.mxu0 0
      %2128 = vmatprep.subr.bf16.mxu0 0
      %2129 = vmatpush1.bf16.msra.mxu0 0
      %2130 = vmatprep.subr.bf16.mxu0 0
      %2131 = vmatpush1.bf16.msra.mxu0 0
      %2132 = vmatprep.subr.bf16.mxu0 0
      %2133 = vmatpush1.bf16.msra.mxu0 0
      %2134 = vmatprep.subr.bf16.mxu0 0
      %2135 = vmatpush1.bf16.msra.mxu0 0
      %2136 = vmatprep.subr.bf16.mxu0 0
      %2137 = vmatpush1.bf16.msra.mxu0 0
      %2138 = vmatprep.subr.bf16.mxu0 0
      %2139 = vmatpush1.bf16.msra.mxu0 0
      %2140 = vmatprep.subr.bf16.mxu0 0
      %2141 = vmatpush1.bf16.msra.mxu0 0
      %2142 = vmatprep.subr.bf16.mxu0 0
      %2143 = vmatpush1.bf16.msra.mxu0 0
      %2144 = vmatprep.subr.bf16.mxu0 0
      %2145 = vmatpush1.bf16.msra.mxu0 0
      %2146 = vmatprep.mubr.bf16.mxu0 0
      %2147 = vmatmul.mubr.bf16.gmra.mrb[0].mxu0 %v2088
      %v2148 = vpop.f32.mrb[0].mxu0
      %v2149 = vadd.f32 0.0, %v2148
      %v2150 = vpop.f32.mrb[0].mxu0
      %v2151 = vpop.f32.mrb[0].mxu0
      %v2152 = vadd.f32 0.0, %v2151
      %v2153 = vpop.f32.mrb[0].mxu0
      %2154 = vmatprep.mubr.bf16.mxu0 0
      %2155 = vmatmul.mubr.bf16.gmra.mrb[0].mxu0 %v2091
      %v2156 = vpop.f32.mrb[0].mxu0
      %v2157 = vadd.f32 0.0, %v2156
      %v2158 = vpop.f32.mrb[0].mxu0
      %v2159 = vpop.f32.mrb[0].mxu0
      %v2160 = vadd.f32 0.0, %v2159
      %v2161 = vpop.f32.mrb[0].mxu0
      %2162 = vmatprep.mubr.bf16.mxu0 0
      %2163 = vmatmul.mubr.bf16.gmra.mrb[0].mxu0 %v2094
      %v2164 = vpop.f32.mrb[0].mxu0
      %v2165 = vadd.f32 0.0, %v2164
      %v2166 = vpop.f32.mrb[0].mxu0
      %v2167 = vpop.f32.mrb[0].mxu0
      %v2168 = vadd.f32 0.0, %v2167
      %v2169 = vpop.f32.mrb[0].mxu0
      %2170 = vmatprep.mubr.bf16.mxu0 0
      %2171 = vmatmul.mubr.bf16.gmra.mrb[0].mxu0 %v2097
      %v2172 = vpop.f32.mrb[0].mxu0
      %v2173 = vadd.f32 0.0, %v2172
      %v2174 = vpop.f32.mrb[0].mxu0
      %v2175 = vpop.f32.mrb[0].mxu0
      %v2176 = vadd.f32 0.0, %v2175
      %v2177 = vpop.f32.mrb[0].mxu0
      %2178 = vmatprep.mubr.bf16.mxu0 0
      %2179 = vmatmul.mubr.bf16.gmra.mrb[0].mxu0 %v2100
      %v2180 = vpop.f32.mrb[0].mxu0
      %v2181 = vadd.f32 0.0, %v2180
      %v2182 = vpop.f32.mrb[0].mxu0
      %v2183 = vpop.f32.mrb[0].mxu0
      %v2184 = vadd.f32 0.0, %v2183
      %v2185 = vpop.f32.mrb[0].mxu0
      %2186 = vmatprep.mubr.bf16.mxu0 0
      %2187 = vmatmul.mubr.bf16.gmra.mrb[0].mxu0 %v2103
      %v2188 = vpop.f32.mrb[0].mxu0
      %v2189 = vadd.f32 0.0, %v2188
      %v2190 = vpop.f32.mrb[0].mxu0
      %v2191 = vpop.f32.mrb[0].mxu0
      %v2192 = vadd.f32 0.0, %v2191
      %v2193 = vpop.f32.mrb[0].mxu0
      %2194 = vmatprep.mubr.bf16.mxu0 0
      %2195 = vmatmul.mubr.bf16.gmra.mrb[0].mxu0 %v2106
      %v2196 = vpop.f32.mrb[0].mxu0
      %v2197 = vadd.f32 0.0, %v2196
      %v2198 = vpop.f32.mrb[0].mxu0
      %v2199 = vpop.f32.mrb[0].mxu0
      %v2200 = vadd.f32 0.0, %v2199
      %v2201 = vpop.f32.mrb[0].mxu0
      %2202 = vmatprep.mubr.bf16.mxu0 0
      %2203 = vmatmul.mubr.bf16.gmra.mrb[0].mxu0 %v2109
      %v2204 = vpop.f32.mrb[0].mxu0
      %v2205 = vadd.f32 0.0, %v2204
      %v2206 = vpop.f32.mrb[0].mxu0
      %v2207 = vpop.f32.mrb[0].mxu0
      %v2208 = vadd.f32 0.0, %v2207
      %v2209 = vpop.f32.mrb[0].mxu0
      %2210 = vdwg.mxu0
      %v2211 = vpack.c.bf16 %v2152, %v2149
      %v2212 = vpack.c.bf16 %v2160, %v2157
      %v2213 = vpack.c.bf16 %v2168, %v2165
      %v2214 = vpack.c.bf16 %v2176, %v2173
      %v2215 = vpack.c.bf16 %v2184, %v2181
      %v2216 = vpack.c.bf16 %v2192, %v2189
      %v2217 = vpack.c.bf16 %v2200, %v2197
      %v2218 = vpack.c.bf16 %v2208, %v2205
      %v2227 = vunpack.c.l.b16 %v2211
      %v2228 = vunpack.c.h.b16 %v2211
      %v2229 = vunpack.c.l.b16 %v2212
      %v2230 = vunpack.c.h.b16 %v2212
      %v2231 = vunpack.c.l.b16 %v2213
      %v2232 = vunpack.c.h.b16 %v2213
      %v2233 = vunpack.c.l.b16 %v2214
      %v2234 = vunpack.c.h.b16 %v2214
      %v2235 = vunpack.c.l.b16 %v2215
      %v2236 = vunpack.c.h.b16 %v2215
      %v2237 = vunpack.c.l.b16 %v2216
      %v2238 = vunpack.c.h.b16 %v2216
      %v2239 = vunpack.c.l.b16 %v2217
      %v2240 = vunpack.c.h.b16 %v2217
      %v2241 = vunpack.c.l.b16 %v2218
      %v2242 = vunpack.c.h.b16 %v2218
      %v2243 = vpack.c.b16 %v2227, %v2227
      %v2244 = vpack.c.b16 %v2228, %v2228
      %v2245 = vpack.c.b16 %v2229, %v2229
      %v2246 = vpack.c.b16 %v2230, %v2230
      %v2247 = vpack.c.b16 %v2231, %v2231
      %v2248 = vpack.c.b16 %v2232, %v2232
      %v2249 = vpack.c.b16 %v2233, %v2233
      %v2250 = vpack.c.b16 %v2234, %v2234
      %v2251 = vpack.c.b16 %v2235, %v2235
      %v2252 = vpack.c.b16 %v2236, %v2236
      %v2253 = vpack.c.b16 %v2237, %v2237
      %v2254 = vpack.c.b16 %v2238, %v2238
      %v2255 = vpack.c.b16 %v2239, %v2239
      %v2256 = vpack.c.b16 %v2240, %v2240
      %v2257 = vpack.c.b16 %v2241, %v2241
      %v2258 = vpack.c.b16 %v2242, %v2242
      %s2275 = scalar_lea.vmem %s207, 8
      %2276 = vst.msk [vmem:[%s2275] sm:$0xf] %vm2009, %v2243
      %2277 = vst.msk [vmem:[%s2275 + $0x4] sm:$0xf] %vm2009, %v2244
      %2278 = vst.msk [vmem:[%s2275 + $0x10] sm:$0xf] %vm2009, %v2245
      %2279 = vst.msk [vmem:[%s2275 + $0x14] sm:$0xf] %vm2009, %v2246
      %2280 = vst.msk [vmem:[%s2275 + $0x20] sm:$0xf] %vm2009, %v2247
      %2281 = vst.msk [vmem:[%s2275 + $0x24] sm:$0xf] %vm2009, %v2248
      %2282 = vst.msk [vmem:[%s2275 + $0x30] sm:$0xf] %vm2009, %v2249
      %2283 = vst.msk [vmem:[%s2275 + $0x34] sm:$0xf] %vm2009, %v2250
      %2284 = vst.msk [vmem:[%s2275 + $0x40] sm:$0xf] %vm2009, %v2251
      %2285 = vst.msk [vmem:[%s2275 + $0x44] sm:$0xf] %vm2009, %v2252
      %2286 = vst.msk [vmem:[%s2275 + $0x50] sm:$0xf] %vm2009, %v2253
      %2287 = vst.msk [vmem:[%s2275 + $0x54] sm:$0xf] %vm2009, %v2254
      %2288 = vst.msk [vmem:[%s2275 + $0x60] sm:$0xf] %vm2009, %v2255
      %2289 = vst.msk [vmem:[%s2275 + $0x64] sm:$0xf] %vm2009, %v2256
      %2290 = vst.msk [vmem:[%s2275 + $0x70] sm:$0xf] %vm2009, %v2257
      %2291 = vst.msk [vmem:[%s2275 + $0x74] sm:$0xf] %vm2009, %v2258
      %2292 = vmatprep.subr.mxu0 0.0
      %2293 = vmatpush1.msra.mxu0 %v2149
      %2294 = vmatprep.subr.mxu0 0.0
      %2295 = vmatpush1.msra.mxu0 %v2152
      %2296 = vmatprep.subr.mxu0 0.0
      %2297 = vmatpush1.msra.mxu0 %v2157
      %2298 = vmatprep.subr.mxu0 0.0
      %2299 = vmatpush1.msra.mxu0 %v2160
      %2300 = vmatprep.subr.mxu0 0.0
      %2301 = vmatpush1.msra.mxu0 %v2165
      %2302 = vmatprep.subr.mxu0 0.0
      %2303 = vmatpush1.msra.mxu0 %v2168
      %2304 = vmatprep.subr.mxu0 0.0
      %2305 = vmatpush1.msra.mxu0 %v2173
      %2306 = vmatprep.subr.mxu0 0.0
      %2307 = vmatpush1.msra.mxu0 %v2176
      %2308 = vmatprep.subr.mxu0 0.0
      %2309 = vmatpush1.msra.mxu0 %v2181
      %2310 = vmatprep.subr.mxu0 0.0
      %2311 = vmatpush1.msra.mxu0 %v2184
      %2312 = vmatprep.subr.mxu0 0.0
      %2313 = vmatpush1.msra.mxu0 %v2189
      %2314 = vmatprep.subr.mxu0 0.0
      %2315 = vmatpush1.msra.mxu0 %v2192
      %2316 = vmatprep.subr.mxu0 0.0
      %2317 = vmatpush1.msra.mxu0 %v2197
      %2318 = vmatprep.subr.mxu0 0.0
      %2319 = vmatpush1.msra.mxu0 %v2200
      %2320 = vmatprep.subr.mxu0 0.0
      %2321 = vmatpush1.msra.mxu0 %v2205
      %2322 = vmatprep.subr.mxu0 0.0
      %2323 = vmatpush1.msra.mxu0 %v2208
      %2324 = vmatprep.subr.mxu0 0.0
      %2325 = vmatpush1.msra.mxu0 0.0
      %2326 = vmatprep.subr.mxu0 0.0
      %2327 = vmatpush1.msra.mxu0 0.0
      %2328 = vmatprep.subr.mxu0 0.0
      %2329 = vmatpush1.msra.mxu0 0.0
      %2330 = vmatprep.subr.mxu0 0.0
      %2331 = vmatpush1.msra.mxu0 0.0
      %2332 = vmatprep.subr.mxu0 0.0
      %2333 = vmatpush1.msra.mxu0 0.0
      %2334 = vmatprep.subr.mxu0 0.0
      %2335 = vmatpush1.msra.mxu0 0.0
      %2336 = vmatprep.subr.mxu0 0.0
      %2337 = vmatpush1.msra.mxu0 0.0
      %2338 = vmatprep.subr.mxu0 0.0
      %2339 = vmatpush1.msra.mxu0 0.0
      %2340 = vmatprep.subr.mxu0 0.0
      %2341 = vmatpush1.msra.mxu0 0.0
      %2342 = vmatprep.subr.mxu0 0.0
      %2343 = vmatpush1.msra.mxu0 0.0
      %2344 = vmatprep.subr.mxu0 0.0
      %2345 = vmatpush1.msra.mxu0 0.0
      %2346 = vmatprep.subr.mxu0 0.0
      %2347 = vmatpush1.msra.mxu0 0.0
      %2348 = vmatprep.subr.mxu0 0.0
      %2349 = vmatpush1.msra.mxu0 0.0
      %2350 = vmatprep.subr.mxu0 0.0
      %2351 = vmatpush1.msra.mxu0 0.0
      %2352 = vmatprep.subr.mxu0 0.0
      %2353 = vmatpush1.msra.mxu0 0.0
      %2354 = vmatprep.subr.mxu0 0.0
      %2355 = vmatpush1.msra.mxu0 0.0
      %2356 = vmatprep.mubr.f32.mxu0 0.0
      %2357 = vmatmul.mubr.f32.gmra.mrb[0].mxu0 %v1798
      %v2358 = vpop.f32.mrb[0].mxu0
      %v2359 = vadd.f32 0.0, %v2358
      %v2360 = vpop.f32.mrb[0].mxu0
      %2361 = vdwg.mxu0
      %2362 = vmatprep.subr.mxu0 0.0
      %2363 = vmatpush1.msra.mxu0 %v1883
      %2364 = vmatprep.subr.mxu0 0.0
      %2365 = vmatpush1.msra.mxu0 %v1886
      %2366 = vmatprep.subr.mxu0 0.0
      %2367 = vmatpush1.msra.mxu0 %v1891
      %2368 = vmatprep.subr.mxu0 0.0
      %2369 = vmatpush1.msra.mxu0 %v1894
      %2370 = vmatprep.subr.mxu0 0.0
      %2371 = vmatpush1.msra.mxu0 %v1899
      %2372 = vmatprep.subr.mxu0 0.0
      %2373 = vmatpush1.msra.mxu0 %v1902
      %2374 = vmatprep.subr.mxu0 0.0
      %2375 = vmatpush1.msra.mxu0 %v1907
      %2376 = vmatprep.subr.mxu0 0.0
      %2377 = vmatpush1.msra.mxu0 %v1910
      %2378 = vmatprep.subr.mxu0 0.0
      %2379 = vmatpush1.msra.mxu0 %v1915
      %2380 = vmatprep.subr.mxu0 0.0
      %2381 = vmatpush1.msra.mxu0 %v1918
      %2382 = vmatprep.subr.mxu0 0.0
      %2383 = vmatpush1.msra.mxu0 %v1923
      %2384 = vmatprep.subr.mxu0 0.0
      %2385 = vmatpush1.msra.mxu0 %v1926
      %2386 = vmatprep.subr.mxu0 0.0
      %2387 = vmatpush1.msra.mxu0 %v1931
      %2388 = vmatprep.subr.mxu0 0.0
      %2389 = vmatpush1.msra.mxu0 %v1934
      %2390 = vmatprep.subr.mxu0 0.0
      %2391 = vmatpush1.msra.mxu0 %v1939
      %2392 = vmatprep.subr.mxu0 0.0
      %2393 = vmatpush1.msra.mxu0 %v1942
      %2394 = vmatprep.subr.mxu0 0.0
      %2395 = vmatpush1.msra.mxu0 0.0
      %2396 = vmatprep.subr.mxu0 0.0
      %2397 = vmatpush1.msra.mxu0 0.0
      %2398 = vmatprep.subr.mxu0 0.0
      %2399 = vmatpush1.msra.mxu0 0.0
      %2400 = vmatprep.subr.mxu0 0.0
      %2401 = vmatpush1.msra.mxu0 0.0
      %2402 = vmatprep.subr.mxu0 0.0
      %2403 = vmatpush1.msra.mxu0 0.0
      %2404 = vmatprep.subr.mxu0 0.0
      %2405 = vmatpush1.msra.mxu0 0.0
      %2406 = vmatprep.subr.mxu0 0.0
      %2407 = vmatpush1.msra.mxu0 0.0
      %2408 = vmatprep.subr.mxu0 0.0
      %2409 = vmatpush1.msra.mxu0 0.0
      %2410 = vmatprep.subr.mxu0 0.0
      %2411 = vmatpush1.msra.mxu0 0.0
      %2412 = vmatprep.subr.mxu0 0.0
      %2413 = vmatpush1.msra.mxu0 0.0
      %2414 = vmatprep.subr.mxu0 0.0
      %2415 = vmatpush1.msra.mxu0 0.0
      %2416 = vmatprep.subr.mxu0 0.0
      %2417 = vmatpush1.msra.mxu0 0.0
      %2418 = vmatprep.subr.mxu0 0.0
      %2419 = vmatpush1.msra.mxu0 0.0
      %2420 = vmatprep.subr.mxu0 0.0
      %2421 = vmatpush1.msra.mxu0 0.0
      %2422 = vmatprep.subr.mxu0 0.0
      %2423 = vmatpush1.msra.mxu0 0.0
      %2424 = vmatprep.subr.mxu0 0.0
      %2425 = vmatpush1.msra.mxu0 0.0
      %2426 = vmatprep.mubr.f32.mxu0 0.0
      %2427 = vmatmul.mubr.f32.gmra.mrb[0].mxu0 %v1798
      %v2428 = vpop.f32.mrb[0].mxu0
      %v2429 = vadd.f32 %v2359, %v2428
      %v2430 = vpop.f32.mrb[0].mxu0
      %2431 = vdwg.mxu0
      %v2432 = vmul.f32 %v2149, %v2149
      %v2433 = vmul.f32 %v2152, %v2152
      %v2434 = vmul.f32 %v2157, %v2157
      %v2435 = vmul.f32 %v2160, %v2160
      %v2436 = vmul.f32 %v2165, %v2165
      %v2437 = vmul.f32 %v2168, %v2168
      %v2438 = vmul.f32 %v2173, %v2173
      %v2439 = vmul.f32 %v2176, %v2176
      %v2440 = vmul.f32 %v2181, %v2181
      %v2441 = vmul.f32 %v2184, %v2184
      %v2442 = vmul.f32 %v2189, %v2189
      %v2443 = vmul.f32 %v2192, %v2192
      %v2444 = vmul.f32 %v2197, %v2197
      %v2445 = vmul.f32 %v2200, %v2200
      %v2446 = vmul.f32 %v2205, %v2205
      %v2447 = vmul.f32 %v2208, %v2208
      %2448 = vmatprep.subr.mxu0 0.0
      %2449 = vmatpush1.msra.mxu0 %v2432
      %2450 = vmatprep.subr.mxu0 0.0
      %2451 = vmatpush1.msra.mxu0 %v2433
      %2452 = vmatprep.subr.mxu0 0.0
      %2453 = vmatpush1.msra.mxu0 %v2434
      %2454 = vmatprep.subr.mxu0 0.0
      %2455 = vmatpush1.msra.mxu0 %v2435
      %2456 = vmatprep.subr.mxu0 0.0
      %2457 = vmatpush1.msra.mxu0 %v2436
      %2458 = vmatprep.subr.mxu0 0.0
      %2459 = vmatpush1.msra.mxu0 %v2437
      %2460 = vmatprep.subr.mxu0 0.0
      %2461 = vmatpush1.msra.mxu0 %v2438
      %2462 = vmatprep.subr.mxu0 0.0
      %2463 = vmatpush1.msra.mxu0 %v2439
      %2464 = vmatprep.subr.mxu0 0.0
      %2465 = vmatpush1.msra.mxu0 %v2440
      %2466 = vmatprep.subr.mxu0 0.0
      %2467 = vmatpush1.msra.mxu0 %v2441
      %2468 = vmatprep.subr.mxu0 0.0
      %2469 = vmatpush1.msra.mxu0 %v2442
      %2470 = vmatprep.subr.mxu0 0.0
      %2471 = vmatpush1.msra.mxu0 %v2443
      %2472 = vmatprep.subr.mxu0 0.0
      %2473 = vmatpush1.msra.mxu0 %v2444
      %2474 = vmatprep.subr.mxu0 0.0
      %2475 = vmatpush1.msra.mxu0 %v2445
      %2476 = vmatprep.subr.mxu0 0.0
      %2477 = vmatpush1.msra.mxu0 %v2446
      %2478 = vmatprep.subr.mxu0 0.0
      %2479 = vmatpush1.msra.mxu0 %v2447
      %2480 = vmatprep.subr.mxu0 0.0
      %2481 = vmatpush1.msra.mxu0 0.0
      %2482 = vmatprep.subr.mxu0 0.0
      %2483 = vmatpush1.msra.mxu0 0.0
      %2484 = vmatprep.subr.mxu0 0.0
      %2485 = vmatpush1.msra.mxu0 0.0
      %2486 = vmatprep.subr.mxu0 0.0
      %2487 = vmatpush1.msra.mxu0 0.0
      %2488 = vmatprep.subr.mxu0 0.0
      %2489 = vmatpush1.msra.mxu0 0.0
      %2490 = vmatprep.subr.mxu0 0.0
      %2491 = vmatpush1.msra.mxu0 0.0
      %2492 = vmatprep.subr.mxu0 0.0
      %2493 = vmatpush1.msra.mxu0 0.0
      %2494 = vmatprep.subr.mxu0 0.0
      %2495 = vmatpush1.msra.mxu0 0.0
      %2496 = vmatprep.subr.mxu0 0.0
      %2497 = vmatpush1.msra.mxu0 0.0
      %2498 = vmatprep.subr.mxu0 0.0
      %2499 = vmatpush1.msra.mxu0 0.0
      %2500 = vmatprep.subr.mxu0 0.0
      %2501 = vmatpush1.msra.mxu0 0.0
      %2502 = vmatprep.subr.mxu0 0.0
      %2503 = vmatpush1.msra.mxu0 0.0
      %2504 = vmatprep.subr.mxu0 0.0
      %2505 = vmatpush1.msra.mxu0 0.0
      %2506 = vmatprep.subr.mxu0 0.0
      %2507 = vmatpush1.msra.mxu0 0.0
      %2508 = vmatprep.subr.mxu0 0.0
      %2509 = vmatpush1.msra.mxu0 0.0
      %2510 = vmatprep.subr.mxu0 0.0
      %2511 = vmatpush1.msra.mxu0 0.0
      %2512 = vmatprep.mubr.f32.mxu0 0.0
      %2513 = vmatmul.mubr.f32.gmra.mrb[0].mxu0 %v1798
      %v2514 = vpop.f32.mrb[0].mxu0
      %v2515 = vadd.f32 0.0, %v2514
      %v2516 = vpop.f32.mrb[0].mxu0
      %2517 = vdwg.mxu0
      %2518 = vmatprep.subr.mxu0 0.0
      %2519 = vmatpush1.msra.mxu0 %v2026
      %2520 = vmatprep.subr.mxu0 0.0
      %2521 = vmatpush1.msra.mxu0 %v2027
      %2522 = vmatprep.subr.mxu0 0.0
      %2523 = vmatpush1.msra.mxu0 %v2028
      %2524 = vmatprep.subr.mxu0 0.0
      %2525 = vmatpush1.msra.mxu0 %v2029
      %2526 = vmatprep.subr.mxu0 0.0
      %2527 = vmatpush1.msra.mxu0 %v2030
      %2528 = vmatprep.subr.mxu0 0.0
      %2529 = vmatpush1.msra.mxu0 %v2031
      %2530 = vmatprep.subr.mxu0 0.0
      %2531 = vmatpush1.msra.mxu0 %v2032
      %2532 = vmatprep.subr.mxu0 0.0
      %2533 = vmatpush1.msra.mxu0 %v2033
      %2534 = vmatprep.subr.mxu0 0.0
      %2535 = vmatpush1.msra.mxu0 %v2034
      %2536 = vmatprep.subr.mxu0 0.0
      %2537 = vmatpush1.msra.mxu0 %v2035
      %2538 = vmatprep.subr.mxu0 0.0
      %2539 = vmatpush1.msra.mxu0 %v2036
      %2540 = vmatprep.subr.mxu0 0.0
      %2541 = vmatpush1.msra.mxu0 %v2037
      %2542 = vmatprep.subr.mxu0 0.0
      %2543 = vmatpush1.msra.mxu0 %v2038
      %2544 = vmatprep.subr.mxu0 0.0
      %2545 = vmatpush1.msra.mxu0 %v2039
      %2546 = vmatprep.subr.mxu0 0.0
      %2547 = vmatpush1.msra.mxu0 %v2040
      %2548 = vmatprep.subr.mxu0 0.0
      %2549 = vmatpush1.msra.mxu0 %v2041
      %2550 = vmatprep.subr.mxu0 0.0
      %2551 = vmatpush1.msra.mxu0 0.0
      %2552 = vmatprep.subr.mxu0 0.0
      %2553 = vmatpush1.msra.mxu0 0.0
      %2554 = vmatprep.subr.mxu0 0.0
      %2555 = vmatpush1.msra.mxu0 0.0
      %2556 = vmatprep.subr.mxu0 0.0
      %2557 = vmatpush1.msra.mxu0 0.0
      %2558 = vmatprep.subr.mxu0 0.0
      %2559 = vmatpush1.msra.mxu0 0.0
      %2560 = vmatprep.subr.mxu0 0.0
      %2561 = vmatpush1.msra.mxu0 0.0
      %2562 = vmatprep.subr.mxu0 0.0
      %2563 = vmatpush1.msra.mxu0 0.0
      %2564 = vmatprep.subr.mxu0 0.0
      %2565 = vmatpush1.msra.mxu0 0.0
      %2566 = vmatprep.subr.mxu0 0.0
      %2567 = vmatpush1.msra.mxu0 0.0
      %2568 = vmatprep.subr.mxu0 0.0
      %2569 = vmatpush1.msra.mxu0 0.0
      %2570 = vmatprep.subr.mxu0 0.0
      %2571 = vmatpush1.msra.mxu0 0.0
      %2572 = vmatprep.subr.mxu0 0.0
      %2573 = vmatpush1.msra.mxu0 0.0
      %2574 = vmatprep.subr.mxu0 0.0
      %2575 = vmatpush1.msra.mxu0 0.0
      %2576 = vmatprep.subr.mxu0 0.0
      %2577 = vmatpush1.msra.mxu0 0.0
      %2578 = vmatprep.subr.mxu0 0.0
      %2579 = vmatpush1.msra.mxu0 0.0
      %2580 = vmatprep.subr.mxu0 0.0
      %2581 = vmatpush1.msra.mxu0 0.0
      %2582 = vmatprep.mubr.f32.mxu0 0.0
      %2583 = vmatmul.mubr.f32.gmra.mrb[0].mxu0 %v1798
      %v2584 = vpop.f32.mrb[0].mxu0
      %v2585 = vadd.f32 %v2515, %v2584
      %v2586 = vpop.f32.mrb[0].mxu0
      %2587 = vdwg.mxu0
      %vm2588 = vcmask 122880
      %2589 = vst.msk [vmem:[%s216] sm:$0x1] %vm2588, %v2429
      %2590 = vst.msk [vmem:[%s216 + $0x1] sm:$0x1] %vm2588, %v2585
      %s2591 = smul.u32 8, %s20
      %p2592 = scmp.lt.s32.totalorder %s19, 1
      %s2593 = scalar_select %p2592, %s19, 1
      %p2594 = scmp.lt.s32.totalorder %s2591, 15
      %s2595 = scalar_select %p2594, %s2591, 15
      %s2596 = smul.addr %s2595, 4
      %s2597 = smul.addr %s2593, 64
      %s2598 = sadd.s32 %s2596, %s2597
      %s2599 = smul.addr %s2598, 4
      %s2600 = scalar_lea.vmem %s2, %s2599
      %p2601 = scmp.lt.s32.totalorder %s19, 1
      %s2602 = scalar_select %p2601, %s19, 1
      %p2603 = scmp.lt.s32.totalorder %s20, 1
      %s2604 = scalar_select %p2603, %s20, 1
      %s2605 = smul.addr %s2602, 2
      %s2606 = sadd.s32 %s2604, %s2605
      %s2607 = smul.addr %s2606, 2
      %s2608 = scalar_lea.vmem %s3, %s2607
      // Predicated region
      $region29: #{unet_up_forward.2} parent=27 // pred_check
        %p2609 = pneg %p94
      $region30: #{unet_up_forward.2} parent=27 // pred_check_branch
        %2611 = sbr.rel (%p2609) target = $region32
      $region31: #{unet_up_forward.2} parent=27 // pred_region
        %s2612 = smul.u32 8, %s20
      $region32: #{unet_up_forward.2} parent=27 // pred_fallthru
        _
      // Predicated region
      $region33: #{unet_up_forward.2} parent=27 // pred_check
        %p2613 = pneg %p122
      $region34: #{unet_up_forward.2} parent=27 // pred_check_branch
        %2615 = sbr.rel (%p2613) target = $region36
      $region35: #{unet_up_forward.2} parent=27 // pred_region
        _
      $region36: #{unet_up_forward.2} parent=27 // pred_fallthru
        _
    $region28: #{unet_up_forward.2} parent=5 // pred_fallthru
      _
    %p2616 = scmp.le.s32.totalorder 2, %s10
    // Predicated region
    $region37: #{unet_up_forward.2} parent=5 // pred_check
      %p2617 = pneg %p2616
    $region38: #{unet_up_forward.2} parent=5 // pred_check_branch
      %2619 = sbr.rel (%p2617) target = $region40
    $region39: #{unet_up_forward.2} parent=5 // pred_region
      %s2620 = ssub.s32 %s10, 2
      // Predicated region
      $region41: #{unet_up_forward.2} parent=39 // pred_check
        %p2621 = pneg %p100
      $region42: #{unet_up_forward.2} parent=39 // pred_check_branch
        %2623 = sbr.rel (%p2621) target = $region44
      $region43: #{unet_up_forward.2} parent=39 // pred_region
        %s2624 = smul.u32 8, %s22
        %p2625 = scmp.lt.s32.totalorder %s21, 1
        %s2626 = scalar_select %p2625, %s21, 1
        %p2627 = scmp.lt.s32.totalorder %s2624, 15
        %s2628 = scalar_select %p2627, %s2624, 15
        %s2629 = smul.addr %s2628, 4
        %s2630 = smul.addr %s2626, 64
        %s2631 = sadd.s32 %s2629, %s2630
        %s2632 = smul.addr %s2631, 4
        %s2633 = scalar_lea.vmem %s2, %s2632
      $region44: #{unet_up_forward.2} parent=39 // pred_fallthru
        _
      // Predicated region
      $region45: #{unet_up_forward.2} parent=39 // pred_check
        %p2634 = pneg %p128
      $region46: #{unet_up_forward.2} parent=39 // pred_check_branch
        %2636 = sbr.rel (%p2634) target = $region48
      $region47: #{unet_up_forward.2} parent=39 // pred_region
        %p2637 = scmp.lt.s32.totalorder %s21, 1
        %s2638 = scalar_select %p2637, %s21, 1
        %p2639 = scmp.lt.s32.totalorder %s22, 1
        %s2640 = scalar_select %p2639, %s22, 1
        %s2641 = smul.addr %s2638, 2
        %s2642 = sadd.s32 %s2640, %s2641
        %s2643 = smul.addr %s2642, 2
        %s2644 = scalar_lea.vmem %s3, %s2643
      $region48: #{unet_up_forward.2} parent=39 // pred_fallthru
        _
    $region40: #{unet_up_forward.2} parent=5 // pred_fallthru
      _
  $region6: #{unet_up_forward.2} parent=0 // loop_footer
    %s14 = sadd.s32 1, %s10
  $region7: #{unet_up_forward.2} parent=0 // loop_footer_branch
    %9 = sbr.rel target = $region3
  $region8: #{unet_up_forward.2} parent=0 // loop_exit
    _

</llo_original>
